<compile_context>
chip_gen: v5e
topology: v5e:2x2
jax: 0.10.0
libtpu: 0.0.40
codegen_flags: <defaults>
</compile_context>

<pallas_src>
import functools

import jax
import jax.numpy as jnp
from jax.experimental import pallas as pl
from jax.experimental.pallas import tpu as pltpu

NUM_BLOCKS = 4
BN_EPS = 1e-5


def _round_up(x, m):
    return ((x + m - 1) // m) * m


def modality_encoder_kernel(
    x_ref,      # [TB, D]             f32   input tile (pipelined over batch)
    w_in_ref,   # [D, H]              bf16  input projection weight (VMEM-resident)
    p_in_ref,   # [3, H]              f32   rows: bias, folded BN scale, folded BN shift
    w_blk_ref,  # [NUM_BLOCKS, H, H]  bf16  per-block linear weights (VMEM-resident)
    p_blk_ref,  # [NUM_BLOCKS, 3, H]  f32   rows: bias, folded BN scale, folded BN shift
    o_ref,      # [TB, H]             f32 / bf16 output tile
):
    # input_proj: Linear -> ReLU -> BatchNorm1d (eval, folded to scale/shift).
    # The f32 -> bf16 cast of x happens here (cheap VPU op hidden under the MXU
    # work) instead of in a separate wrapper-side XLA op.
    x = x_ref[...].astype(jnp.bfloat16)
    h = jnp.dot(x, w_in_ref[...], preferred_element_type=jnp.float32)
    p = p_in_ref[...]
    h = jnp.maximum(h + p[0:1, :], 0.0) * p[1:2, :] + p[2:3, :]

    # 4 residual blocks: h = h + Dropout(BN(ReLU(Linear(h)))); Dropout = identity (eval).
    # Residual accumulator h stays in f32; only MXU operands are bf16.
    for i in range(NUM_BLOCKS):
        y = jnp.dot(h.astype(jnp.bfloat16), w_blk_ref[i],
                    preferred_element_type=jnp.float32)
        pb = p_blk_ref[i]
        y = jnp.maximum(y + pb[0:1, :], 0.0) * pb[1:2, :] + pb[2:3, :]
        h = h + y

    o_ref[...] = h.astype(o_ref.dtype)


def _pick_batch_tile(B, batch_tile):
    # Multiple of 16 rows keeps bf16 sublane packing full for small batches.
    tb = min(batch_tile, _round_up(B, 16))
    # v7x megacore: prefer >= 4 grid steps (>= 2 per TensorCore) when the batch
    # is large enough that each step still keeps >= 512 rows (below that the
    # ~0.35us per-grid-step overhead dominates).
    while tb > 512 and pl.cdiv(B, tb) < 4:
        tb //= 2
    return max(tb, 16)


@functools.lru_cache(maxsize=None)
def _build_forward(B, D, H, tb, out_dtype_name, single_buffer_weights):
    out_dtype = jnp.dtype(out_dtype_name)
    Bp = _round_up(B, tb)
    grid = (Bp // tb,)

    const2 = lambda i: (0, 0)
    const3 = lambda i: (0, 0, 0)

    def resident(shape, index_map):
        # Grid-invariant blocks don't need the default 2-deep revolving buffer.
        if single_buffer_weights:
            return pl.BlockSpec(shape, index_map, pipeline_mode=pl.Buffered(1))
        return pl.BlockSpec(shape, index_map)

    wbuf = 1 if single_buffer_weights else 2
    weight_bytes = 2 * (D * H + NUM_BLOCKS * H * H)          # bf16 residents
    param_bytes = 4 * (3 * H + NUM_BLOCKS * 3 * H)           # f32 packed params
    vmem_bytes = (
        2 * tb * D * 4                        # x tile, double-buffered, f32
        + 2 * tb * H * out_dtype.itemsize     # output tile, double-buffered
        + wbuf * (weight_bytes + param_bytes)
        + 4 * tb * H * 4                      # f32 h/y temporaries + bf16 casts
        + (4 << 20)                           # compiler scratch headroom
    )
    vmem_limit = min(_round_up(vmem_bytes, 1 << 20), 64 * 1024 * 1024)

    cost = pl.CostEstimate(
        flops=2 * Bp * (D * H + NUM_BLOCKS * H * H),
        transcendentals=0,
        bytes_accessed=4 * Bp * D + weight_bytes + param_bytes
        + Bp * H * out_dtype.itemsize,
    )

    call = pl.pallas_call(
        modality_encoder_kernel,
        out_shape=jax.ShapeDtypeStruct((Bp, H), out_dtype),
        grid_spec=pltpu.PrefetchScalarGridSpec(
            num_scalar_prefetch=0,
            grid=grid,
            in_specs=[
                pl.BlockSpec((tb, D), lambda i: (i, 0)),   # x: pipelined tiles
                resident((D, H), const2),                  # weights/params: resident
                resident((3, H), const2),
                resident((NUM_BLOCKS, H, H), const3),
                resident((NUM_BLOCKS, 3, H), const3),
            ],
            out_specs=pl.BlockSpec((tb, H), lambda i: (i, 0)),
        ),
        compiler_params=pltpu.CompilerParams(
            dimension_semantics=("parallel",),   # batch tiles are independent
            vmem_limit_bytes=vmem_limit,
        ),
        cost_estimate=cost,
    )

    def fn(x, params):
        # Fold eval-mode BatchNorm into per-feature scale/shift and pack the six
        # small vectors into two refs (rows: bias, scale, shift).
        s_in = params["gamma_in"] * jax.lax.rsqrt(params["rvar_in"] + BN_EPS)
        t_in = params["beta_in"] - params["rmean_in"] * s_in
        p_in = jnp.stack([params["b_in"], s_in, t_in], axis=0)            # [3, H]
        s_blk = params["gamma_blk"] * jax.lax.rsqrt(params["rvar_blk"] + BN_EPS)
        t_blk = params["beta_blk"] - params["rmean_blk"] * s_blk
        p_blk = jnp.stack([params["b_blk"], s_blk, t_blk], axis=1)        # [NB, 3, H]

        # bf16 MXU operands for the tiny grid-invariant weights; x stays f32 and
        # is cast inside the kernel (feedback: avoid the wrapper-side x cast).
        w_in = params["w_in"].astype(jnp.bfloat16)
        w_blk = params["w_blk"].astype(jnp.bfloat16)

        xp = x
        if Bp != B:
            xp = jnp.pad(xp, ((0, Bp - B), (0, 0)))   # only when tb doesn't divide B
        out = call(xp, w_in, p_in, w_blk, p_blk)
        return out[:B]

    return jax.jit(fn)


_SINGLE_BUFFER_WEIGHTS = None   # resolved on first call


def modality_encoder_forward(x, params, *, batch_tile=1024, out_dtype=jnp.float32):
    global _SINGLE_BUFFER_WEIGHTS
    B, D = x.shape
    H = params["w_in"].shape[1]
    tb = _pick_batch_tile(B, batch_tile)
    dtype_name = jnp.dtype(out_dtype).name

    if _SINGLE_BUFFER_WEIGHTS is None:
        # Probe pl.Buffered(1) (single-buffered resident weights) once; fall back
        # to default double-buffering if this JAX build's TPU lowering rejects it.
        try:
            fn = _build_forward(B, D, H, tb, dtype_name, True)
            out = jax.block_until_ready(fn(x, params))
            _SINGLE_BUFFER_WEIGHTS = True
            return out
        except Exception:
            _SINGLE_BUFFER_WEIGHTS = False

    fn = _build_forward(B, D, H, tb, dtype_name, _SINGLE_BUFFER_WEIGHTS)
    return fn(x, params)


def init_params(key, input_dim, hidden_size):
    ks = jax.random.split(key, 12)
    s = 0.05
    H = hidden_size
    return {
        # Linear weights stored pre-transposed: [in_features, out_features].
        "w_in": s * jax.random.normal(ks[0], (input_dim, H), jnp.float32),
        "b_in": s * jax.random.normal(ks[1], (H,), jnp.float32),
        "gamma_in": 1.0 + 0.1 * jax.random.normal(ks[2], (H,), jnp.float32),
        "beta_in": 0.1 * jax.random.normal(ks[3], (H,), jnp.float32),
        "rmean_in": 0.1 * jax.random.normal(ks[4], (H,), jnp.float32),
        "rvar_in": jnp.abs(1.0 + 0.1 * jax.random.normal(ks[5], (H,), jnp.float32)),
        "w_blk": s * jax.random.normal(ks[6], (NUM_BLOCKS, H, H), jnp.float32),
        "b_blk": s * jax.random.normal(ks[7], (NUM_BLOCKS, H), jnp.float32),
        "gamma_blk": 1.0 + 0.1 * jax.random.normal(ks[8], (NUM_BLOCKS, H), jnp.float32),
        "beta_blk": 0.1 * jax.random.normal(ks[9], (NUM_BLOCKS, H), jnp.float32),
        "rmean_blk": 0.1 * jax.random.normal(ks[10], (NUM_BLOCKS, H), jnp.float32),
        "rvar_blk": jnp.abs(1.0 + 0.1 * jax.random.normal(ks[11], (NUM_BLOCKS, H), jnp.float32)),
    }


def reference_forward(x, params):
    """Pure-JAX reference mirroring the kernel numerics (bf16 matmul operands, f32 accum)."""
    s_in = params["gamma_in"] * jax.lax.rsqrt(params["rvar_in"] + BN_EPS)
    t_in = params["beta_in"] - params["rmean_in"] * s_in
    s_blk = params["gamma_blk"] * jax.lax.rsqrt(params["rvar_blk"] + BN_EPS)
    t_blk = params["beta_blk"] - params["rmean_blk"] * s_blk
    w_in = params["w_in"].astype(jnp.bfloat16)
    w_blk = params["w_blk"].astype(jnp.bfloat16)

    h = jnp.dot(x.astype(jnp.bfloat16), w_in, preferred_element_type=jnp.float32)
    h = jnp.maximum(h + params["b_in"], 0.0) * s_in + t_in
    for i in range(NUM_BLOCKS):
        y = jnp.dot(h.astype(jnp.bfloat16), w_blk[i], preferred_element_type=jnp.float32)
        y = jnp.maximum(y + params["b_blk"][i], 0.0) * s_blk[i] + t_blk[i]
        h = h + y
    return h


def reference_forward_f32(x, params):
    """Full-f32 reference matching the PyTorch eval-mode forward exactly."""
    h = x @ params["w_in"] + params["b_in"]
    h = jnp.maximum(h, 0.0)
    h = ((h - params["rmean_in"]) * jax.lax.rsqrt(params["rvar_in"] + BN_EPS)
         * params["gamma_in"] + params["beta_in"])
    for i in range(NUM_BLOCKS):
        y = h @ params["w_blk"][i] + params["b_blk"][i]
        y = jnp.maximum(y, 0.0)
        y = ((y - params["rmean_blk"][i]) * jax.lax.rsqrt(params["rvar_blk"][i] + BN_EPS)
             * params["gamma_blk"][i] + params["beta_blk"][i])
        h = h + y
    return h


if __name__ == "__main__":
    # Small, lane-dense shapes: hidden = 128, input_dim = 256.  batch = 300
    # exercises the trailing-block pad path (default tile -> 1 step of 304 rows)
    # and, with batch_tile=128, a 3-step pipelined "parallel" grid.
    batch, input_dim, hidden_size = 300, 256, 128

    key = jax.random.PRNGKey(0)
    k_x, k_w = jax.random.split(key)
    x = jax.random.normal(k_x, (batch, input_dim), jnp.float32)
    params = init_params(k_w, input_dim, hidden_size)

    # Default (overhead-optimal) tile.
    out = jax.block_until_ready(modality_encoder_forward(x, params))
    assert out.shape == (batch, hidden_size), out.shape

    # Small tile -> multi-step pipelined grid + padded trailing block.
    out_tiled = jax.block_until_ready(
        modality_encoder_forward(x, params, batch_tile=128))
    assert out_tiled.shape == (batch, hidden_size), out_tiled.shape

    # Exact check against a reference with identical mixed-precision numerics.
    ref = reference_forward(x, params)
    assert jnp.allclose(out, ref, atol=2e-3, rtol=2e-3), \
        float(jnp.max(jnp.abs(out - ref)))
    assert jnp.allclose(out_tiled, ref, atol=2e-3, rtol=2e-3), \
        float(jnp.max(jnp.abs(out_tiled - ref)))

    # Semantic check against the pure-f32 PyTorch-style forward (bf16 rounding slack).
    ref32 = reference_forward_f32(x, params)
    assert jnp.allclose(out, ref32, atol=1.5e-1, rtol=1.5e-1), \
        float(jnp.max(jnp.abs(out - ref32)))

    # TODO(synk): training-mode Dropout(0.2) masking and BatchNorm batch-statistics
    # (with running-stat updates) are not implemented; eval-mode semantics only.
    print("KERNEL_OK")
</pallas_src>

<mosaic_0001>
module attributes {stable_mosaic.version = 11 : i64} {
  func.func @modality_encoder_kernel(%arg0: i32, %arg1: memref<304x256xf32, #tpu.memory_space<vmem>>, %arg2: memref<256x128xbf16, #tpu.memory_space<vmem>>, %arg3: memref<3x128xf32, #tpu.memory_space<vmem>>, %arg4: memref<4x128x128xbf16, #tpu.memory_space<vmem>>, %arg5: memref<4x3x128xf32, #tpu.memory_space<vmem>>, %arg6: memref<304x128xf32, #tpu.memory_space<vmem>>) attributes {dimension_semantics = [#tpu.dimension_semantics<parallel>], iteration_bounds = array<i64: 1>, scalar_prefetch = 0 : i64, scratch_operands = 0 : i64, tpu.core_type = #tpu.core_type<tc>, window_params = [{transform_indices = @transform_0, window_bounds = array<i64: 304, 256>}, {pipeline_mode = #tpu.pipeline_mode<synchronous>, transform_indices = @transform_1, window_bounds = array<i64: 256, 128>}, {pipeline_mode = #tpu.pipeline_mode<synchronous>, transform_indices = @transform_2, window_bounds = array<i64: 3, 128>}, {pipeline_mode = #tpu.pipeline_mode<synchronous>, transform_indices = @transform_3, window_bounds = array<i64: 4, 128, 128>}, {pipeline_mode = #tpu.pipeline_mode<synchronous>, transform_indices = @transform_4, window_bounds = array<i64: 4, 3, 128>}, {transform_indices = @transform_5, window_bounds = array<i64: 304, 128>}]} {
    %c0 = arith.constant 0 : index
    %c0_0 = arith.constant 0 : index
    %0 = vector.load %arg1[%c0, %c0_0] : memref<304x256xf32, #tpu.memory_space<vmem>>, vector<304x256xf32>
    %1 = arith.truncf %0 : vector<304x256xf32> to vector<304x256xbf16>
    %c0_1 = arith.constant 0 : index
    %c0_2 = arith.constant 0 : index
    %2 = vector.load %arg2[%c0_1, %c0_2] : memref<256x128xbf16, #tpu.memory_space<vmem>>, vector<256x128xbf16>
    %cst = arith.constant dense<0.000000e+00> : vector<304x128xf32>
    %3 = tpu.matmul %1, %2, %cst {dimension_numbers = #tpu.dot_dimension_numbers<[1], [0], [0], [1], [0, 0, 1, 1], [], []>} : vector<304x256xbf16>, vector<256x128xbf16>, vector<304x128xf32> -> vector<304x128xf32>
    %c0_3 = arith.constant 0 : index
    %c0_4 = arith.constant 0 : index
    %4 = vector.load %arg3[%c0_3, %c0_4] : memref<3x128xf32, #tpu.memory_space<vmem>>, vector<3x128xf32>
    %5 = vector.extract_strided_slice %4 {offsets = [0, 0], sizes = [1, 128], strides = [1, 1]} : vector<3x128xf32> to vector<1x128xf32>
    %6 = vector.broadcast %5 : vector<1x128xf32> to vector<304x128xf32>
    %7 = arith.addf %3, %6 : vector<304x128xf32>
    %cst_5 = arith.constant 0.000000e+00 : f32
    %8 = vector.broadcast %cst_5 : f32 to vector<304x128xf32>
    %9 = arith.maximumf %7, %8 : vector<304x128xf32>
    %10 = vector.extract_strided_slice %4 {offsets = [1, 0], sizes = [1, 128], strides = [1, 1]} : vector<3x128xf32> to vector<1x128xf32>
    %11 = vector.broadcast %10 : vector<1x128xf32> to vector<304x128xf32>
    %12 = arith.mulf %9, %11 : vector<304x128xf32>
    %13 = vector.extract_strided_slice %4 {offsets = [2, 0], sizes = [1, 128], strides = [1, 1]} : vector<3x128xf32> to vector<1x128xf32>
    %14 = vector.broadcast %13 : vector<1x128xf32> to vector<304x128xf32>
    %15 = arith.addf %12, %14 : vector<304x128xf32>
    %16 = arith.truncf %15 : vector<304x128xf32> to vector<304x128xbf16>
    %c0_6 = arith.constant 0 : index
    %c0_7 = arith.constant 0 : index
    %c0_8 = arith.constant 0 : index
    %17 = vector.load %arg4[%c0_6, %c0_7, %c0_8] : memref<4x128x128xbf16, #tpu.memory_space<vmem>>, vector<1x128x128xbf16>
    %18 = vector.shape_cast %17 : vector<1x128x128xbf16> to vector<128x128xbf16>
    %cst_9 = arith.constant dense<0.000000e+00> : vector<304x128xf32>
    %19 = tpu.matmul %16, %18, %cst_9 {dimension_numbers = #tpu.dot_dimension_numbers<[1], [0], [0], [1], [0, 0, 1, 1], [], []>} : vector<304x128xbf16>, vector<128x128xbf16>, vector<304x128xf32> -> vector<304x128xf32>
    %c0_10 = arith.constant 0 : index
    %c0_11 = arith.constant 0 : index
    %c0_12 = arith.constant 0 : index
    %20 = vector.load %arg5[%c0_10, %c0_11, %c0_12] : memref<4x3x128xf32, #tpu.memory_space<vmem>>, vector<1x3x128xf32>
    %21 = vector.shape_cast %20 : vector<1x3x128xf32> to vector<3x128xf32>
    %22 = vector.extract_strided_slice %21 {offsets = [0, 0], sizes = [1, 128], strides = [1, 1]} : vector<3x128xf32> to vector<1x128xf32>
    %23 = vector.broadcast %22 : vector<1x128xf32> to vector<304x128xf32>
    %24 = arith.addf %19, %23 : vector<304x128xf32>
    %cst_13 = arith.constant 0.000000e+00 : f32
    %25 = vector.broadcast %cst_13 : f32 to vector<304x128xf32>
    %26 = arith.maximumf %24, %25 : vector<304x128xf32>
    %27 = vector.extract_strided_slice %21 {offsets = [1, 0], sizes = [1, 128], strides = [1, 1]} : vector<3x128xf32> to vector<1x128xf32>
    %28 = vector.broadcast %27 : vector<1x128xf32> to vector<304x128xf32>
    %29 = arith.mulf %26, %28 : vector<304x128xf32>
    %30 = vector.extract_strided_slice %21 {offsets = [2, 0], sizes = [1, 128], strides = [1, 1]} : vector<3x128xf32> to vector<1x128xf32>
    %31 = vector.broadcast %30 : vector<1x128xf32> to vector<304x128xf32>
    %32 = arith.addf %29, %31 : vector<304x128xf32>
    %33 = arith.addf %15, %32 : vector<304x128xf32>
    %34 = arith.truncf %33 : vector<304x128xf32> to vector<304x128xbf16>
    %c1 = arith.constant 1 : index
    %c0_14 = arith.constant 0 : index
    %c0_15 = arith.constant 0 : index
    %35 = vector.load %arg4[%c1, %c0_14, %c0_15] : memref<4x128x128xbf16, #tpu.memory_space<vmem>>, vector<1x128x128xbf16>
    %36 = vector.shape_cast %35 : vector<1x128x128xbf16> to vector<128x128xbf16>
    %cst_16 = arith.constant dense<0.000000e+00> : vector<304x128xf32>
    %37 = tpu.matmul %34, %36, %cst_16 {dimension_numbers = #tpu.dot_dimension_numbers<[1], [0], [0], [1], [0, 0, 1, 1], [], []>} : vector<304x128xbf16>, vector<128x128xbf16>, vector<304x128xf32> -> vector<304x128xf32>
    %c1_17 = arith.constant 1 : index
    %c0_18 = arith.constant 0 : index
    %c0_19 = arith.constant 0 : index
    %38 = vector.load %arg5[%c1_17, %c0_18, %c0_19] : memref<4x3x128xf32, #tpu.memory_space<vmem>>, vector<1x3x128xf32>
    %39 = vector.shape_cast %38 : vector<1x3x128xf32> to vector<3x128xf32>
    %40 = vector.extract_strided_slice %39 {offsets = [0, 0], sizes = [1, 128], strides = [1, 1]} : vector<3x128xf32> to vector<1x128xf32>
    %41 = vector.broadcast %40 : vector<1x128xf32> to vector<304x128xf32>
    %42 = arith.addf %37, %41 : vector<304x128xf32>
    %cst_20 = arith.constant 0.000000e+00 : f32
    %43 = vector.broadcast %cst_20 : f32 to vector<304x128xf32>
    %44 = arith.maximumf %42, %43 : vector<304x128xf32>
    %45 = vector.extract_strided_slice %39 {offsets = [1, 0], sizes = [1, 128], strides = [1, 1]} : vector<3x128xf32> to vector<1x128xf32>
    %46 = vector.broadcast %45 : vector<1x128xf32> to vector<304x128xf32>
    %47 = arith.mulf %44, %46 : vector<304x128xf32>
    %48 = vector.extract_strided_slice %39 {offsets = [2, 0], sizes = [1, 128], strides = [1, 1]} : vector<3x128xf32> to vector<1x128xf32>
    %49 = vector.broadcast %48 : vector<1x128xf32> to vector<304x128xf32>
    %50 = arith.addf %47, %49 : vector<304x128xf32>
    %51 = arith.addf %33, %50 : vector<304x128xf32>
    %52 = arith.truncf %51 : vector<304x128xf32> to vector<304x128xbf16>
    %c2 = arith.constant 2 : index
    %c0_21 = arith.constant 0 : index
    %c0_22 = arith.constant 0 : index
    %53 = vector.load %arg4[%c2, %c0_21, %c0_22] : memref<4x128x128xbf16, #tpu.memory_space<vmem>>, vector<1x128x128xbf16>
    %54 = vector.shape_cast %53 : vector<1x128x128xbf16> to vector<128x128xbf16>
    %cst_23 = arith.constant dense<0.000000e+00> : vector<304x128xf32>
    %55 = tpu.matmul %52, %54, %cst_23 {dimension_numbers = #tpu.dot_dimension_numbers<[1], [0], [0], [1], [0, 0, 1, 1], [], []>} : vector<304x128xbf16>, vector<128x128xbf16>, vector<304x128xf32> -> vector<304x128xf32>
    %c2_24 = arith.constant 2 : index
    %c0_25 = arith.constant 0 : index
    %c0_26 = arith.constant 0 : index
    %56 = vector.load %arg5[%c2_24, %c0_25, %c0_26] : memref<4x3x128xf32, #tpu.memory_space<vmem>>, vector<1x3x128xf32>
    %57 = vector.shape_cast %56 : vector<1x3x128xf32> to vector<3x128xf32>
    %58 = vector.extract_strided_slice %57 {offsets = [0, 0], sizes = [1, 128], strides = [1, 1]} : vector<3x128xf32> to vector<1x128xf32>
    %59 = vector.broadcast %58 : vector<1x128xf32> to vector<304x128xf32>
    %60 = arith.addf %55, %59 : vector<304x128xf32>
    %cst_27 = arith.constant 0.000000e+00 : f32
    %61 = vector.broadcast %cst_27 : f32 to vector<304x128xf32>
    %62 = arith.maximumf %60, %61 : vector<304x128xf32>
    %63 = vector.extract_strided_slice %57 {offsets = [1, 0], sizes = [1, 128], strides = [1, 1]} : vector<3x128xf32> to vector<1x128xf32>
    %64 = vector.broadcast %63 : vector<1x128xf32> to vector<304x128xf32>
    %65 = arith.mulf %62, %64 : vector<304x128xf32>
    %66 = vector.extract_strided_slice %57 {offsets = [2, 0], sizes = [1, 128], strides = [1, 1]} : vector<3x128xf32> to vector<1x128xf32>
    %67 = vector.broadcast %66 : vector<1x128xf32> to vector<304x128xf32>
    %68 = arith.addf %65, %67 : vector<304x128xf32>
    %69 = arith.addf %51, %68 : vector<304x128xf32>
    %70 = arith.truncf %69 : vector<304x128xf32> to vector<304x128xbf16>
    %c3 = arith.constant 3 : index
    %c0_28 = arith.constant 0 : index
    %c0_29 = arith.constant 0 : index
    %71 = vector.load %arg4[%c3, %c0_28, %c0_29] : memref<4x128x128xbf16, #tpu.memory_space<vmem>>, vector<1x128x128xbf16>
    %72 = vector.shape_cast %71 : vector<1x128x128xbf16> to vector<128x128xbf16>
    %cst_30 = arith.constant dense<0.000000e+00> : vector<304x128xf32>
    %73 = tpu.matmul %70, %72, %cst_30 {dimension_numbers = #tpu.dot_dimension_numbers<[1], [0], [0], [1], [0, 0, 1, 1], [], []>} : vector<304x128xbf16>, vector<128x128xbf16>, vector<304x128xf32> -> vector<304x128xf32>
    %c3_31 = arith.constant 3 : index
    %c0_32 = arith.constant 0 : index
    %c0_33 = arith.constant 0 : index
    %74 = vector.load %arg5[%c3_31, %c0_32, %c0_33] : memref<4x3x128xf32, #tpu.memory_space<vmem>>, vector<1x3x128xf32>
    %75 = vector.shape_cast %74 : vector<1x3x128xf32> to vector<3x128xf32>
    %76 = vector.extract_strided_slice %75 {offsets = [0, 0], sizes = [1, 128], strides = [1, 1]} : vector<3x128xf32> to vector<1x128xf32>
    %77 = vector.broadcast %76 : vector<1x128xf32> to vector<304x128xf32>
    %78 = arith.addf %73, %77 : vector<304x128xf32>
    %cst_34 = arith.constant 0.000000e+00 : f32
    %79 = vector.broadcast %cst_34 : f32 to vector<304x128xf32>
    %80 = arith.maximumf %78, %79 : vector<304x128xf32>
    %81 = vector.extract_strided_slice %75 {offsets = [1, 0], sizes = [1, 128], strides = [1, 1]} : vector<3x128xf32> to vector<1x128xf32>
    %82 = vector.broadcast %81 : vector<1x128xf32> to vector<304x128xf32>
    %83 = arith.mulf %80, %82 : vector<304x128xf32>
    %84 = vector.extract_strided_slice %75 {offsets = [2, 0], sizes = [1, 128], strides = [1, 1]} : vector<3x128xf32> to vector<1x128xf32>
    %85 = vector.broadcast %84 : vector<1x128xf32> to vector<304x128xf32>
    %86 = arith.addf %83, %85 : vector<304x128xf32>
    %87 = arith.addf %69, %86 : vector<304x128xf32>
    %c0_35 = arith.constant 0 : index
    %c0_36 = arith.constant 0 : index
    %88 = vector.load %arg6[%c0_35, %c0_36] : memref<304x128xf32, #tpu.memory_space<vmem>>, vector<304x128xf32>
    tpu.vector_store %arg6[%c0_35, %c0_36], %87 {strides = array<i32>} : memref<304x128xf32, #tpu.memory_space<vmem>>, vector<304x128xf32>,
    return
  }
  func.func @transform_0(%arg0: i32) -> (i32, i32) {
    %c0_i32 = arith.constant 0 : i32
    %c0_i32_0 = arith.constant 0 : i32
    return %arg0, %c0_i32 : i32, i32
  }
  func.func @transform_1(%arg0: i32) -> (i32, i32) {
    %c0_i32 = arith.constant 0 : i32
    %c0_i32_0 = arith.constant 0 : i32
    %c0_i32_1 = arith.constant 0 : i32
    return %c0_i32, %c0_i32_0 : i32, i32
  }
  func.func @transform_2(%arg0: i32) -> (i32, i32) {
    %c0_i32 = arith.constant 0 : i32
    %c0_i32_0 = arith.constant 0 : i32
    %c0_i32_1 = arith.constant 0 : i32
    return %c0_i32, %c0_i32_0 : i32, i32
  }
  func.func @transform_3(%arg0: i32) -> (i32, i32, i32) {
    %c0_i32 = arith.constant 0 : i32
    %c0_i32_0 = arith.constant 0 : i32
    %c0_i32_1 = arith.constant 0 : i32
    %c0_i32_2 = arith.constant 0 : i32
    return %c0_i32, %c0_i32_0, %c0_i32_1 : i32, i32, i32
  }
  func.func @transform_4(%arg0: i32) -> (i32, i32, i32) {
    %c0_i32 = arith.constant 0 : i32
    %c0_i32_0 = arith.constant 0 : i32
    %c0_i32_1 = arith.constant 0 : i32
    %c0_i32_2 = arith.constant 0 : i32
    return %c0_i32, %c0_i32_0, %c0_i32_1 : i32, i32, i32
  }
  func.func @transform_5(%arg0: i32) -> (i32, i32) {
    %c0_i32 = arith.constant 0 : i32
    %c0_i32_0 = arith.constant 0 : i32
    return %arg0, %c0_i32 : i32, i32
  }
}

module attributes {stable_mosaic.version = 11 : i64} {
  func.func @modality_encoder_kernel(%arg0: i32, %arg1: memref<304x256xf32, #tpu.memory_space<vmem>>, %arg2: memref<256x128xbf16, #tpu.memory_space<vmem>>, %arg3: memref<3x128xf32, #tpu.memory_space<vmem>>, %arg4: memref<4x128x128xbf16, #tpu.memory_space<vmem>>, %arg5: memref<4x3x128xf32, #tpu.memory_space<vmem>>, %arg6: memref<304x128xf32, #tpu.memory_space<vmem>>) attributes {dimension_semantics = [#tpu.dimension_semantics<parallel>], iteration_bounds = array<i64: 1>, scalar_prefetch = 0 : i64, scratch_operands = 0 : i64, tpu.core_type = #tpu.core_type<tc>, window_params = [{transform_indices = @transform_0, window_bounds = array<i64: 304, 256>}, {pipeline_mode = #tpu.pipeline_mode<synchronous>, transform_indices = @transform_1, window_bounds = array<i64: 256, 128>}, {pipeline_mode = #tpu.pipeline_mode<synchronous>, transform_indices = @transform_2, window_bounds = array<i64: 3, 128>}, {pipeline_mode = #tpu.pipeline_mode<synchronous>, transform_indices = @transform_3, window_bounds = array<i64: 4, 128, 128>}, {pipeline_mode = #tpu.pipeline_mode<synchronous>, transform_indices = @transform_4, window_bounds = array<i64: 4, 3, 128>}, {transform_indices = @transform_5, window_bounds = array<i64: 304, 128>}]} {
    %c0 = arith.constant 0 : index
    %c0_0 = arith.constant 0 : index
    %0 = vector.load %arg1[%c0, %c0_0] : memref<304x256xf32, #tpu.memory_space<vmem>>, vector<304x256xf32>
    %1 = arith.truncf %0 : vector<304x256xf32> to vector<304x256xbf16>
    %c0_1 = arith.constant 0 : index
    %c0_2 = arith.constant 0 : index
    %2 = vector.load %arg2[%c0_1, %c0_2] : memref<256x128xbf16, #tpu.memory_space<vmem>>, vector<256x128xbf16>
    %cst = arith.constant dense<0.000000e+00> : vector<304x128xf32>
    %3 = tpu.matmul %1, %2, %cst {dimension_numbers = #tpu.dot_dimension_numbers<[1], [0], [0], [1], [0, 0, 1, 1], [], []>} : vector<304x256xbf16>, vector<256x128xbf16>, vector<304x128xf32> -> vector<304x128xf32>
    %c0_3 = arith.constant 0 : index
    %c0_4 = arith.constant 0 : index
    %4 = vector.load %arg3[%c0_3, %c0_4] : memref<3x128xf32, #tpu.memory_space<vmem>>, vector<3x128xf32>
    %5 = vector.extract_strided_slice %4 {offsets = [0, 0], sizes = [1, 128], strides = [1, 1]} : vector<3x128xf32> to vector<1x128xf32>
    %6 = vector.broadcast %5 : vector<1x128xf32> to vector<304x128xf32>
    %7 = arith.addf %3, %6 : vector<304x128xf32>
    %cst_5 = arith.constant 0.000000e+00 : f32
    %8 = vector.broadcast %cst_5 : f32 to vector<304x128xf32>
    %9 = arith.maximumf %7, %8 : vector<304x128xf32>
    %10 = vector.extract_strided_slice %4 {offsets = [1, 0], sizes = [1, 128], strides = [1, 1]} : vector<3x128xf32> to vector<1x128xf32>
    %11 = vector.broadcast %10 : vector<1x128xf32> to vector<304x128xf32>
    %12 = arith.mulf %9, %11 : vector<304x128xf32>
    %13 = vector.extract_strided_slice %4 {offsets = [2, 0], sizes = [1, 128], strides = [1, 1]} : vector<3x128xf32> to vector<1x128xf32>
    %14 = vector.broadcast %13 : vector<1x128xf32> to vector<304x128xf32>
    %15 = arith.addf %12, %14 : vector<304x128xf32>
    %16 = arith.truncf %15 : vector<304x128xf32> to vector<304x128xbf16>
    %c0_6 = arith.constant 0 : index
    %c0_7 = arith.constant 0 : index
    %c0_8 = arith.constant 0 : index
    %17 = vector.load %arg4[%c0_6, %c0_7, %c0_8] : memref<4x128x128xbf16, #tpu.memory_space<vmem>>, vector<1x128x128xbf16>
    %18 = vector.shape_cast %17 : vector<1x128x128xbf16> to vector<128x128xbf16>
    %cst_9 = arith.constant dense<0.000000e+00> : vector<304x128xf32>
    %19 = tpu.matmul %16, %18, %cst_9 {dimension_numbers = #tpu.dot_dimension_numbers<[1], [0], [0], [1], [0, 0, 1, 1], [], []>} : vector<304x128xbf16>, vector<128x128xbf16>, vector<304x128xf32> -> vector<304x128xf32>
    %c0_10 = arith.constant 0 : index
    %c0_11 = arith.constant 0 : index
    %c0_12 = arith.constant 0 : index
    %20 = vector.load %arg5[%c0_10, %c0_11, %c0_12] : memref<4x3x128xf32, #tpu.memory_space<vmem>>, vector<1x3x128xf32>
    %21 = vector.shape_cast %20 : vector<1x3x128xf32> to vector<3x128xf32>
    %22 = vector.extract_strided_slice %21 {offsets = [0, 0], sizes = [1, 128], strides = [1, 1]} : vector<3x128xf32> to vector<1x128xf32>
    %23 = vector.broadcast %22 : vector<1x128xf32> to vector<304x128xf32>
    %24 = arith.addf %19, %23 : vector<304x128xf32>
    %cst_13 = arith.constant 0.000000e+00 : f32
    %25 = vector.broadcast %cst_13 : f32 to vector<304x128xf32>
    %26 = arith.maximumf %24, %25 : vector<304x128xf32>
    %27 = vector.extract_strided_slice %21 {offsets = [1, 0], sizes = [1, 128], strides = [1, 1]} : vector<3x128xf32> to vector<1x128xf32>
    %28 = vector.broadcast %27 : vector<1x128xf32> to vector<304x128xf32>
    %29 = arith.mulf %26, %28 : vector<304x128xf32>
    %30 = vector.extract_strided_slice %21 {offsets = [2, 0], sizes = [1, 128], strides = [1, 1]} : vector<3x128xf32> to vector<1x128xf32>
    %31 = vector.broadcast %30 : vector<1x128xf32> to vector<304x128xf32>
    %32 = arith.addf %29, %31 : vector<304x128xf32>
    %33 = arith.addf %15, %32 : vector<304x128xf32>
    %34 = arith.truncf %33 : vector<304x128xf32> to vector<304x128xbf16>
    %c1 = arith.constant 1 : index
    %c0_14 = arith.constant 0 : index
    %c0_15 = arith.constant 0 : index
    %35 = vector.load %arg4[%c1, %c0_14, %c0_15] : memref<4x128x128xbf16, #tpu.memory_space<vmem>>, vector<1x128x128xbf16>
    %36 = vector.shape_cast %35 : vector<1x128x128xbf16> to vector<128x128xbf16>
    %cst_16 = arith.constant dense<0.000000e+00> : vector<304x128xf32>
    %37 = tpu.matmul %34, %36, %cst_16 {dimension_numbers = #tpu.dot_dimension_numbers<[1], [0], [0], [1], [0, 0, 1, 1], [], []>} : vector<304x128xbf16>, vector<128x128xbf16>, vector<304x128xf32> -> vector<304x128xf32>
    %c1_17 = arith.constant 1 : index
    %c0_18 = arith.constant 0 : index
    %c0_19 = arith.constant 0 : index
    %38 = vector.load %arg5[%c1_17, %c0_18, %c0_19] : memref<4x3x128xf32, #tpu.memory_space<vmem>>, vector<1x3x128xf32>
    %39 = vector.shape_cast %38 : vector<1x3x128xf32> to vector<3x128xf32>
    %40 = vector.extract_strided_slice %39 {offsets = [0, 0], sizes = [1, 128], strides = [1, 1]} : vector<3x128xf32> to vector<1x128xf32>
    %41 = vector.broadcast %40 : vector<1x128xf32> to vector<304x128xf32>
    %42 = arith.addf %37, %41 : vector<304x128xf32>
    %cst_20 = arith.constant 0.000000e+00 : f32
    %43 = vector.broadcast %cst_20 : f32 to vector<304x128xf32>
    %44 = arith.maximumf %42, %43 : vector<304x128xf32>
    %45 = vector.extract_strided_slice %39 {offsets = [1, 0], sizes = [1, 128], strides = [1, 1]} : vector<3x128xf32> to vector<1x128xf32>
    %46 = vector.broadcast %45 : vector<1x128xf32> to vector<304x128xf32>
    %47 = arith.mulf %44, %46 : vector<304x128xf32>
    %48 = vector.extract_strided_slice %39 {offsets = [2, 0], sizes = [1, 128], strides = [1, 1]} : vector<3x128xf32> to vector<1x128xf32>
    %49 = vector.broadcast %48 : vector<1x128xf32> to vector<304x128xf32>
    %50 = arith.addf %47, %49 : vector<304x128xf32>
    %51 = arith.addf %33, %50 : vector<304x128xf32>
    %52 = arith.truncf %51 : vector<304x128xf32> to vector<304x128xbf16>
    %c2 = arith.constant 2 : index
    %c0_21 = arith.constant 0 : index
    %c0_22 = arith.constant 0 : index
    %53 = vector.load %arg4[%c2, %c0_21, %c0_22] : memref<4x128x128xbf16, #tpu.memory_space<vmem>>, vector<1x128x128xbf16>
    %54 = vector.shape_cast %53 : vector<1x128x128xbf16> to vector<128x128xbf16>
    %cst_23 = arith.constant dense<0.000000e+00> : vector<304x128xf32>
    %55 = tpu.matmul %52, %54, %cst_23 {dimension_numbers = #tpu.dot_dimension_numbers<[1], [0], [0], [1], [0, 0, 1, 1], [], []>} : vector<304x128xbf16>, vector<128x128xbf16>, vector<304x128xf32> -> vector<304x128xf32>
    %c2_24 = arith.constant 2 : index
    %c0_25 = arith.constant 0 : index
    %c0_26 = arith.constant 0 : index
    %56 = vector.load %arg5[%c2_24, %c0_25, %c0_26] : memref<4x3x128xf32, #tpu.memory_space<vmem>>, vector<1x3x128xf32>
    %57 = vector.shape_cast %56 : vector<1x3x128xf32> to vector<3x128xf32>
    %58 = vector.extract_strided_slice %57 {offsets = [0, 0], sizes = [1, 128], strides = [1, 1]} : vector<3x128xf32> to vector<1x128xf32>
    %59 = vector.broadcast %58 : vector<1x128xf32> to vector<304x128xf32>
    %60 = arith.addf %55, %59 : vector<304x128xf32>
    %cst_27 = arith.constant 0.000000e+00 : f32
    %61 = vector.broadcast %cst_27 : f32 to vector<304x128xf32>
    %62 = arith.maximumf %60, %61 : vector<304x128xf32>
    %63 = vector.extract_strided_slice %57 {offsets = [1, 0], sizes = [1, 128], strides = [1, 1]} : vector<3x128xf32> to vector<1x128xf32>
    %64 = vector.broadcast %63 : vector<1x128xf32> to vector<304x128xf32>
    %65 = arith.mulf %62, %64 : vector<304x128xf32>
    %66 = vector.extract_strided_slice %57 {offsets = [2, 0], sizes = [1, 128], strides = [1, 1]} : vector<3x128xf32> to vector<1x128xf32>
    %67 = vector.broadcast %66 : vector<1x128xf32> to vector<304x128xf32>
    %68 = arith.addf %65, %67 : vector<304x128xf32>
    %69 = arith.addf %51, %68 : vector<304x128xf32>
    %70 = arith.truncf %69 : vector<304x128xf32> to vector<304x128xbf16>
    %c3 = arith.constant 3 : index
    %c0_28 = arith.constant 0 : index
    %c0_29 = arith.constant 0 : index
    %71 = vector.load %arg4[%c3, %c0_28, %c0_29] : memref<4x128x128xbf16, #tpu.memory_space<vmem>>, vector<1x128x128xbf16>
    %72 = vector.shape_cast %71 : vector<1x128x128xbf16> to vector<128x128xbf16>
    %cst_30 = arith.constant dense<0.000000e+00> : vector<304x128xf32>
    %73 = tpu.matmul %70, %72, %cst_30 {dimension_numbers = #tpu.dot_dimension_numbers<[1], [0], [0], [1], [0, 0, 1, 1], [], []>} : vector<304x128xbf16>, vector<128x128xbf16>, vector<304x128xf32> -> vector<304x128xf32>
    %c3_31 = arith.constant 3 : index
    %c0_32 = arith.constant 0 : index
    %c0_33 = arith.constant 0 : index
    %74 = vector.load %arg5[%c3_31, %c0_32, %c0_33] : memref<4x3x128xf32, #tpu.memory_space<vmem>>, vector<1x3x128xf32>
    %75 = vector.shape_cast %74 : vector<1x3x128xf32> to vector<3x128xf32>
    %76 = vector.extract_strided_slice %75 {offsets = [0, 0], sizes = [1, 128], strides = [1, 1]} : vector<3x128xf32> to vector<1x128xf32>
    %77 = vector.broadcast %76 : vector<1x128xf32> to vector<304x128xf32>
    %78 = arith.addf %73, %77 : vector<304x128xf32>
    %cst_34 = arith.constant 0.000000e+00 : f32
    %79 = vector.broadcast %cst_34 : f32 to vector<304x128xf32>
    %80 = arith.maximumf %78, %79 : vector<304x128xf32>
    %81 = vector.extract_strided_slice %75 {offsets = [1, 0], sizes = [1, 128], strides = [1, 1]} : vector<3x128xf32> to vector<1x128xf32>
    %82 = vector.broadcast %81 : vector<1x128xf32> to vector<304x128xf32>
    %83 = arith.mulf %80, %82 : vector<304x128xf32>
    %84 = vector.extract_strided_slice %75 {offsets = [2, 0], sizes = [1, 128], strides = [1, 1]} : vector<3x128xf32> to vector<1x128xf32>
    %85 = vector.broadcast %84 : vector<1x128xf32> to vector<304x128xf32>
    %86 = arith.addf %83, %85 : vector<304x128xf32>
    %87 = arith.addf %69, %86 : vector<304x128xf32>
    %c0_35 = arith.constant 0 : index
    %c0_36 = arith.constant 0 : index
    %88 = vector.load %arg6[%c0_35, %c0_36] : memref<304x128xf32, #tpu.memory_space<vmem>>, vector<304x128xf32>
    tpu.vector_store %arg6[%c0_35, %c0_36], %87 {strides = array<i32>} : memref<304x128xf32, #tpu.memory_space<vmem>>, vector<304x128xf32>,
    return
  }
  func.func @transform_0(%arg0: i32) -> (i32, i32) {
    %c0_i32 = arith.constant 0 : i32
    %c0_i32_0 = arith.constant 0 : i32
    return %arg0, %c0_i32 : i32, i32
  }
  func.func @transform_1(%arg0: i32) -> (i32, i32) {
    %c0_i32 = arith.constant 0 : i32
    %c0_i32_0 = arith.constant 0 : i32
    %c0_i32_1 = arith.constant 0 : i32
    return %c0_i32, %c0_i32_0 : i32, i32
  }
  func.func @transform_2(%arg0: i32) -> (i32, i32) {
    %c0_i32 = arith.constant 0 : i32
    %c0_i32_0 = arith.constant 0 : i32
    %c0_i32_1 = arith.constant 0 : i32
    return %c0_i32, %c0_i32_0 : i32, i32
  }
  func.func @transform_3(%arg0: i32) -> (i32, i32, i32) {
    %c0_i32 = arith.constant 0 : i32
    %c0_i32_0 = arith.constant 0 : i32
    %c0_i32_1 = arith.constant 0 : i32
    %c0_i32_2 = arith.constant 0 : i32
    return %c0_i32, %c0_i32_0, %c0_i32_1 : i32, i32, i32
  }
  func.func @transform_4(%arg0: i32) -> (i32, i32, i32) {
    %c0_i32 = arith.constant 0 : i32
    %c0_i32_0 = arith.constant 0 : i32
    %c0_i32_1 = arith.constant 0 : i32
    %c0_i32_2 = arith.constant 0 : i32
    return %c0_i32, %c0_i32_0, %c0_i32_1 : i32, i32, i32
  }
  func.func @transform_5(%arg0: i32) -> (i32, i32) {
    %c0_i32 = arith.constant 0 : i32
    %c0_i32_0 = arith.constant 0 : i32
    return %arg0, %c0_i32 : i32, i32
  }
}

</mosaic_0001>

<llo_original>
// kernel: fn.1
$region0: #{fn.1}
  #allocation0 [shape = 'u32[]', space=smem, size = 0x4, offset = 0x4, fixed_abs, tag = 'smem constant byte address 0x4 - core index']
  #allocation1 [shape = 'u32[72,128]{1,0:T(1,128)}', space=vmem, size = 0x9000, scoped, tag = 'internal scratch']
  %s0 = inlined_call_operand.vmem [shape: f32[304,256], index: 0, kind: input, shape index: {}]
  %s1 = inlined_call_operand.vmem [shape: bf16[256,128], index: 1, kind: input, shape index: {}]
  %s2 = inlined_call_operand.vmem [shape: f32[3,128], index: 2, kind: input, shape index: {}]
  %s3 = inlined_call_operand.vmem [shape: bf16[4,128,128], index: 3, kind: input, shape index: {}]
  %s4 = inlined_call_operand.vmem [shape: f32[4,3,128], index: 4, kind: input, shape index: {}]
  %s5 = inlined_call_operand.hbm [shape: f32[304,128], index: 5, kind: output, shape index: {}]
  %s6 = sld [smem:[#allocation0]]
  $region30: #{fn.1} parent=0
    _
  %s8 = ssub.s32 1, %s6
  %s9 = scalar_select 0, %s8, %s6
  $region1: #{fn.1} parent=0
    #allocation2 [shape = 'u8[155648]{0}', space=vmem, size = 0x26000, scoped, tag = 'output window, operand 0, single buffered']
    #allocation3 [shape = 's32[1]{0}', space=sflag, size = 0x4, scoped, tag = 'scoped memory for fn.1']
    %10 = vsyncpa [#allocation3], 0
    // Predicated region
    $region2: #{fn.1} parent=1 // pred_check
      _
    $region3: #{fn.1} parent=1 // pred_check_branch
      %12 = sbr.rel (0) target = $region5
    $region4: #{fn.1} parent=1 // pred_region
      _
    $region5: #{fn.1} parent=1 // pred_fallthru
      _
    // Predicated region
    $region6: #{fn.1} parent=1 // pred_check
      _
    $region7: #{fn.1} parent=1 // pred_check_branch
      %14 = sbr.rel (0) target = $region9
    $region8: #{fn.1} parent=1 // pred_region
      _
    $region9: #{fn.1} parent=1 // pred_fallthru
      _
    // Predicated region
    $region10: #{fn.1} parent=1 // pred_check
      _
    $region11: #{fn.1} parent=1 // pred_check_branch
      %16 = sbr.rel (0) target = $region13
    $region12: #{fn.1} parent=1 // pred_region
      _
    $region13: #{fn.1} parent=1 // pred_fallthru
      _
    // Predicated region
    $region14: #{fn.1} parent=1 // pred_check
      _
    $region15: #{fn.1} parent=1 // pred_check_branch
      %18 = sbr.rel (0) target = $region17
    $region16: #{fn.1} parent=1 // pred_region
      _
    $region17: #{fn.1} parent=1 // pred_fallthru
      _
    // Predicated region
    $region18: #{fn.1} parent=1 // pred_check
      _
    $region19: #{fn.1} parent=1 // pred_check_branch
      %20 = sbr.rel (0) target = $region21
    $region20: #{fn.1} parent=1 // pred_region
      _
    $region21: #{fn.1} parent=1 // pred_fallthru
      _
    %v21 = vld [vmem:[%s0] sm:$0xff]
    %v22 = vld [vmem:[%s0 + $0x8] sm:$0xff]
    %v23 = vld [vmem:[%s0 + $0x10] sm:$0xff]
    %v24 = vld [vmem:[%s0 + $0x18] sm:$0xff]
    %v25 = vld [vmem:[%s0 + $0x20] sm:$0xff]
    %v26 = vld [vmem:[%s0 + $0x28] sm:$0xff]
    %v27 = vld [vmem:[%s0 + $0x30] sm:$0xff]
    %v28 = vld [vmem:[%s0 + $0x38] sm:$0xff]
    %v29 = vld [vmem:[%s0 + $0x40] sm:$0xff]
    %v30 = vld [vmem:[%s0 + $0x48] sm:$0xff]
    %v31 = vld [vmem:[%s0 + $0x50] sm:$0xff]
    %v32 = vld [vmem:[%s0 + $0x58] sm:$0xff]
    %v33 = vld [vmem:[%s0 + $0x60] sm:$0xff]
    %v34 = vld [vmem:[%s0 + $0x68] sm:$0xff]
    %v35 = vld [vmem:[%s0 + $0x70] sm:$0xff]
    %v36 = vld [vmem:[%s0 + $0x78] sm:$0xff]
    %v37 = vld [vmem:[%s0 + $0x80] sm:$0xff]
    %v38 = vld [vmem:[%s0 + $0x88] sm:$0xff]
    %v39 = vld [vmem:[%s0 + $0x90] sm:$0xff]
    %v40 = vld [vmem:[%s0 + $0x98] sm:$0xff]
    %v41 = vld [vmem:[%s0 + $0xa0] sm:$0xff]
    %v42 = vld [vmem:[%s0 + $0xa8] sm:$0xff]
    %v43 = vld [vmem:[%s0 + $0xb0] sm:$0xff]
    %v44 = vld [vmem:[%s0 + $0xb8] sm:$0xff]
    %v45 = vld [vmem:[%s0 + $0xc0] sm:$0xff]
    %v46 = vld [vmem:[%s0 + $0xc8] sm:$0xff]
    %v47 = vld [vmem:[%s0 + $0xd0] sm:$0xff]
    %v48 = vld [vmem:[%s0 + $0xd8] sm:$0xff]
    %v49 = vld [vmem:[%s0 + $0xe0] sm:$0xff]
    %v50 = vld [vmem:[%s0 + $0xe8] sm:$0xff]
    %v51 = vld [vmem:[%s0 + $0xf0] sm:$0xff]
    %v52 = vld [vmem:[%s0 + $0xf8] sm:$0xff]
    %v53 = vld [vmem:[%s0 + $0x100] sm:$0xff]
    %v54 = vld [vmem:[%s0 + $0x108] sm:$0xff]
    %v55 = vld [vmem:[%s0 + $0x110] sm:$0xff]
    %v56 = vld [vmem:[%s0 + $0x118] sm:$0xff]
    %v57 = vld [vmem:[%s0 + $0x120] sm:$0xff]
    %v58 = vld [vmem:[%s0 + $0x128] sm:$0xff]
    %v59 = vld [vmem:[%s0 + $0x130] sm:$0xff]
    %v60 = vld [vmem:[%s0 + $0x138] sm:$0xff]
    %v61 = vld [vmem:[%s0 + $0x140] sm:$0xff]
    %v62 = vld [vmem:[%s0 + $0x148] sm:$0xff]
    %v63 = vld [vmem:[%s0 + $0x150] sm:$0xff]
    %v64 = vld [vmem:[%s0 + $0x158] sm:$0xff]
    %v65 = vld [vmem:[%s0 + $0x160] sm:$0xff]
    %v66 = vld [vmem:[%s0 + $0x168] sm:$0xff]
    %v67 = vld [vmem:[%s0 + $0x170] sm:$0xff]
    %v68 = vld [vmem:[%s0 + $0x178] sm:$0xff]
    %v69 = vld [vmem:[%s0 + $0x180] sm:$0xff]
    %v70 = vld [vmem:[%s0 + $0x188] sm:$0xff]
    %v71 = vld [vmem:[%s0 + $0x190] sm:$0xff]
    %v72 = vld [vmem:[%s0 + $0x198] sm:$0xff]
    %v73 = vld [vmem:[%s0 + $0x1a0] sm:$0xff]
    %v74 = vld [vmem:[%s0 + $0x1a8] sm:$0xff]
    %v75 = vld [vmem:[%s0 + $0x1b0] sm:$0xff]
    %v76 = vld [vmem:[%s0 + $0x1b8] sm:$0xff]
    %v77 = vld [vmem:[%s0 + $0x1c0] sm:$0xff]
    %v78 = vld [vmem:[%s0 + $0x1c8] sm:$0xff]
    %v79 = vld [vmem:[%s0 + $0x1d0] sm:$0xff]
    %v80 = vld [vmem:[%s0 + $0x1d8] sm:$0xff]
    %v81 = vld [vmem:[%s0 + $0x1e0] sm:$0xff]
    %v82 = vld [vmem:[%s0 + $0x1e8] sm:$0xff]
    %v83 = vld [vmem:[%s0 + $0x1f0] sm:$0xff]
    %v84 = vld [vmem:[%s0 + $0x1f8] sm:$0xff]
    %v85 = vld [vmem:[%s0 + $0x200] sm:$0xff]
    %v86 = vld [vmem:[%s0 + $0x208] sm:$0xff]
    %v87 = vld [vmem:[%s0 + $0x210] sm:$0xff]
    %v88 = vld [vmem:[%s0 + $0x218] sm:$0xff]
    %v89 = vld [vmem:[%s0 + $0x220] sm:$0xff]
    %v90 = vld [vmem:[%s0 + $0x228] sm:$0xff]
    %v91 = vld [vmem:[%s0 + $0x230] sm:$0xff]
    %v92 = vld [vmem:[%s0 + $0x238] sm:$0xff]
    %v93 = vld [vmem:[%s0 + $0x240] sm:$0xff]
    %v94 = vld [vmem:[%s0 + $0x248] sm:$0xff]
    %v95 = vld [vmem:[%s0 + $0x250] sm:$0xff]
    %v96 = vld [vmem:[%s0 + $0x258] sm:$0xff]
    %v97 = vpack.c.bf16 %v23, %v21
    %v98 = vpack.c.bf16 %v24, %v22
    %v99 = vpack.c.bf16 %v27, %v25
    %v100 = vpack.c.bf16 %v28, %v26
    %v101 = vpack.c.bf16 %v31, %v29
    %v102 = vpack.c.bf16 %v32, %v30
    %v103 = vpack.c.bf16 %v35, %v33
    %v104 = vpack.c.bf16 %v36, %v34
    %v105 = vpack.c.bf16 %v39, %v37
    %v106 = vpack.c.bf16 %v40, %v38
    %v107 = vpack.c.bf16 %v43, %v41
    %v108 = vpack.c.bf16 %v44, %v42
    %v109 = vpack.c.bf16 %v47, %v45
    %v110 = vpack.c.bf16 %v48, %v46
    %v111 = vpack.c.bf16 %v51, %v49
    %v112 = vpack.c.bf16 %v52, %v50
    %v113 = vpack.c.bf16 %v55, %v53
    %v114 = vpack.c.bf16 %v56, %v54
    %v115 = vpack.c.bf16 %v59, %v57
    %v116 = vpack.c.bf16 %v60, %v58
    %v117 = vpack.c.bf16 %v63, %v61
    %v118 = vpack.c.bf16 %v64, %v62
    %v119 = vpack.c.bf16 %v67, %v65
    %v120 = vpack.c.bf16 %v68, %v66
    %v121 = vpack.c.bf16 %v71, %v69
    %v122 = vpack.c.bf16 %v72, %v70
    %v123 = vpack.c.bf16 %v75, %v73
    %v124 = vpack.c.bf16 %v76, %v74
    %v125 = vpack.c.bf16 %v79, %v77
    %v126 = vpack.c.bf16 %v80, %v78
    %v127 = vpack.c.bf16 %v83, %v81
    %v128 = vpack.c.bf16 %v84, %v82
    %v129 = vpack.c.bf16 %v87, %v85
    %v130 = vpack.c.bf16 %v88, %v86
    %v131 = vpack.c.bf16 %v91, %v89
    %v132 = vpack.c.bf16 %v92, %v90
    %v133 = vpack.c.bf16 %v95, %v93
    %v134 = vpack.c.bf16 %v96, %v94
    %v135 = vld [vmem:[%s1] sm:$0xf]
    %v136 = vld [vmem:[%s1 + $0x4] sm:$0xf]
    %v137 = vld [vmem:[%s1 + $0x8] sm:$0xf]
    %v138 = vld [vmem:[%s1 + $0xc] sm:$0xf]
    %v139 = vld [vmem:[%s1 + $0x10] sm:$0xf]
    %v140 = vld [vmem:[%s1 + $0x14] sm:$0xf]
    %v141 = vld [vmem:[%s1 + $0x18] sm:$0xf]
    %v142 = vld [vmem:[%s1 + $0x1c] sm:$0xf]
    %v143 = vld [vmem:[%s1 + $0x20] sm:$0xf]
    %v144 = vld [vmem:[%s1 + $0x24] sm:$0xf]
    %v145 = vld [vmem:[%s1 + $0x28] sm:$0xf]
    %v146 = vld [vmem:[%s1 + $0x2c] sm:$0xf]
    %v147 = vld [vmem:[%s1 + $0x30] sm:$0xf]
    %v148 = vld [vmem:[%s1 + $0x34] sm:$0xf]
    %v149 = vld [vmem:[%s1 + $0x38] sm:$0xf]
    %v150 = vld [vmem:[%s1 + $0x3c] sm:$0xf]
    %v151 = vld [vmem:[%s1 + $0x40] sm:$0xf]
    %v152 = vld [vmem:[%s1 + $0x44] sm:$0xf]
    %v153 = vld [vmem:[%s1 + $0x48] sm:$0xf]
    %v154 = vld [vmem:[%s1 + $0x4c] sm:$0xf]
    %v155 = vld [vmem:[%s1 + $0x50] sm:$0xf]
    %v156 = vld [vmem:[%s1 + $0x54] sm:$0xf]
    %v157 = vld [vmem:[%s1 + $0x58] sm:$0xf]
    %v158 = vld [vmem:[%s1 + $0x5c] sm:$0xf]
    %v159 = vld [vmem:[%s1 + $0x60] sm:$0xf]
    %v160 = vld [vmem:[%s1 + $0x64] sm:$0xf]
    %v161 = vld [vmem:[%s1 + $0x68] sm:$0xf]
    %v162 = vld [vmem:[%s1 + $0x6c] sm:$0xf]
    %v163 = vld [vmem:[%s1 + $0x70] sm:$0xf]
    %v164 = vld [vmem:[%s1 + $0x74] sm:$0xf]
    %v165 = vld [vmem:[%s1 + $0x78] sm:$0xf]
    %v166 = vld [vmem:[%s1 + $0x7c] sm:$0xf]
    %v167 = vld [vmem:[%s2] sm:$0x7]
    %v168 = vperm.slane %v167, 0
    %v201 = vunpack.c.l.b16 %v135
    %v202 = vunpack.c.l.b16 %v136
    %v203 = vunpack.c.l.b16 %v137
    %v204 = vunpack.c.l.b16 %v138
    %v205 = vunpack.c.l.b16 %v139
    %v206 = vunpack.c.l.b16 %v140
    %v207 = vunpack.c.l.b16 %v141
    %v208 = vunpack.c.l.b16 %v142
    %v209 = vunpack.c.l.b16 %v143
    %v210 = vunpack.c.l.b16 %v144
    %v211 = vunpack.c.l.b16 %v145
    %v212 = vunpack.c.l.b16 %v146
    %v213 = vunpack.c.l.b16 %v147
    %v214 = vunpack.c.l.b16 %v148
    %v215 = vunpack.c.l.b16 %v149
    %v216 = vunpack.c.l.b16 %v150
    %v217 = vunpack.c.l.b16 %v151
    %v218 = vunpack.c.l.b16 %v152
    %v219 = vunpack.c.l.b16 %v153
    %v220 = vunpack.c.l.b16 %v154
    %v221 = vunpack.c.l.b16 %v155
    %v222 = vunpack.c.l.b16 %v156
    %v223 = vunpack.c.l.b16 %v157
    %v224 = vunpack.c.l.b16 %v158
    %v225 = vunpack.c.l.b16 %v159
    %v226 = vunpack.c.l.b16 %v160
    %v227 = vunpack.c.l.b16 %v161
    %v228 = vunpack.c.l.b16 %v162
    %v229 = vunpack.c.l.b16 %v163
    %v230 = vunpack.c.l.b16 %v164
    %v231 = vunpack.c.l.b16 %v165
    %v232 = vunpack.c.l.b16 %v166
    %v233 = vpack.c.b16 %v202, %v201
    %v234 = vpack.c.b16 %v204, %v203
    %v235 = vpack.c.b16 %v206, %v205
    %v236 = vpack.c.b16 %v208, %v207
    %v237 = vpack.c.b16 %v210, %v209
    %v238 = vpack.c.b16 %v212, %v211
    %v239 = vpack.c.b16 %v214, %v213
    %v240 = vpack.c.b16 %v216, %v215
    %v241 = vpack.c.b16 %v218, %v217
    %v242 = vpack.c.b16 %v220, %v219
    %v243 = vpack.c.b16 %v222, %v221
    %v244 = vpack.c.b16 %v224, %v223
    %v245 = vpack.c.b16 %v226, %v225
    %v246 = vpack.c.b16 %v228, %v227
    %v247 = vpack.c.b16 %v230, %v229
    %v248 = vpack.c.b16 %v232, %v231
    %265 = vmatpush.bf16.msra.mxu0 %v240
    %266 = vmatpush.bf16.msra.mxu0 %v239
    %267 = vmatpush.bf16.msra.mxu0 %v238
    %268 = vmatpush.bf16.msra.mxu0 %v237
    %269 = vmatpush.bf16.msra.mxu0 %v236
    %270 = vmatpush.bf16.msra.mxu0 %v235
    %271 = vmatpush.bf16.msra.mxu0 %v234
    %272 = vmatpush.bf16.msra.mxu0 %v233
    %273 = vmatmul.bf16.gmra.mxu0 %v97
    %v274 = vpop.f32.mrf.mxu0
    %v275 = vadd.f32 %v168, %v274
    %v276 = vpop.f32.mrf.mxu0
    %v277 = vadd.f32 %v168, %v276
    %278 = vmatmul.bf16.gmra.mxu0 %v99
    %v279 = vpop.f32.mrf.mxu0
    %v280 = vadd.f32 %v168, %v279
    %v281 = vpop.f32.mrf.mxu0
    %v282 = vadd.f32 %v168, %v281
    %283 = vmatmul.bf16.gmra.mxu0 %v101
    %v284 = vpop.f32.mrf.mxu0
    %v285 = vadd.f32 %v168, %v284
    %v286 = vpop.f32.mrf.mxu0
    %v287 = vadd.f32 %v168, %v286
    %288 = vmatmul.bf16.gmra.mxu0 %v103
    %v289 = vpop.f32.mrf.mxu0
    %v290 = vadd.f32 %v168, %v289
    %v291 = vpop.f32.mrf.mxu0
    %v292 = vadd.f32 %v168, %v291
    %293 = vmatmul.bf16.gmra.mxu0 %v105
    %v294 = vpop.f32.mrf.mxu0
    %v295 = vadd.f32 %v168, %v294
    %v296 = vpop.f32.mrf.mxu0
    %v297 = vadd.f32 %v168, %v296
    %298 = vmatmul.bf16.gmra.mxu0 %v107
    %v299 = vpop.f32.mrf.mxu0
    %v300 = vadd.f32 %v168, %v299
    %v301 = vpop.f32.mrf.mxu0
    %v302 = vadd.f32 %v168, %v301
    %303 = vmatmul.bf16.gmra.mxu0 %v109
    %v304 = vpop.f32.mrf.mxu0
    %v305 = vadd.f32 %v168, %v304
    %v306 = vpop.f32.mrf.mxu0
    %v307 = vadd.f32 %v168, %v306
    %308 = vmatmul.bf16.gmra.mxu0 %v111
    %v309 = vpop.f32.mrf.mxu0
    %v310 = vadd.f32 %v168, %v309
    %v311 = vpop.f32.mrf.mxu0
    %v312 = vadd.f32 %v168, %v311
    %313 = vmatmul.bf16.gmra.mxu0 %v113
    %v314 = vpop.f32.mrf.mxu0
    %v315 = vadd.f32 %v168, %v314
    %v316 = vpop.f32.mrf.mxu0
    %v317 = vadd.f32 %v168, %v316
    %318 = vmatmul.bf16.gmra.mxu0 %v115
    %v319 = vpop.f32.mrf.mxu0
    %v320 = vadd.f32 %v168, %v319
    %v321 = vpop.f32.mrf.mxu0
    %v322 = vadd.f32 %v168, %v321
    %323 = vmatmul.bf16.gmra.mxu0 %v117
    %v324 = vpop.f32.mrf.mxu0
    %v325 = vadd.f32 %v168, %v324
    %v326 = vpop.f32.mrf.mxu0
    %v327 = vadd.f32 %v168, %v326
    %328 = vmatmul.bf16.gmra.mxu0 %v119
    %v329 = vpop.f32.mrf.mxu0
    %v330 = vadd.f32 %v168, %v329
    %v331 = vpop.f32.mrf.mxu0
    %v332 = vadd.f32 %v168, %v331
    %333 = vmatmul.bf16.gmra.mxu0 %v121
    %v334 = vpop.f32.mrf.mxu0
    %v335 = vadd.f32 %v168, %v334
    %v336 = vpop.f32.mrf.mxu0
    %v337 = vadd.f32 %v168, %v336
    %338 = vmatmul.bf16.gmra.mxu0 %v123
    %v339 = vpop.f32.mrf.mxu0
    %v340 = vadd.f32 %v168, %v339
    %v341 = vpop.f32.mrf.mxu0
    %v342 = vadd.f32 %v168, %v341
    %343 = vmatmul.bf16.gmra.mxu0 %v125
    %v344 = vpop.f32.mrf.mxu0
    %v345 = vadd.f32 %v168, %v344
    %v346 = vpop.f32.mrf.mxu0
    %v347 = vadd.f32 %v168, %v346
    %348 = vmatmul.bf16.gmra.mxu0 %v127
    %v349 = vpop.f32.mrf.mxu0
    %v350 = vadd.f32 %v168, %v349
    %v351 = vpop.f32.mrf.mxu0
    %v352 = vadd.f32 %v168, %v351
    %353 = vmatmul.bf16.gmra.mxu0 %v129
    %v354 = vpop.f32.mrf.mxu0
    %v355 = vadd.f32 %v168, %v354
    %v356 = vpop.f32.mrf.mxu0
    %v357 = vadd.f32 %v168, %v356
    %358 = vmatmul.bf16.gmra.mxu0 %v131
    %v359 = vpop.f32.mrf.mxu0
    %v360 = vadd.f32 %v168, %v359
    %v361 = vpop.f32.mrf.mxu0
    %v362 = vadd.f32 %v168, %v361
    %363 = vmatmul.bf16.gmra.mxu0 %v133
    %v364 = vpop.f32.mrf.mxu0
    %v365 = vadd.f32 %v168, %v364
    %v366 = vpop.f32.mrf.mxu0
    %v367 = vadd.f32 %v168, %v366
    %368 = vdwg.mxu0
    %369 = vmatpush.bf16.msra.mxu0 %v248
    %370 = vmatpush.bf16.msra.mxu0 %v247
    %371 = vmatpush.bf16.msra.mxu0 %v246
    %372 = vmatpush.bf16.msra.mxu0 %v245
    %373 = vmatpush.bf16.msra.mxu0 %v244
    %374 = vmatpush.bf16.msra.mxu0 %v243
    %375 = vmatpush.bf16.msra.mxu0 %v242
    %376 = vmatpush.bf16.msra.mxu0 %v241
    %377 = vmatmul.bf16.gmra.mxu0 %v98
    %v378 = vpop.f32.mrf.mxu0
    %v379 = vadd.f32 %v275, %v378
    %v380 = vpop.f32.mrf.mxu0
    %v381 = vadd.f32 %v277, %v380
    %382 = vmatmul.bf16.gmra.mxu0 %v100
    %v383 = vpop.f32.mrf.mxu0
    %v384 = vadd.f32 %v280, %v383
    %v385 = vpop.f32.mrf.mxu0
    %v386 = vadd.f32 %v282, %v385
    %387 = vmatmul.bf16.gmra.mxu0 %v102
    %v388 = vpop.f32.mrf.mxu0
    %v389 = vadd.f32 %v285, %v388
    %v390 = vpop.f32.mrf.mxu0
    %v391 = vadd.f32 %v287, %v390
    %392 = vmatmul.bf16.gmra.mxu0 %v104
    %v393 = vpop.f32.mrf.mxu0
    %v394 = vadd.f32 %v290, %v393
    %v395 = vpop.f32.mrf.mxu0
    %v396 = vadd.f32 %v292, %v395
    %397 = vmatmul.bf16.gmra.mxu0 %v106
    %v398 = vpop.f32.mrf.mxu0
    %v399 = vadd.f32 %v295, %v398
    %v400 = vpop.f32.mrf.mxu0
    %v401 = vadd.f32 %v297, %v400
    %402 = vmatmul.bf16.gmra.mxu0 %v108
    %v403 = vpop.f32.mrf.mxu0
    %v404 = vadd.f32 %v300, %v403
    %v405 = vpop.f32.mrf.mxu0
    %v406 = vadd.f32 %v302, %v405
    %407 = vmatmul.bf16.gmra.mxu0 %v110
    %v408 = vpop.f32.mrf.mxu0
    %v409 = vadd.f32 %v305, %v408
    %v410 = vpop.f32.mrf.mxu0
    %v411 = vadd.f32 %v307, %v410
    %412 = vmatmul.bf16.gmra.mxu0 %v112
    %v413 = vpop.f32.mrf.mxu0
    %v414 = vadd.f32 %v310, %v413
    %v415 = vpop.f32.mrf.mxu0
    %v416 = vadd.f32 %v312, %v415
    %417 = vmatmul.bf16.gmra.mxu0 %v114
    %v418 = vpop.f32.mrf.mxu0
    %v419 = vadd.f32 %v315, %v418
    %v420 = vpop.f32.mrf.mxu0
    %v421 = vadd.f32 %v317, %v420
    %422 = vmatmul.bf16.gmra.mxu0 %v116
    %v423 = vpop.f32.mrf.mxu0
    %v424 = vadd.f32 %v320, %v423
    %v425 = vpop.f32.mrf.mxu0
    %v426 = vadd.f32 %v322, %v425
    %427 = vmatmul.bf16.gmra.mxu0 %v118
    %v428 = vpop.f32.mrf.mxu0
    %v429 = vadd.f32 %v325, %v428
    %v430 = vpop.f32.mrf.mxu0
    %v431 = vadd.f32 %v327, %v430
    %432 = vmatmul.bf16.gmra.mxu0 %v120
    %v433 = vpop.f32.mrf.mxu0
    %v434 = vadd.f32 %v330, %v433
    %v435 = vpop.f32.mrf.mxu0
    %v436 = vadd.f32 %v332, %v435
    %437 = vmatmul.bf16.gmra.mxu0 %v122
    %v438 = vpop.f32.mrf.mxu0
    %v439 = vadd.f32 %v335, %v438
    %v440 = vpop.f32.mrf.mxu0
    %v441 = vadd.f32 %v337, %v440
    %442 = vmatmul.bf16.gmra.mxu0 %v124
    %v443 = vpop.f32.mrf.mxu0
    %v444 = vadd.f32 %v340, %v443
    %v445 = vpop.f32.mrf.mxu0
    %v446 = vadd.f32 %v342, %v445
    %447 = vmatmul.bf16.gmra.mxu0 %v126
    %v448 = vpop.f32.mrf.mxu0
    %v449 = vadd.f32 %v345, %v448
    %v450 = vpop.f32.mrf.mxu0
    %v451 = vadd.f32 %v347, %v450
    %452 = vmatmul.bf16.gmra.mxu0 %v128
    %v453 = vpop.f32.mrf.mxu0
    %v454 = vadd.f32 %v350, %v453
    %v455 = vpop.f32.mrf.mxu0
    %v456 = vadd.f32 %v352, %v455
    %457 = vmatmul.bf16.gmra.mxu0 %v130
    %v458 = vpop.f32.mrf.mxu0
    %v459 = vadd.f32 %v355, %v458
    %v460 = vpop.f32.mrf.mxu0
    %v461 = vadd.f32 %v357, %v460
    %462 = vmatmul.bf16.gmra.mxu0 %v132
    %v463 = vpop.f32.mrf.mxu0
    %v464 = vadd.f32 %v360, %v463
    %v465 = vpop.f32.mrf.mxu0
    %v466 = vadd.f32 %v362, %v465
    %467 = vmatmul.bf16.gmra.mxu0 %v134
    %v468 = vpop.f32.mrf.mxu0
    %v469 = vadd.f32 %v365, %v468
    %v470 = vpop.f32.mrf.mxu0
    %v471 = vadd.f32 %v367, %v470
    %472 = vdwg.mxu0
    %v473 = vmax.f32 %v379, 0.0
    %v474 = vmax.f32 %v381, 0.0
    %v475 = vmax.f32 %v384, 0.0
    %v476 = vmax.f32 %v386, 0.0
    %v477 = vmax.f32 %v389, 0.0
    %v478 = vmax.f32 %v391, 0.0
    %v479 = vmax.f32 %v394, 0.0
    %v480 = vmax.f32 %v396, 0.0
    %v481 = vmax.f32 %v399, 0.0
    %v482 = vmax.f32 %v401, 0.0
    %v483 = vmax.f32 %v404, 0.0
    %v484 = vmax.f32 %v406, 0.0
    %v485 = vmax.f32 %v409, 0.0
    %v486 = vmax.f32 %v411, 0.0
    %v487 = vmax.f32 %v414, 0.0
    %v488 = vmax.f32 %v416, 0.0
    %v489 = vmax.f32 %v419, 0.0
    %v490 = vmax.f32 %v421, 0.0
    %v491 = vmax.f32 %v424, 0.0
    %v492 = vmax.f32 %v426, 0.0
    %v493 = vmax.f32 %v429, 0.0
    %v494 = vmax.f32 %v431, 0.0
    %v495 = vmax.f32 %v434, 0.0
    %v496 = vmax.f32 %v436, 0.0
    %v497 = vmax.f32 %v439, 0.0
    %v498 = vmax.f32 %v441, 0.0
    %v499 = vmax.f32 %v444, 0.0
    %v500 = vmax.f32 %v446, 0.0
    %v501 = vmax.f32 %v449, 0.0
    %v502 = vmax.f32 %v451, 0.0
    %v503 = vmax.f32 %v454, 0.0
    %v504 = vmax.f32 %v456, 0.0
    %v505 = vmax.f32 %v459, 0.0
    %v506 = vmax.f32 %v461, 0.0
    %v507 = vmax.f32 %v464, 0.0
    %v508 = vmax.f32 %v466, 0.0
    %v509 = vmax.f32 %v469, 0.0
    %v510 = vmax.f32 %v471, 0.0
    %v511 = vperm.slane %v167, 1
    %v512 = vmul.f32 %v473, %v511
    %v513 = vmul.f32 %v474, %v511
    %v514 = vmul.f32 %v475, %v511
    %v515 = vmul.f32 %v476, %v511
    %v516 = vmul.f32 %v477, %v511
    %v517 = vmul.f32 %v478, %v511
    %v518 = vmul.f32 %v479, %v511
    %v519 = vmul.f32 %v480, %v511
    %v520 = vmul.f32 %v481, %v511
    %v521 = vmul.f32 %v482, %v511
    %v522 = vmul.f32 %v483, %v511
    %v523 = vmul.f32 %v484, %v511
    %v524 = vmul.f32 %v485, %v511
    %v525 = vmul.f32 %v486, %v511
    %v526 = vmul.f32 %v487, %v511
    %v527 = vmul.f32 %v488, %v511
    %v528 = vmul.f32 %v489, %v511
    %v529 = vmul.f32 %v490, %v511
    %v530 = vmul.f32 %v491, %v511
    %v531 = vmul.f32 %v492, %v511
    %v532 = vmul.f32 %v493, %v511
    %v533 = vmul.f32 %v494, %v511
    %v534 = vmul.f32 %v495, %v511
    %v535 = vmul.f32 %v496, %v511
    %v536 = vmul.f32 %v497, %v511
    %v537 = vmul.f32 %v498, %v511
    %v538 = vmul.f32 %v499, %v511
    %v539 = vmul.f32 %v500, %v511
    %v540 = vmul.f32 %v501, %v511
    %v541 = vmul.f32 %v502, %v511
    %v542 = vmul.f32 %v503, %v511
    %v543 = vmul.f32 %v504, %v511
    %v544 = vmul.f32 %v505, %v511
    %v545 = vmul.f32 %v506, %v511
    %v546 = vmul.f32 %v507, %v511
    %v547 = vmul.f32 %v508, %v511
    %v548 = vmul.f32 %v509, %v511
    %v549 = vmul.f32 %v510, %v511
    %v550 = vperm.slane %v167, 2
    %v551 = vadd.f32 %v512, %v550
    %v552 = vadd.f32 %v513, %v550
    %v553 = vadd.f32 %v514, %v550
    %v554 = vadd.f32 %v515, %v550
    %v555 = vadd.f32 %v516, %v550
    %v556 = vadd.f32 %v517, %v550
    %v557 = vadd.f32 %v518, %v550
    %v558 = vadd.f32 %v519, %v550
    %v559 = vadd.f32 %v520, %v550
    %v560 = vadd.f32 %v521, %v550
    %v561 = vadd.f32 %v522, %v550
    %v562 = vadd.f32 %v523, %v550
    %v563 = vadd.f32 %v524, %v550
    %v564 = vadd.f32 %v525, %v550
    %v565 = vadd.f32 %v526, %v550
    %v566 = vadd.f32 %v527, %v550
    %v567 = vadd.f32 %v528, %v550
    %v568 = vadd.f32 %v529, %v550
    %v569 = vadd.f32 %v530, %v550
    %v570 = vadd.f32 %v531, %v550
    %v571 = vadd.f32 %v532, %v550
    %v572 = vadd.f32 %v533, %v550
    %v573 = vadd.f32 %v534, %v550
    %v574 = vadd.f32 %v535, %v550
    %v575 = vadd.f32 %v536, %v550
    %v576 = vadd.f32 %v537, %v550
    %v577 = vadd.f32 %v538, %v550
    %v578 = vadd.f32 %v539, %v550
    %v579 = vadd.f32 %v540, %v550
    %v580 = vadd.f32 %v541, %v550
    %v581 = vadd.f32 %v542, %v550
    %v582 = vadd.f32 %v543, %v550
    %v583 = vadd.f32 %v544, %v550
    %v584 = vadd.f32 %v545, %v550
    %v585 = vadd.f32 %v546, %v550
    %v586 = vadd.f32 %v547, %v550
    %v587 = vadd.f32 %v548, %v550
    %v588 = vadd.f32 %v549, %v550
    %v589 = vpack.c.bf16 %v552, %v551
    %v590 = vpack.c.bf16 %v554, %v553
    %v591 = vpack.c.bf16 %v556, %v555
    %v592 = vpack.c.bf16 %v558, %v557
    %v593 = vpack.c.bf16 %v560, %v559
    %v594 = vpack.c.bf16 %v562, %v561
    %v595 = vpack.c.bf16 %v564, %v563
    %v596 = vpack.c.bf16 %v566, %v565
    %v597 = vpack.c.bf16 %v568, %v567
    %v598 = vpack.c.bf16 %v570, %v569
    %v599 = vpack.c.bf16 %v572, %v571
    %v600 = vpack.c.bf16 %v574, %v573
    %v601 = vpack.c.bf16 %v576, %v575
    %v602 = vpack.c.bf16 %v578, %v577
    %v603 = vpack.c.bf16 %v580, %v579
    %v604 = vpack.c.bf16 %v582, %v581
    %v605 = vpack.c.bf16 %v584, %v583
    %v606 = vpack.c.bf16 %v586, %v585
    %v607 = vpack.c.bf16 %v588, %v587
    %v608 = vld [vmem:[%s3] sm:$0xf]
    %v609 = vld [vmem:[%s3 + $0x4] sm:$0xf]
    %v610 = vld [vmem:[%s3 + $0x8] sm:$0xf]
    %v611 = vld [vmem:[%s3 + $0xc] sm:$0xf]
    %v612 = vld [vmem:[%s3 + $0x10] sm:$0xf]
    %v613 = vld [vmem:[%s3 + $0x14] sm:$0xf]
    %v614 = vld [vmem:[%s3 + $0x18] sm:$0xf]
    %v615 = vld [vmem:[%s3 + $0x1c] sm:$0xf]
    %v616 = vld [vmem:[%s3 + $0x20] sm:$0xf]
    %v617 = vld [vmem:[%s3 + $0x24] sm:$0xf]
    %v618 = vld [vmem:[%s3 + $0x28] sm:$0xf]
    %v619 = vld [vmem:[%s3 + $0x2c] sm:$0xf]
    %v620 = vld [vmem:[%s3 + $0x30] sm:$0xf]
    %v621 = vld [vmem:[%s3 + $0x34] sm:$0xf]
    %v622 = vld [vmem:[%s3 + $0x38] sm:$0xf]
    %v623 = vld [vmem:[%s3 + $0x3c] sm:$0xf]
    %v624 = vld [vmem:[%s4] sm:$0x7]
    %v625 = vperm.slane %v624, 0
    %v642 = vunpack.c.l.b16 %v608
    %v643 = vunpack.c.l.b16 %v609
    %v644 = vunpack.c.l.b16 %v610
    %v645 = vunpack.c.l.b16 %v611
    %v646 = vunpack.c.l.b16 %v612
    %v647 = vunpack.c.l.b16 %v613
    %v648 = vunpack.c.l.b16 %v614
    %v649 = vunpack.c.l.b16 %v615
    %v650 = vunpack.c.l.b16 %v616
    %v651 = vunpack.c.l.b16 %v617
    %v652 = vunpack.c.l.b16 %v618
    %v653 = vunpack.c.l.b16 %v619
    %v654 = vunpack.c.l.b16 %v620
    %v655 = vunpack.c.l.b16 %v621
    %v656 = vunpack.c.l.b16 %v622
    %v657 = vunpack.c.l.b16 %v623
    %v658 = vpack.c.b16 %v643, %v642
    %v659 = vpack.c.b16 %v645, %v644
    %v660 = vpack.c.b16 %v647, %v646
    %v661 = vpack.c.b16 %v649, %v648
    %v662 = vpack.c.b16 %v651, %v650
    %v663 = vpack.c.b16 %v653, %v652
    %v664 = vpack.c.b16 %v655, %v654
    %v665 = vpack.c.b16 %v657, %v656
    %674 = vmatpush.bf16.msra.mxu0 %v665
    %675 = vmatpush.bf16.msra.mxu0 %v664
    %676 = vmatpush.bf16.msra.mxu0 %v663
    %677 = vmatpush.bf16.msra.mxu0 %v662
    %678 = vmatpush.bf16.msra.mxu0 %v661
    %679 = vmatpush.bf16.msra.mxu0 %v660
    %680 = vmatpush.bf16.msra.mxu0 %v659
    %681 = vmatpush.bf16.msra.mxu0 %v658
    %682 = vmatmul.bf16.gmra.mxu0 %v589
    %v683 = vpop.f32.mrf.mxu0
    %v684 = vadd.f32 %v625, %v683
    %v685 = vpop.f32.mrf.mxu0
    %v686 = vadd.f32 %v625, %v685
    %687 = vmatmul.bf16.gmra.mxu0 %v590
    %v688 = vpop.f32.mrf.mxu0
    %v689 = vadd.f32 %v625, %v688
    %v690 = vpop.f32.mrf.mxu0
    %v691 = vadd.f32 %v625, %v690
    %692 = vmatmul.bf16.gmra.mxu0 %v591
    %v693 = vpop.f32.mrf.mxu0
    %v694 = vadd.f32 %v625, %v693
    %v695 = vpop.f32.mrf.mxu0
    %v696 = vadd.f32 %v625, %v695
    %697 = vmatmul.bf16.gmra.mxu0 %v592
    %v698 = vpop.f32.mrf.mxu0
    %v699 = vadd.f32 %v625, %v698
    %v700 = vpop.f32.mrf.mxu0
    %v701 = vadd.f32 %v625, %v700
    %702 = vmatmul.bf16.gmra.mxu0 %v593
    %v703 = vpop.f32.mrf.mxu0
    %v704 = vadd.f32 %v625, %v703
    %v705 = vpop.f32.mrf.mxu0
    %v706 = vadd.f32 %v625, %v705
    %707 = vmatmul.bf16.gmra.mxu0 %v594
    %v708 = vpop.f32.mrf.mxu0
    %v709 = vadd.f32 %v625, %v708
    %v710 = vpop.f32.mrf.mxu0
    %v711 = vadd.f32 %v625, %v710
    %712 = vmatmul.bf16.gmra.mxu0 %v595
    %v713 = vpop.f32.mrf.mxu0
    %v714 = vadd.f32 %v625, %v713
    %v715 = vpop.f32.mrf.mxu0
    %v716 = vadd.f32 %v625, %v715
    %717 = vmatmul.bf16.gmra.mxu0 %v596
    %v718 = vpop.f32.mrf.mxu0
    %v719 = vadd.f32 %v625, %v718
    %v720 = vpop.f32.mrf.mxu0
    %v721 = vadd.f32 %v625, %v720
    %722 = vmatmul.bf16.gmra.mxu0 %v597
    %v723 = vpop.f32.mrf.mxu0
    %v724 = vadd.f32 %v625, %v723
    %v725 = vpop.f32.mrf.mxu0
    %v726 = vadd.f32 %v625, %v725
    %727 = vmatmul.bf16.gmra.mxu0 %v598
    %v728 = vpop.f32.mrf.mxu0
    %v729 = vadd.f32 %v625, %v728
    %v730 = vpop.f32.mrf.mxu0
    %v731 = vadd.f32 %v625, %v730
    %732 = vmatmul.bf16.gmra.mxu0 %v599
    %v733 = vpop.f32.mrf.mxu0
    %v734 = vadd.f32 %v625, %v733
    %v735 = vpop.f32.mrf.mxu0
    %v736 = vadd.f32 %v625, %v735
    %737 = vmatmul.bf16.gmra.mxu0 %v600
    %v738 = vpop.f32.mrf.mxu0
    %v739 = vadd.f32 %v625, %v738
    %v740 = vpop.f32.mrf.mxu0
    %v741 = vadd.f32 %v625, %v740
    %742 = vmatmul.bf16.gmra.mxu0 %v601
    %v743 = vpop.f32.mrf.mxu0
    %v744 = vadd.f32 %v625, %v743
    %v745 = vpop.f32.mrf.mxu0
    %v746 = vadd.f32 %v625, %v745
    %747 = vmatmul.bf16.gmra.mxu0 %v602
    %v748 = vpop.f32.mrf.mxu0
    %v749 = vadd.f32 %v625, %v748
    %v750 = vpop.f32.mrf.mxu0
    %v751 = vadd.f32 %v625, %v750
    %752 = vmatmul.bf16.gmra.mxu0 %v603
    %v753 = vpop.f32.mrf.mxu0
    %v754 = vadd.f32 %v625, %v753
    %v755 = vpop.f32.mrf.mxu0
    %v756 = vadd.f32 %v625, %v755
    %757 = vmatmul.bf16.gmra.mxu0 %v604
    %v758 = vpop.f32.mrf.mxu0
    %v759 = vadd.f32 %v625, %v758
    %v760 = vpop.f32.mrf.mxu0
    %v761 = vadd.f32 %v625, %v760
    %762 = vmatmul.bf16.gmra.mxu0 %v605
    %v763 = vpop.f32.mrf.mxu0
    %v764 = vadd.f32 %v625, %v763
    %v765 = vpop.f32.mrf.mxu0
    %v766 = vadd.f32 %v625, %v765
    %767 = vmatmul.bf16.gmra.mxu0 %v606
    %v768 = vpop.f32.mrf.mxu0
    %v769 = vadd.f32 %v625, %v768
    %v770 = vpop.f32.mrf.mxu0
    %v771 = vadd.f32 %v625, %v770
    %772 = vmatmul.bf16.gmra.mxu0 %v607
    %v773 = vpop.f32.mrf.mxu0
    %v774 = vadd.f32 %v625, %v773
    %v775 = vpop.f32.mrf.mxu0
    %v776 = vadd.f32 %v625, %v775
    %777 = vdwg.mxu0
    %v778 = vmax.f32 %v684, 0.0
    %v779 = vmax.f32 %v686, 0.0
    %v780 = vmax.f32 %v689, 0.0
    %v781 = vmax.f32 %v691, 0.0
    %v782 = vmax.f32 %v694, 0.0
    %v783 = vmax.f32 %v696, 0.0
    %v784 = vmax.f32 %v699, 0.0
    %v785 = vmax.f32 %v701, 0.0
    %v786 = vmax.f32 %v704, 0.0
    %v787 = vmax.f32 %v706, 0.0
    %v788 = vmax.f32 %v709, 0.0
    %v789 = vmax.f32 %v711, 0.0
    %v790 = vmax.f32 %v714, 0.0
    %v791 = vmax.f32 %v716, 0.0
    %v792 = vmax.f32 %v719, 0.0
    %v793 = vmax.f32 %v721, 0.0
    %v794 = vmax.f32 %v724, 0.0
    %v795 = vmax.f32 %v726, 0.0
    %v796 = vmax.f32 %v729, 0.0
    %v797 = vmax.f32 %v731, 0.0
    %v798 = vmax.f32 %v734, 0.0
    %v799 = vmax.f32 %v736, 0.0
    %v800 = vmax.f32 %v739, 0.0
    %v801 = vmax.f32 %v741, 0.0
    %v802 = vmax.f32 %v744, 0.0
    %v803 = vmax.f32 %v746, 0.0
    %v804 = vmax.f32 %v749, 0.0
    %v805 = vmax.f32 %v751, 0.0
    %v806 = vmax.f32 %v754, 0.0
    %v807 = vmax.f32 %v756, 0.0
    %v808 = vmax.f32 %v759, 0.0
    %v809 = vmax.f32 %v761, 0.0
    %v810 = vmax.f32 %v764, 0.0
    %v811 = vmax.f32 %v766, 0.0
    %v812 = vmax.f32 %v769, 0.0
    %v813 = vmax.f32 %v771, 0.0
    %v814 = vmax.f32 %v774, 0.0
    %v815 = vmax.f32 %v776, 0.0
    %v816 = vperm.slane %v624, 1
    %v817 = vmul.f32 %v778, %v816
    %v818 = vmul.f32 %v779, %v816
    %v819 = vmul.f32 %v780, %v816
    %v820 = vmul.f32 %v781, %v816
    %v821 = vmul.f32 %v782, %v816
    %v822 = vmul.f32 %v783, %v816
    %v823 = vmul.f32 %v784, %v816
    %v824 = vmul.f32 %v785, %v816
    %v825 = vmul.f32 %v786, %v816
    %v826 = vmul.f32 %v787, %v816
    %v827 = vmul.f32 %v788, %v816
    %v828 = vmul.f32 %v789, %v816
    %v829 = vmul.f32 %v790, %v816
    %v830 = vmul.f32 %v791, %v816
    %v831 = vmul.f32 %v792, %v816
    %v832 = vmul.f32 %v793, %v816
    %v833 = vmul.f32 %v794, %v816
    %v834 = vmul.f32 %v795, %v816
    %v835 = vmul.f32 %v796, %v816
    %v836 = vmul.f32 %v797, %v816
    %v837 = vmul.f32 %v798, %v816
    %v838 = vmul.f32 %v799, %v816
    %v839 = vmul.f32 %v800, %v816
    %v840 = vmul.f32 %v801, %v816
    %v841 = vmul.f32 %v802, %v816
    %v842 = vmul.f32 %v803, %v816
    %v843 = vmul.f32 %v804, %v816
    %v844 = vmul.f32 %v805, %v816
    %v845 = vmul.f32 %v806, %v816
    %v846 = vmul.f32 %v807, %v816
    %v847 = vmul.f32 %v808, %v816
    %v848 = vmul.f32 %v809, %v816
    %v849 = vmul.f32 %v810, %v816
    %v850 = vmul.f32 %v811, %v816
    %v851 = vmul.f32 %v812, %v816
    %v852 = vmul.f32 %v813, %v816
    %v853 = vmul.f32 %v814, %v816
    %v854 = vmul.f32 %v815, %v816
    %v855 = vperm.slane %v624, 2
    %v856 = vadd.f32 %v817, %v855
    %v857 = vadd.f32 %v818, %v855
    %v858 = vadd.f32 %v819, %v855
    %v859 = vadd.f32 %v820, %v855
    %v860 = vadd.f32 %v821, %v855
    %v861 = vadd.f32 %v822, %v855
    %v862 = vadd.f32 %v823, %v855
    %v863 = vadd.f32 %v824, %v855
    %v864 = vadd.f32 %v825, %v855
    %v865 = vadd.f32 %v826, %v855
    %v866 = vadd.f32 %v827, %v855
    %v867 = vadd.f32 %v828, %v855
    %v868 = vadd.f32 %v829, %v855
    %v869 = vadd.f32 %v830, %v855
    %v870 = vadd.f32 %v831, %v855
    %v871 = vadd.f32 %v832, %v855
    %v872 = vadd.f32 %v833, %v855
    %v873 = vadd.f32 %v834, %v855
    %v874 = vadd.f32 %v835, %v855
    %v875 = vadd.f32 %v836, %v855
    %v876 = vadd.f32 %v837, %v855
    %v877 = vadd.f32 %v838, %v855
    %v878 = vadd.f32 %v839, %v855
    %v879 = vadd.f32 %v840, %v855
    %v880 = vadd.f32 %v841, %v855
    %v881 = vadd.f32 %v842, %v855
    %v882 = vadd.f32 %v843, %v855
    %v883 = vadd.f32 %v844, %v855
    %v884 = vadd.f32 %v845, %v855
    %v885 = vadd.f32 %v846, %v855
    %v886 = vadd.f32 %v847, %v855
    %v887 = vadd.f32 %v848, %v855
    %v888 = vadd.f32 %v849, %v855
    %v889 = vadd.f32 %v850, %v855
    %v890 = vadd.f32 %v851, %v855
    %v891 = vadd.f32 %v852, %v855
    %v892 = vadd.f32 %v853, %v855
    %v893 = vadd.f32 %v854, %v855
    %v894 = vadd.f32 %v551, %v856
    %v895 = vadd.f32 %v552, %v857
    %v896 = vadd.f32 %v553, %v858
    %v897 = vadd.f32 %v554, %v859
    %v898 = vadd.f32 %v555, %v860
    %v899 = vadd.f32 %v556, %v861
    %v900 = vadd.f32 %v557, %v862
    %v901 = vadd.f32 %v558, %v863
    %v902 = vadd.f32 %v559, %v864
    %v903 = vadd.f32 %v560, %v865
    %v904 = vadd.f32 %v561, %v866
    %v905 = vadd.f32 %v562, %v867
    %v906 = vadd.f32 %v563, %v868
    %v907 = vadd.f32 %v564, %v869
    %v908 = vadd.f32 %v565, %v870
    %v909 = vadd.f32 %v566, %v871
    %v910 = vadd.f32 %v567, %v872
    %v911 = vadd.f32 %v568, %v873
    %v912 = vadd.f32 %v569, %v874
    %v913 = vadd.f32 %v570, %v875
    %v914 = vadd.f32 %v571, %v876
    %v915 = vadd.f32 %v572, %v877
    %v916 = vadd.f32 %v573, %v878
    %v917 = vadd.f32 %v574, %v879
    %v918 = vadd.f32 %v575, %v880
    %v919 = vadd.f32 %v576, %v881
    %v920 = vadd.f32 %v577, %v882
    %v921 = vadd.f32 %v578, %v883
    %v922 = vadd.f32 %v579, %v884
    %v923 = vadd.f32 %v580, %v885
    %v924 = vadd.f32 %v581, %v886
    %v925 = vadd.f32 %v582, %v887
    %v926 = vadd.f32 %v583, %v888
    %v927 = vadd.f32 %v584, %v889
    %v928 = vadd.f32 %v585, %v890
    %v929 = vadd.f32 %v586, %v891
    %v930 = vadd.f32 %v587, %v892
    %v931 = vadd.f32 %v588, %v893
    %v932 = vpack.c.bf16 %v895, %v894
    %v933 = vpack.c.bf16 %v897, %v896
    %v934 = vpack.c.bf16 %v899, %v898
    %v935 = vpack.c.bf16 %v901, %v900
    %v936 = vpack.c.bf16 %v903, %v902
    %v937 = vpack.c.bf16 %v905, %v904
    %v938 = vpack.c.bf16 %v907, %v906
    %v939 = vpack.c.bf16 %v909, %v908
    %v940 = vpack.c.bf16 %v911, %v910
    %v941 = vpack.c.bf16 %v913, %v912
    %v942 = vpack.c.bf16 %v915, %v914
    %v943 = vpack.c.bf16 %v917, %v916
    %v944 = vpack.c.bf16 %v919, %v918
    %v945 = vpack.c.bf16 %v921, %v920
    %v946 = vpack.c.bf16 %v923, %v922
    %v947 = vpack.c.bf16 %v925, %v924
    %v948 = vpack.c.bf16 %v927, %v926
    %v949 = vpack.c.bf16 %v929, %v928
    %v950 = vpack.c.bf16 %v931, %v930
    %s951 = scalar_lea.vmem %s3, 64
    %v952 = vld [vmem:[%s951] sm:$0xf]
    %v953 = vld [vmem:[%s951 + $0x4] sm:$0xf]
    %v954 = vld [vmem:[%s951 + $0x8] sm:$0xf]
    %v955 = vld [vmem:[%s951 + $0xc] sm:$0xf]
    %v956 = vld [vmem:[%s951 + $0x10] sm:$0xf]
    %v957 = vld [vmem:[%s951 + $0x14] sm:$0xf]
    %v958 = vld [vmem:[%s951 + $0x18] sm:$0xf]
    %v959 = vld [vmem:[%s951 + $0x1c] sm:$0xf]
    %v960 = vld [vmem:[%s951 + $0x20] sm:$0xf]
    %v961 = vld [vmem:[%s951 + $0x24] sm:$0xf]
    %v962 = vld [vmem:[%s951 + $0x28] sm:$0xf]
    %v963 = vld [vmem:[%s951 + $0x2c] sm:$0xf]
    %v964 = vld [vmem:[%s951 + $0x30] sm:$0xf]
    %v965 = vld [vmem:[%s951 + $0x34] sm:$0xf]
    %v966 = vld [vmem:[%s951 + $0x38] sm:$0xf]
    %v967 = vld [vmem:[%s951 + $0x3c] sm:$0xf]
    %s968 = scalar_lea.vmem %s4, 4
    %v969 = vld [vmem:[%s968] sm:$0x7]
    %v970 = vperm.slane %v969, 0
    %v987 = vunpack.c.l.b16 %v952
    %v988 = vunpack.c.l.b16 %v953
    %v989 = vunpack.c.l.b16 %v954
    %v990 = vunpack.c.l.b16 %v955
    %v991 = vunpack.c.l.b16 %v956
    %v992 = vunpack.c.l.b16 %v957
    %v993 = vunpack.c.l.b16 %v958
    %v994 = vunpack.c.l.b16 %v959
    %v995 = vunpack.c.l.b16 %v960
    %v996 = vunpack.c.l.b16 %v961
    %v997 = vunpack.c.l.b16 %v962
    %v998 = vunpack.c.l.b16 %v963
    %v999 = vunpack.c.l.b16 %v964
    %v1000 = vunpack.c.l.b16 %v965
    %v1001 = vunpack.c.l.b16 %v966
    %v1002 = vunpack.c.l.b16 %v967
    %v1003 = vpack.c.b16 %v988, %v987
    %v1004 = vpack.c.b16 %v990, %v989
    %v1005 = vpack.c.b16 %v992, %v991
    %v1006 = vpack.c.b16 %v994, %v993
    %v1007 = vpack.c.b16 %v996, %v995
    %v1008 = vpack.c.b16 %v998, %v997
    %v1009 = vpack.c.b16 %v1000, %v999
    %v1010 = vpack.c.b16 %v1002, %v1001
    %1019 = vmatpush.bf16.msra.mxu0 %v1010
    %1020 = vmatpush.bf16.msra.mxu0 %v1009
    %1021 = vmatpush.bf16.msra.mxu0 %v1008
    %1022 = vmatpush.bf16.msra.mxu0 %v1007
    %1023 = vmatpush.bf16.msra.mxu0 %v1006
    %1024 = vmatpush.bf16.msra.mxu0 %v1005
    %1025 = vmatpush.bf16.msra.mxu0 %v1004
    %1026 = vmatpush.bf16.msra.mxu0 %v1003
    %1027 = vmatmul.bf16.gmra.mxu0 %v932
    %v1028 = vpop.f32.mrf.mxu0
    %v1029 = vadd.f32 %v970, %v1028
    %v1030 = vpop.f32.mrf.mxu0
    %v1031 = vadd.f32 %v970, %v1030
    %1032 = vmatmul.bf16.gmra.mxu0 %v933
    %v1033 = vpop.f32.mrf.mxu0
    %v1034 = vadd.f32 %v970, %v1033
    %v1035 = vpop.f32.mrf.mxu0
    %v1036 = vadd.f32 %v970, %v1035
    %1037 = vmatmul.bf16.gmra.mxu0 %v934
    %v1038 = vpop.f32.mrf.mxu0
    %v1039 = vadd.f32 %v970, %v1038
    %v1040 = vpop.f32.mrf.mxu0
    %v1041 = vadd.f32 %v970, %v1040
    %1042 = vmatmul.bf16.gmra.mxu0 %v935
    %v1043 = vpop.f32.mrf.mxu0
    %v1044 = vadd.f32 %v970, %v1043
    %v1045 = vpop.f32.mrf.mxu0
    %v1046 = vadd.f32 %v970, %v1045
    %1047 = vmatmul.bf16.gmra.mxu0 %v936
    %v1048 = vpop.f32.mrf.mxu0
    %v1049 = vadd.f32 %v970, %v1048
    %v1050 = vpop.f32.mrf.mxu0
    %v1051 = vadd.f32 %v970, %v1050
    %1052 = vmatmul.bf16.gmra.mxu0 %v937
    %v1053 = vpop.f32.mrf.mxu0
    %v1054 = vadd.f32 %v970, %v1053
    %v1055 = vpop.f32.mrf.mxu0
    %v1056 = vadd.f32 %v970, %v1055
    %1057 = vmatmul.bf16.gmra.mxu0 %v938
    %v1058 = vpop.f32.mrf.mxu0
    %v1059 = vadd.f32 %v970, %v1058
    %v1060 = vpop.f32.mrf.mxu0
    %v1061 = vadd.f32 %v970, %v1060
    %1062 = vmatmul.bf16.gmra.mxu0 %v939
    %v1063 = vpop.f32.mrf.mxu0
    %v1064 = vadd.f32 %v970, %v1063
    %v1065 = vpop.f32.mrf.mxu0
    %v1066 = vadd.f32 %v970, %v1065
    %1067 = vmatmul.bf16.gmra.mxu0 %v940
    %v1068 = vpop.f32.mrf.mxu0
    %v1069 = vadd.f32 %v970, %v1068
    %v1070 = vpop.f32.mrf.mxu0
    %v1071 = vadd.f32 %v970, %v1070
    %1072 = vmatmul.bf16.gmra.mxu0 %v941
    %v1073 = vpop.f32.mrf.mxu0
    %v1074 = vadd.f32 %v970, %v1073
    %v1075 = vpop.f32.mrf.mxu0
    %v1076 = vadd.f32 %v970, %v1075
    %1077 = vmatmul.bf16.gmra.mxu0 %v942
    %v1078 = vpop.f32.mrf.mxu0
    %v1079 = vadd.f32 %v970, %v1078
    %v1080 = vpop.f32.mrf.mxu0
    %v1081 = vadd.f32 %v970, %v1080
    %1082 = vmatmul.bf16.gmra.mxu0 %v943
    %v1083 = vpop.f32.mrf.mxu0
    %v1084 = vadd.f32 %v970, %v1083
    %v1085 = vpop.f32.mrf.mxu0
    %v1086 = vadd.f32 %v970, %v1085
    %1087 = vmatmul.bf16.gmra.mxu0 %v944
    %v1088 = vpop.f32.mrf.mxu0
    %v1089 = vadd.f32 %v970, %v1088
    %v1090 = vpop.f32.mrf.mxu0
    %v1091 = vadd.f32 %v970, %v1090
    %1092 = vmatmul.bf16.gmra.mxu0 %v945
    %v1093 = vpop.f32.mrf.mxu0
    %v1094 = vadd.f32 %v970, %v1093
    %v1095 = vpop.f32.mrf.mxu0
    %v1096 = vadd.f32 %v970, %v1095
    %1097 = vmatmul.bf16.gmra.mxu0 %v946
    %v1098 = vpop.f32.mrf.mxu0
    %v1099 = vadd.f32 %v970, %v1098
    %v1100 = vpop.f32.mrf.mxu0
    %v1101 = vadd.f32 %v970, %v1100
    %1102 = vmatmul.bf16.gmra.mxu0 %v947
    %v1103 = vpop.f32.mrf.mxu0
    %v1104 = vadd.f32 %v970, %v1103
    %v1105 = vpop.f32.mrf.mxu0
    %v1106 = vadd.f32 %v970, %v1105
    %1107 = vmatmul.bf16.gmra.mxu0 %v948
    %v1108 = vpop.f32.mrf.mxu0
    %v1109 = vadd.f32 %v970, %v1108
    %v1110 = vpop.f32.mrf.mxu0
    %v1111 = vadd.f32 %v970, %v1110
    %1112 = vmatmul.bf16.gmra.mxu0 %v949
    %v1113 = vpop.f32.mrf.mxu0
    %v1114 = vadd.f32 %v970, %v1113
    %v1115 = vpop.f32.mrf.mxu0
    %v1116 = vadd.f32 %v970, %v1115
    %1117 = vmatmul.bf16.gmra.mxu0 %v950
    %v1118 = vpop.f32.mrf.mxu0
    %v1119 = vadd.f32 %v970, %v1118
    %v1120 = vpop.f32.mrf.mxu0
    %v1121 = vadd.f32 %v970, %v1120
    %1122 = vdwg.mxu0
    %v1123 = vmax.f32 %v1029, 0.0
    %v1124 = vmax.f32 %v1031, 0.0
    %v1125 = vmax.f32 %v1034, 0.0
    %v1126 = vmax.f32 %v1036, 0.0
    %v1127 = vmax.f32 %v1039, 0.0
    %v1128 = vmax.f32 %v1041, 0.0
    %v1129 = vmax.f32 %v1044, 0.0
    %v1130 = vmax.f32 %v1046, 0.0
    %v1131 = vmax.f32 %v1049, 0.0
    %v1132 = vmax.f32 %v1051, 0.0
    %v1133 = vmax.f32 %v1054, 0.0
    %v1134 = vmax.f32 %v1056, 0.0
    %v1135 = vmax.f32 %v1059, 0.0
    %v1136 = vmax.f32 %v1061, 0.0
    %v1137 = vmax.f32 %v1064, 0.0
    %v1138 = vmax.f32 %v1066, 0.0
    %v1139 = vmax.f32 %v1069, 0.0
    %v1140 = vmax.f32 %v1071, 0.0
    %v1141 = vmax.f32 %v1074, 0.0
    %v1142 = vmax.f32 %v1076, 0.0
    %v1143 = vmax.f32 %v1079, 0.0
    %v1144 = vmax.f32 %v1081, 0.0
    %v1145 = vmax.f32 %v1084, 0.0
    %v1146 = vmax.f32 %v1086, 0.0
    %v1147 = vmax.f32 %v1089, 0.0
    %v1148 = vmax.f32 %v1091, 0.0
    %v1149 = vmax.f32 %v1094, 0.0
    %v1150 = vmax.f32 %v1096, 0.0
    %v1151 = vmax.f32 %v1099, 0.0
    %v1152 = vmax.f32 %v1101, 0.0
    %v1153 = vmax.f32 %v1104, 0.0
    %v1154 = vmax.f32 %v1106, 0.0
    %v1155 = vmax.f32 %v1109, 0.0
    %v1156 = vmax.f32 %v1111, 0.0
    %v1157 = vmax.f32 %v1114, 0.0
    %v1158 = vmax.f32 %v1116, 0.0
    %v1159 = vmax.f32 %v1119, 0.0
    %v1160 = vmax.f32 %v1121, 0.0
    %v1161 = vperm.slane %v969, 1
    %v1162 = vmul.f32 %v1123, %v1161
    %v1163 = vmul.f32 %v1124, %v1161
    %v1164 = vmul.f32 %v1125, %v1161
    %v1165 = vmul.f32 %v1126, %v1161
    %v1166 = vmul.f32 %v1127, %v1161
    %v1167 = vmul.f32 %v1128, %v1161
    %v1168 = vmul.f32 %v1129, %v1161
    %v1169 = vmul.f32 %v1130, %v1161
    %v1170 = vmul.f32 %v1131, %v1161
    %v1171 = vmul.f32 %v1132, %v1161
    %v1172 = vmul.f32 %v1133, %v1161
    %v1173 = vmul.f32 %v1134, %v1161
    %v1174 = vmul.f32 %v1135, %v1161
    %v1175 = vmul.f32 %v1136, %v1161
    %v1176 = vmul.f32 %v1137, %v1161
    %v1177 = vmul.f32 %v1138, %v1161
    %v1178 = vmul.f32 %v1139, %v1161
    %v1179 = vmul.f32 %v1140, %v1161
    %v1180 = vmul.f32 %v1141, %v1161
    %v1181 = vmul.f32 %v1142, %v1161
    %v1182 = vmul.f32 %v1143, %v1161
    %v1183 = vmul.f32 %v1144, %v1161
    %v1184 = vmul.f32 %v1145, %v1161
    %v1185 = vmul.f32 %v1146, %v1161
    %v1186 = vmul.f32 %v1147, %v1161
    %v1187 = vmul.f32 %v1148, %v1161
    %v1188 = vmul.f32 %v1149, %v1161
    %v1189 = vmul.f32 %v1150, %v1161
    %v1190 = vmul.f32 %v1151, %v1161
    %v1191 = vmul.f32 %v1152, %v1161
    %v1192 = vmul.f32 %v1153, %v1161
    %v1193 = vmul.f32 %v1154, %v1161
    %v1194 = vmul.f32 %v1155, %v1161
    %v1195 = vmul.f32 %v1156, %v1161
    %v1196 = vmul.f32 %v1157, %v1161
    %v1197 = vmul.f32 %v1158, %v1161
    %v1198 = vmul.f32 %v1159, %v1161
    %v1199 = vmul.f32 %v1160, %v1161
    %v1200 = vperm.slane %v969, 2
    %v1201 = vadd.f32 %v1162, %v1200
    %v1202 = vadd.f32 %v1163, %v1200
    %v1203 = vadd.f32 %v1164, %v1200
    %v1204 = vadd.f32 %v1165, %v1200
    %v1205 = vadd.f32 %v1166, %v1200
    %v1206 = vadd.f32 %v1167, %v1200
    %v1207 = vadd.f32 %v1168, %v1200
    %v1208 = vadd.f32 %v1169, %v1200
    %v1209 = vadd.f32 %v1170, %v1200
    %v1210 = vadd.f32 %v1171, %v1200
    %v1211 = vadd.f32 %v1172, %v1200
    %v1212 = vadd.f32 %v1173, %v1200
    %v1213 = vadd.f32 %v1174, %v1200
    %v1214 = vadd.f32 %v1175, %v1200
    %v1215 = vadd.f32 %v1176, %v1200
    %v1216 = vadd.f32 %v1177, %v1200
    %v1217 = vadd.f32 %v1178, %v1200
    %v1218 = vadd.f32 %v1179, %v1200
    %v1219 = vadd.f32 %v1180, %v1200
    %v1220 = vadd.f32 %v1181, %v1200
    %v1221 = vadd.f32 %v1182, %v1200
    %v1222 = vadd.f32 %v1183, %v1200
    %v1223 = vadd.f32 %v1184, %v1200
    %v1224 = vadd.f32 %v1185, %v1200
    %v1225 = vadd.f32 %v1186, %v1200
    %v1226 = vadd.f32 %v1187, %v1200
    %v1227 = vadd.f32 %v1188, %v1200
    %v1228 = vadd.f32 %v1189, %v1200
    %v1229 = vadd.f32 %v1190, %v1200
    %v1230 = vadd.f32 %v1191, %v1200
    %v1231 = vadd.f32 %v1192, %v1200
    %v1232 = vadd.f32 %v1193, %v1200
    %v1233 = vadd.f32 %v1194, %v1200
    %v1234 = vadd.f32 %v1195, %v1200
    %v1235 = vadd.f32 %v1196, %v1200
    %v1236 = vadd.f32 %v1197, %v1200
    %v1237 = vadd.f32 %v1198, %v1200
    %v1238 = vadd.f32 %v1199, %v1200
    %v1239 = vadd.f32 %v894, %v1201
    %v1240 = vadd.f32 %v895, %v1202
    %v1241 = vadd.f32 %v896, %v1203
    %v1242 = vadd.f32 %v897, %v1204
    %v1243 = vadd.f32 %v898, %v1205
    %v1244 = vadd.f32 %v899, %v1206
    %v1245 = vadd.f32 %v900, %v1207
    %v1246 = vadd.f32 %v901, %v1208
    %v1247 = vadd.f32 %v902, %v1209
    %v1248 = vadd.f32 %v903, %v1210
    %v1249 = vadd.f32 %v904, %v1211
    %v1250 = vadd.f32 %v905, %v1212
    %v1251 = vadd.f32 %v906, %v1213
    %v1252 = vadd.f32 %v907, %v1214
    %v1253 = vadd.f32 %v908, %v1215
    %v1254 = vadd.f32 %v909, %v1216
    %v1255 = vadd.f32 %v910, %v1217
    %v1256 = vadd.f32 %v911, %v1218
    %v1257 = vadd.f32 %v912, %v1219
    %v1258 = vadd.f32 %v913, %v1220
    %v1259 = vadd.f32 %v914, %v1221
    %v1260 = vadd.f32 %v915, %v1222
    %v1261 = vadd.f32 %v916, %v1223
    %v1262 = vadd.f32 %v917, %v1224
    %v1263 = vadd.f32 %v918, %v1225
    %v1264 = vadd.f32 %v919, %v1226
    %v1265 = vadd.f32 %v920, %v1227
    %v1266 = vadd.f32 %v921, %v1228
    %v1267 = vadd.f32 %v922, %v1229
    %v1268 = vadd.f32 %v923, %v1230
    %v1269 = vadd.f32 %v924, %v1231
    %v1270 = vadd.f32 %v925, %v1232
    %v1271 = vadd.f32 %v926, %v1233
    %v1272 = vadd.f32 %v927, %v1234
    %v1273 = vadd.f32 %v928, %v1235
    %v1274 = vadd.f32 %v929, %v1236
    %v1275 = vadd.f32 %v930, %v1237
    %v1276 = vadd.f32 %v931, %v1238
    %v1277 = vpack.c.bf16 %v1240, %v1239
    %v1278 = vpack.c.bf16 %v1242, %v1241
    %v1279 = vpack.c.bf16 %v1244, %v1243
    %v1280 = vpack.c.bf16 %v1246, %v1245
    %v1281 = vpack.c.bf16 %v1248, %v1247
    %v1282 = vpack.c.bf16 %v1250, %v1249
    %v1283 = vpack.c.bf16 %v1252, %v1251
    %v1284 = vpack.c.bf16 %v1254, %v1253
    %v1285 = vpack.c.bf16 %v1256, %v1255
    %v1286 = vpack.c.bf16 %v1258, %v1257
    %v1287 = vpack.c.bf16 %v1260, %v1259
    %v1288 = vpack.c.bf16 %v1262, %v1261
    %v1289 = vpack.c.bf16 %v1264, %v1263
    %v1290 = vpack.c.bf16 %v1266, %v1265
    %v1291 = vpack.c.bf16 %v1268, %v1267
    %v1292 = vpack.c.bf16 %v1270, %v1269
    %v1293 = vpack.c.bf16 %v1272, %v1271
    %v1294 = vpack.c.bf16 %v1274, %v1273
    %v1295 = vpack.c.bf16 %v1276, %v1275
    %s1296 = scalar_lea.vmem %s3, 128
    %v1297 = vld [vmem:[%s1296] sm:$0xf]
    %v1298 = vld [vmem:[%s1296 + $0x4] sm:$0xf]
    %v1299 = vld [vmem:[%s1296 + $0x8] sm:$0xf]
    %v1300 = vld [vmem:[%s1296 + $0xc] sm:$0xf]
    %v1301 = vld [vmem:[%s1296 + $0x10] sm:$0xf]
    %v1302 = vld [vmem:[%s1296 + $0x14] sm:$0xf]
    %v1303 = vld [vmem:[%s1296 + $0x18] sm:$0xf]
    %v1304 = vld [vmem:[%s1296 + $0x1c] sm:$0xf]
    %v1305 = vld [vmem:[%s1296 + $0x20] sm:$0xf]
    %v1306 = vld [vmem:[%s1296 + $0x24] sm:$0xf]
    %v1307 = vld [vmem:[%s1296 + $0x28] sm:$0xf]
    %v1308 = vld [vmem:[%s1296 + $0x2c] sm:$0xf]
    %v1309 = vld [vmem:[%s1296 + $0x30] sm:$0xf]
    %v1310 = vld [vmem:[%s1296 + $0x34] sm:$0xf]
    %v1311 = vld [vmem:[%s1296 + $0x38] sm:$0xf]
    %v1312 = vld [vmem:[%s1296 + $0x3c] sm:$0xf]
    %s1313 = scalar_lea.vmem %s4, 8
    %v1314 = vld [vmem:[%s1313] sm:$0x7]
    %v1315 = vperm.slane %v1314, 0
    %v1332 = vunpack.c.l.b16 %v1297
    %v1333 = vunpack.c.l.b16 %v1298
    %v1334 = vunpack.c.l.b16 %v1299
    %v1335 = vunpack.c.l.b16 %v1300
    %v1336 = vunpack.c.l.b16 %v1301
    %v1337 = vunpack.c.l.b16 %v1302
    %v1338 = vunpack.c.l.b16 %v1303
    %v1339 = vunpack.c.l.b16 %v1304
    %v1340 = vunpack.c.l.b16 %v1305
    %v1341 = vunpack.c.l.b16 %v1306
    %v1342 = vunpack.c.l.b16 %v1307
    %v1343 = vunpack.c.l.b16 %v1308
    %v1344 = vunpack.c.l.b16 %v1309
    %v1345 = vunpack.c.l.b16 %v1310
    %v1346 = vunpack.c.l.b16 %v1311
    %v1347 = vunpack.c.l.b16 %v1312
    %v1348 = vpack.c.b16 %v1333, %v1332
    %v1349 = vpack.c.b16 %v1335, %v1334
    %v1350 = vpack.c.b16 %v1337, %v1336
    %v1351 = vpack.c.b16 %v1339, %v1338
    %v1352 = vpack.c.b16 %v1341, %v1340
    %v1353 = vpack.c.b16 %v1343, %v1342
    %v1354 = vpack.c.b16 %v1345, %v1344
    %v1355 = vpack.c.b16 %v1347, %v1346
    %1364 = vmatpush.bf16.msra.mxu0 %v1355
    %1365 = vmatpush.bf16.msra.mxu0 %v1354
    %1366 = vmatpush.bf16.msra.mxu0 %v1353
    %1367 = vmatpush.bf16.msra.mxu0 %v1352
    %1368 = vmatpush.bf16.msra.mxu0 %v1351
    %1369 = vmatpush.bf16.msra.mxu0 %v1350
    %1370 = vmatpush.bf16.msra.mxu0 %v1349
    %1371 = vmatpush.bf16.msra.mxu0 %v1348
    %1372 = vmatmul.bf16.gmra.mxu0 %v1277
    %v1373 = vpop.f32.mrf.mxu0
    %v1374 = vadd.f32 %v1315, %v1373
    %v1375 = vpop.f32.mrf.mxu0
    %v1376 = vadd.f32 %v1315, %v1375
    %1377 = vmatmul.bf16.gmra.mxu0 %v1278
    %v1378 = vpop.f32.mrf.mxu0
    %v1379 = vadd.f32 %v1315, %v1378
    %v1380 = vpop.f32.mrf.mxu0
    %v1381 = vadd.f32 %v1315, %v1380
    %1382 = vmatmul.bf16.gmra.mxu0 %v1279
    %v1383 = vpop.f32.mrf.mxu0
    %v1384 = vadd.f32 %v1315, %v1383
    %v1385 = vpop.f32.mrf.mxu0
    %v1386 = vadd.f32 %v1315, %v1385
    %1387 = vmatmul.bf16.gmra.mxu0 %v1280
    %v1388 = vpop.f32.mrf.mxu0
    %v1389 = vadd.f32 %v1315, %v1388
    %v1390 = vpop.f32.mrf.mxu0
    %v1391 = vadd.f32 %v1315, %v1390
    %1392 = vmatmul.bf16.gmra.mxu0 %v1281
    %v1393 = vpop.f32.mrf.mxu0
    %v1394 = vadd.f32 %v1315, %v1393
    %v1395 = vpop.f32.mrf.mxu0
    %v1396 = vadd.f32 %v1315, %v1395
    %1397 = vmatmul.bf16.gmra.mxu0 %v1282
    %v1398 = vpop.f32.mrf.mxu0
    %v1399 = vadd.f32 %v1315, %v1398
    %v1400 = vpop.f32.mrf.mxu0
    %v1401 = vadd.f32 %v1315, %v1400
    %1402 = vmatmul.bf16.gmra.mxu0 %v1283
    %v1403 = vpop.f32.mrf.mxu0
    %v1404 = vadd.f32 %v1315, %v1403
    %v1405 = vpop.f32.mrf.mxu0
    %v1406 = vadd.f32 %v1315, %v1405
    %1407 = vmatmul.bf16.gmra.mxu0 %v1284
    %v1408 = vpop.f32.mrf.mxu0
    %v1409 = vadd.f32 %v1315, %v1408
    %v1410 = vpop.f32.mrf.mxu0
    %v1411 = vadd.f32 %v1315, %v1410
    %1412 = vmatmul.bf16.gmra.mxu0 %v1285
    %v1413 = vpop.f32.mrf.mxu0
    %v1414 = vadd.f32 %v1315, %v1413
    %v1415 = vpop.f32.mrf.mxu0
    %v1416 = vadd.f32 %v1315, %v1415
    %1417 = vmatmul.bf16.gmra.mxu0 %v1286
    %v1418 = vpop.f32.mrf.mxu0
    %v1419 = vadd.f32 %v1315, %v1418
    %v1420 = vpop.f32.mrf.mxu0
    %v1421 = vadd.f32 %v1315, %v1420
    %1422 = vmatmul.bf16.gmra.mxu0 %v1287
    %v1423 = vpop.f32.mrf.mxu0
    %v1424 = vadd.f32 %v1315, %v1423
    %v1425 = vpop.f32.mrf.mxu0
    %v1426 = vadd.f32 %v1315, %v1425
    %1427 = vmatmul.bf16.gmra.mxu0 %v1288
    %v1428 = vpop.f32.mrf.mxu0
    %v1429 = vadd.f32 %v1315, %v1428
    %v1430 = vpop.f32.mrf.mxu0
    %v1431 = vadd.f32 %v1315, %v1430
    %1432 = vmatmul.bf16.gmra.mxu0 %v1289
    %v1433 = vpop.f32.mrf.mxu0
    %v1434 = vadd.f32 %v1315, %v1433
    %v1435 = vpop.f32.mrf.mxu0
    %v1436 = vadd.f32 %v1315, %v1435
    %1437 = vmatmul.bf16.gmra.mxu0 %v1290
    %v1438 = vpop.f32.mrf.mxu0
    %v1439 = vadd.f32 %v1315, %v1438
    %v1440 = vpop.f32.mrf.mxu0
    %v1441 = vadd.f32 %v1315, %v1440
    %1442 = vmatmul.bf16.gmra.mxu0 %v1291
    %v1443 = vpop.f32.mrf.mxu0
    %v1444 = vadd.f32 %v1315, %v1443
    %v1445 = vpop.f32.mrf.mxu0
    %v1446 = vadd.f32 %v1315, %v1445
    %1447 = vmatmul.bf16.gmra.mxu0 %v1292
    %v1448 = vpop.f32.mrf.mxu0
    %v1449 = vadd.f32 %v1315, %v1448
    %v1450 = vpop.f32.mrf.mxu0
    %v1451 = vadd.f32 %v1315, %v1450
    %1452 = vmatmul.bf16.gmra.mxu0 %v1293
    %v1453 = vpop.f32.mrf.mxu0
    %v1454 = vadd.f32 %v1315, %v1453
    %v1455 = vpop.f32.mrf.mxu0
    %v1456 = vadd.f32 %v1315, %v1455
    %1457 = vmatmul.bf16.gmra.mxu0 %v1294
    %v1458 = vpop.f32.mrf.mxu0
    %v1459 = vadd.f32 %v1315, %v1458
    %v1460 = vpop.f32.mrf.mxu0
    %v1461 = vadd.f32 %v1315, %v1460
    %1462 = vmatmul.bf16.gmra.mxu0 %v1295
    %v1463 = vpop.f32.mrf.mxu0
    %v1464 = vadd.f32 %v1315, %v1463
    %v1465 = vpop.f32.mrf.mxu0
    %v1466 = vadd.f32 %v1315, %v1465
    %1467 = vdwg.mxu0
    %v1468 = vmax.f32 %v1374, 0.0
    %v1469 = vmax.f32 %v1376, 0.0
    %v1470 = vmax.f32 %v1379, 0.0
    %v1471 = vmax.f32 %v1381, 0.0
    %v1472 = vmax.f32 %v1384, 0.0
    %v1473 = vmax.f32 %v1386, 0.0
    %v1474 = vmax.f32 %v1389, 0.0
    %v1475 = vmax.f32 %v1391, 0.0
    %v1476 = vmax.f32 %v1394, 0.0
    %v1477 = vmax.f32 %v1396, 0.0
    %v1478 = vmax.f32 %v1399, 0.0
    %v1479 = vmax.f32 %v1401, 0.0
    %v1480 = vmax.f32 %v1404, 0.0
    %v1481 = vmax.f32 %v1406, 0.0
    %v1482 = vmax.f32 %v1409, 0.0
    %v1483 = vmax.f32 %v1411, 0.0
    %v1484 = vmax.f32 %v1414, 0.0
    %v1485 = vmax.f32 %v1416, 0.0
    %v1486 = vmax.f32 %v1419, 0.0
    %v1487 = vmax.f32 %v1421, 0.0
    %v1488 = vmax.f32 %v1424, 0.0
    %v1489 = vmax.f32 %v1426, 0.0
    %v1490 = vmax.f32 %v1429, 0.0
    %v1491 = vmax.f32 %v1431, 0.0
    %v1492 = vmax.f32 %v1434, 0.0
    %v1493 = vmax.f32 %v1436, 0.0
    %v1494 = vmax.f32 %v1439, 0.0
    %v1495 = vmax.f32 %v1441, 0.0
    %v1496 = vmax.f32 %v1444, 0.0
    %v1497 = vmax.f32 %v1446, 0.0
    %v1498 = vmax.f32 %v1449, 0.0
    %v1499 = vmax.f32 %v1451, 0.0
    %v1500 = vmax.f32 %v1454, 0.0
    %v1501 = vmax.f32 %v1456, 0.0
    %v1502 = vmax.f32 %v1459, 0.0
    %v1503 = vmax.f32 %v1461, 0.0
    %v1504 = vmax.f32 %v1464, 0.0
    %v1505 = vmax.f32 %v1466, 0.0
    %v1506 = vperm.slane %v1314, 1
    %v1507 = vmul.f32 %v1468, %v1506
    %v1508 = vmul.f32 %v1469, %v1506
    %v1509 = vmul.f32 %v1470, %v1506
    %v1510 = vmul.f32 %v1471, %v1506
    %v1511 = vmul.f32 %v1472, %v1506
    %v1512 = vmul.f32 %v1473, %v1506
    %v1513 = vmul.f32 %v1474, %v1506
    %v1514 = vmul.f32 %v1475, %v1506
    %v1515 = vmul.f32 %v1476, %v1506
    %v1516 = vmul.f32 %v1477, %v1506
    %v1517 = vmul.f32 %v1478, %v1506
    %v1518 = vmul.f32 %v1479, %v1506
    %v1519 = vmul.f32 %v1480, %v1506
    %v1520 = vmul.f32 %v1481, %v1506
    %v1521 = vmul.f32 %v1482, %v1506
    %v1522 = vmul.f32 %v1483, %v1506
    %v1523 = vmul.f32 %v1484, %v1506
    %v1524 = vmul.f32 %v1485, %v1506
    %v1525 = vmul.f32 %v1486, %v1506
    %v1526 = vmul.f32 %v1487, %v1506
    %v1527 = vmul.f32 %v1488, %v1506
    %v1528 = vmul.f32 %v1489, %v1506
    %v1529 = vmul.f32 %v1490, %v1506
    %v1530 = vmul.f32 %v1491, %v1506
    %v1531 = vmul.f32 %v1492, %v1506
    %v1532 = vmul.f32 %v1493, %v1506
    %v1533 = vmul.f32 %v1494, %v1506
    %v1534 = vmul.f32 %v1495, %v1506
    %v1535 = vmul.f32 %v1496, %v1506
    %v1536 = vmul.f32 %v1497, %v1506
    %v1537 = vmul.f32 %v1498, %v1506
    %v1538 = vmul.f32 %v1499, %v1506
    %v1539 = vmul.f32 %v1500, %v1506
    %v1540 = vmul.f32 %v1501, %v1506
    %v1541 = vmul.f32 %v1502, %v1506
    %v1542 = vmul.f32 %v1503, %v1506
    %v1543 = vmul.f32 %v1504, %v1506
    %v1544 = vmul.f32 %v1505, %v1506
    %v1545 = vperm.slane %v1314, 2
    %v1546 = vadd.f32 %v1507, %v1545
    %v1547 = vadd.f32 %v1508, %v1545
    %v1548 = vadd.f32 %v1509, %v1545
    %v1549 = vadd.f32 %v1510, %v1545
    %v1550 = vadd.f32 %v1511, %v1545
    %v1551 = vadd.f32 %v1512, %v1545
    %v1552 = vadd.f32 %v1513, %v1545
    %v1553 = vadd.f32 %v1514, %v1545
    %v1554 = vadd.f32 %v1515, %v1545
    %v1555 = vadd.f32 %v1516, %v1545
    %v1556 = vadd.f32 %v1517, %v1545
    %v1557 = vadd.f32 %v1518, %v1545
    %v1558 = vadd.f32 %v1519, %v1545
    %v1559 = vadd.f32 %v1520, %v1545
    %v1560 = vadd.f32 %v1521, %v1545
    %v1561 = vadd.f32 %v1522, %v1545
    %v1562 = vadd.f32 %v1523, %v1545
    %v1563 = vadd.f32 %v1524, %v1545
    %v1564 = vadd.f32 %v1525, %v1545
    %v1565 = vadd.f32 %v1526, %v1545
    %v1566 = vadd.f32 %v1527, %v1545
    %v1567 = vadd.f32 %v1528, %v1545
    %v1568 = vadd.f32 %v1529, %v1545
    %v1569 = vadd.f32 %v1530, %v1545
    %v1570 = vadd.f32 %v1531, %v1545
    %v1571 = vadd.f32 %v1532, %v1545
    %v1572 = vadd.f32 %v1533, %v1545
    %v1573 = vadd.f32 %v1534, %v1545
    %v1574 = vadd.f32 %v1535, %v1545
    %v1575 = vadd.f32 %v1536, %v1545
    %v1576 = vadd.f32 %v1537, %v1545
    %v1577 = vadd.f32 %v1538, %v1545
    %v1578 = vadd.f32 %v1539, %v1545
    %v1579 = vadd.f32 %v1540, %v1545
    %v1580 = vadd.f32 %v1541, %v1545
    %v1581 = vadd.f32 %v1542, %v1545
    %v1582 = vadd.f32 %v1543, %v1545
    %v1583 = vadd.f32 %v1544, %v1545
    %v1584 = vadd.f32 %v1239, %v1546
    %v1585 = vadd.f32 %v1240, %v1547
    %v1586 = vadd.f32 %v1241, %v1548
    %v1587 = vadd.f32 %v1242, %v1549
    %v1588 = vadd.f32 %v1243, %v1550
    %v1589 = vadd.f32 %v1244, %v1551
    %v1590 = vadd.f32 %v1245, %v1552
    %v1591 = vadd.f32 %v1246, %v1553
    %v1592 = vadd.f32 %v1247, %v1554
    %v1593 = vadd.f32 %v1248, %v1555
    %v1594 = vadd.f32 %v1249, %v1556
    %v1595 = vadd.f32 %v1250, %v1557
    %v1596 = vadd.f32 %v1251, %v1558
    %v1597 = vadd.f32 %v1252, %v1559
    %v1598 = vadd.f32 %v1253, %v1560
    %v1599 = vadd.f32 %v1254, %v1561
    %v1600 = vadd.f32 %v1255, %v1562
    %v1601 = vadd.f32 %v1256, %v1563
    %v1602 = vadd.f32 %v1257, %v1564
    %v1603 = vadd.f32 %v1258, %v1565
    %v1604 = vadd.f32 %v1259, %v1566
    %v1605 = vadd.f32 %v1260, %v1567
    %v1606 = vadd.f32 %v1261, %v1568
    %v1607 = vadd.f32 %v1262, %v1569
    %v1608 = vadd.f32 %v1263, %v1570
    %v1609 = vadd.f32 %v1264, %v1571
    %v1610 = vadd.f32 %v1265, %v1572
    %v1611 = vadd.f32 %v1266, %v1573
    %v1612 = vadd.f32 %v1267, %v1574
    %v1613 = vadd.f32 %v1268, %v1575
    %v1614 = vadd.f32 %v1269, %v1576
    %v1615 = vadd.f32 %v1270, %v1577
    %v1616 = vadd.f32 %v1271, %v1578
    %v1617 = vadd.f32 %v1272, %v1579
    %v1618 = vadd.f32 %v1273, %v1580
    %v1619 = vadd.f32 %v1274, %v1581
    %v1620 = vadd.f32 %v1275, %v1582
    %v1621 = vadd.f32 %v1276, %v1583
    %v1622 = vpack.c.bf16 %v1585, %v1584
    %v1623 = vpack.c.bf16 %v1587, %v1586
    %v1624 = vpack.c.bf16 %v1589, %v1588
    %v1625 = vpack.c.bf16 %v1591, %v1590
    %v1626 = vpack.c.bf16 %v1593, %v1592
    %v1627 = vpack.c.bf16 %v1595, %v1594
    %v1628 = vpack.c.bf16 %v1597, %v1596
    %v1629 = vpack.c.bf16 %v1599, %v1598
    %v1630 = vpack.c.bf16 %v1601, %v1600
    %v1631 = vpack.c.bf16 %v1603, %v1602
    %v1632 = vpack.c.bf16 %v1605, %v1604
    %v1633 = vpack.c.bf16 %v1607, %v1606
    %v1634 = vpack.c.bf16 %v1609, %v1608
    %v1635 = vpack.c.bf16 %v1611, %v1610
    %v1636 = vpack.c.bf16 %v1613, %v1612
    %v1637 = vpack.c.bf16 %v1615, %v1614
    %v1638 = vpack.c.bf16 %v1617, %v1616
    %v1639 = vpack.c.bf16 %v1619, %v1618
    %v1640 = vpack.c.bf16 %v1621, %v1620
    %s1641 = scalar_lea.vmem %s3, 192
    %v1642 = vld [vmem:[%s1641] sm:$0xf]
    %v1643 = vld [vmem:[%s1641 + $0x4] sm:$0xf]
    %v1644 = vld [vmem:[%s1641 + $0x8] sm:$0xf]
    %v1645 = vld [vmem:[%s1641 + $0xc] sm:$0xf]
    %v1646 = vld [vmem:[%s1641 + $0x10] sm:$0xf]
    %v1647 = vld [vmem:[%s1641 + $0x14] sm:$0xf]
    %v1648 = vld [vmem:[%s1641 + $0x18] sm:$0xf]
    %v1649 = vld [vmem:[%s1641 + $0x1c] sm:$0xf]
    %v1650 = vld [vmem:[%s1641 + $0x20] sm:$0xf]
    %v1651 = vld [vmem:[%s1641 + $0x24] sm:$0xf]
    %v1652 = vld [vmem:[%s1641 + $0x28] sm:$0xf]
    %v1653 = vld [vmem:[%s1641 + $0x2c] sm:$0xf]
    %v1654 = vld [vmem:[%s1641 + $0x30] sm:$0xf]
    %v1655 = vld [vmem:[%s1641 + $0x34] sm:$0xf]
    %v1656 = vld [vmem:[%s1641 + $0x38] sm:$0xf]
    %v1657 = vld [vmem:[%s1641 + $0x3c] sm:$0xf]
    %s1658 = scalar_lea.vmem %s4, 12
    %v1659 = vld [vmem:[%s1658] sm:$0x7]
    %v1660 = vperm.slane %v1659, 0
    %v1677 = vunpack.c.l.b16 %v1642
    %v1678 = vunpack.c.l.b16 %v1643
    %v1679 = vunpack.c.l.b16 %v1644
    %v1680 = vunpack.c.l.b16 %v1645
    %v1681 = vunpack.c.l.b16 %v1646
    %v1682 = vunpack.c.l.b16 %v1647
    %v1683 = vunpack.c.l.b16 %v1648
    %v1684 = vunpack.c.l.b16 %v1649
    %v1685 = vunpack.c.l.b16 %v1650
    %v1686 = vunpack.c.l.b16 %v1651
    %v1687 = vunpack.c.l.b16 %v1652
    %v1688 = vunpack.c.l.b16 %v1653
    %v1689 = vunpack.c.l.b16 %v1654
    %v1690 = vunpack.c.l.b16 %v1655
    %v1691 = vunpack.c.l.b16 %v1656
    %v1692 = vunpack.c.l.b16 %v1657
    %v1693 = vpack.c.b16 %v1678, %v1677
    %v1694 = vpack.c.b16 %v1680, %v1679
    %v1695 = vpack.c.b16 %v1682, %v1681
    %v1696 = vpack.c.b16 %v1684, %v1683
    %v1697 = vpack.c.b16 %v1686, %v1685
    %v1698 = vpack.c.b16 %v1688, %v1687
    %v1699 = vpack.c.b16 %v1690, %v1689
    %v1700 = vpack.c.b16 %v1692, %v1691
    %1709 = vmatpush.bf16.msra.mxu0 %v1700
    %1710 = vmatpush.bf16.msra.mxu0 %v1699
    %1711 = vmatpush.bf16.msra.mxu0 %v1698
    %1712 = vmatpush.bf16.msra.mxu0 %v1697
    %1713 = vmatpush.bf16.msra.mxu0 %v1696
    %1714 = vmatpush.bf16.msra.mxu0 %v1695
    %1715 = vmatpush.bf16.msra.mxu0 %v1694
    %1716 = vmatpush.bf16.msra.mxu0 %v1693
    %1717 = vmatmul.bf16.gmra.mxu0 %v1622
    %v1718 = vpop.f32.mrf.mxu0
    %v1719 = vadd.f32 %v1660, %v1718
    %v1720 = vpop.f32.mrf.mxu0
    %v1721 = vadd.f32 %v1660, %v1720
    %1722 = vmatmul.bf16.gmra.mxu0 %v1623
    %v1723 = vpop.f32.mrf.mxu0
    %v1724 = vadd.f32 %v1660, %v1723
    %v1725 = vpop.f32.mrf.mxu0
    %v1726 = vadd.f32 %v1660, %v1725
    %1727 = vmatmul.bf16.gmra.mxu0 %v1624
    %v1728 = vpop.f32.mrf.mxu0
    %v1729 = vadd.f32 %v1660, %v1728
    %v1730 = vpop.f32.mrf.mxu0
    %v1731 = vadd.f32 %v1660, %v1730
    %1732 = vmatmul.bf16.gmra.mxu0 %v1625
    %v1733 = vpop.f32.mrf.mxu0
    %v1734 = vadd.f32 %v1660, %v1733
    %v1735 = vpop.f32.mrf.mxu0
    %v1736 = vadd.f32 %v1660, %v1735
    %1737 = vmatmul.bf16.gmra.mxu0 %v1626
    %v1738 = vpop.f32.mrf.mxu0
    %v1739 = vadd.f32 %v1660, %v1738
    %v1740 = vpop.f32.mrf.mxu0
    %v1741 = vadd.f32 %v1660, %v1740
    %1742 = vmatmul.bf16.gmra.mxu0 %v1627
    %v1743 = vpop.f32.mrf.mxu0
    %v1744 = vadd.f32 %v1660, %v1743
    %v1745 = vpop.f32.mrf.mxu0
    %v1746 = vadd.f32 %v1660, %v1745
    %1747 = vmatmul.bf16.gmra.mxu0 %v1628
    %v1748 = vpop.f32.mrf.mxu0
    %v1749 = vadd.f32 %v1660, %v1748
    %v1750 = vpop.f32.mrf.mxu0
    %v1751 = vadd.f32 %v1660, %v1750
    %1752 = vmatmul.bf16.gmra.mxu0 %v1629
    %v1753 = vpop.f32.mrf.mxu0
    %v1754 = vadd.f32 %v1660, %v1753
    %v1755 = vpop.f32.mrf.mxu0
    %v1756 = vadd.f32 %v1660, %v1755
    %1757 = vmatmul.bf16.gmra.mxu0 %v1630
    %v1758 = vpop.f32.mrf.mxu0
    %v1759 = vadd.f32 %v1660, %v1758
    %v1760 = vpop.f32.mrf.mxu0
    %v1761 = vadd.f32 %v1660, %v1760
    %1762 = vmatmul.bf16.gmra.mxu0 %v1631
    %v1763 = vpop.f32.mrf.mxu0
    %v1764 = vadd.f32 %v1660, %v1763
    %v1765 = vpop.f32.mrf.mxu0
    %v1766 = vadd.f32 %v1660, %v1765
    %1767 = vmatmul.bf16.gmra.mxu0 %v1632
    %v1768 = vpop.f32.mrf.mxu0
    %v1769 = vadd.f32 %v1660, %v1768
    %v1770 = vpop.f32.mrf.mxu0
    %v1771 = vadd.f32 %v1660, %v1770
    %1772 = vmatmul.bf16.gmra.mxu0 %v1633
    %v1773 = vpop.f32.mrf.mxu0
    %v1774 = vadd.f32 %v1660, %v1773
    %v1775 = vpop.f32.mrf.mxu0
    %v1776 = vadd.f32 %v1660, %v1775
    %1777 = vmatmul.bf16.gmra.mxu0 %v1634
    %v1778 = vpop.f32.mrf.mxu0
    %v1779 = vadd.f32 %v1660, %v1778
    %v1780 = vpop.f32.mrf.mxu0
    %v1781 = vadd.f32 %v1660, %v1780
    %1782 = vmatmul.bf16.gmra.mxu0 %v1635
    %v1783 = vpop.f32.mrf.mxu0
    %v1784 = vadd.f32 %v1660, %v1783
    %v1785 = vpop.f32.mrf.mxu0
    %v1786 = vadd.f32 %v1660, %v1785
    %1787 = vmatmul.bf16.gmra.mxu0 %v1636
    %v1788 = vpop.f32.mrf.mxu0
    %v1789 = vadd.f32 %v1660, %v1788
    %v1790 = vpop.f32.mrf.mxu0
    %v1791 = vadd.f32 %v1660, %v1790
    %1792 = vmatmul.bf16.gmra.mxu0 %v1637
    %v1793 = vpop.f32.mrf.mxu0
    %v1794 = vadd.f32 %v1660, %v1793
    %v1795 = vpop.f32.mrf.mxu0
    %v1796 = vadd.f32 %v1660, %v1795
    %1797 = vmatmul.bf16.gmra.mxu0 %v1638
    %v1798 = vpop.f32.mrf.mxu0
    %v1799 = vadd.f32 %v1660, %v1798
    %v1800 = vpop.f32.mrf.mxu0
    %v1801 = vadd.f32 %v1660, %v1800
    %1802 = vmatmul.bf16.gmra.mxu0 %v1639
    %v1803 = vpop.f32.mrf.mxu0
    %v1804 = vadd.f32 %v1660, %v1803
    %v1805 = vpop.f32.mrf.mxu0
    %v1806 = vadd.f32 %v1660, %v1805
    %1807 = vmatmul.bf16.gmra.mxu0 %v1640
    %v1808 = vpop.f32.mrf.mxu0
    %v1809 = vadd.f32 %v1660, %v1808
    %v1810 = vpop.f32.mrf.mxu0
    %v1811 = vadd.f32 %v1660, %v1810
    %1812 = vdwg.mxu0
    %v1813 = vmax.f32 %v1719, 0.0
    %v1814 = vmax.f32 %v1721, 0.0
    %v1815 = vmax.f32 %v1724, 0.0
    %v1816 = vmax.f32 %v1726, 0.0
    %v1817 = vmax.f32 %v1729, 0.0
    %v1818 = vmax.f32 %v1731, 0.0
    %v1819 = vmax.f32 %v1734, 0.0
    %v1820 = vmax.f32 %v1736, 0.0
    %v1821 = vmax.f32 %v1739, 0.0
    %v1822 = vmax.f32 %v1741, 0.0
    %v1823 = vmax.f32 %v1744, 0.0
    %v1824 = vmax.f32 %v1746, 0.0
    %v1825 = vmax.f32 %v1749, 0.0
    %v1826 = vmax.f32 %v1751, 0.0
    %v1827 = vmax.f32 %v1754, 0.0
    %v1828 = vmax.f32 %v1756, 0.0
    %v1829 = vmax.f32 %v1759, 0.0
    %v1830 = vmax.f32 %v1761, 0.0
    %v1831 = vmax.f32 %v1764, 0.0
    %v1832 = vmax.f32 %v1766, 0.0
    %v1833 = vmax.f32 %v1769, 0.0
    %v1834 = vmax.f32 %v1771, 0.0
    %v1835 = vmax.f32 %v1774, 0.0
    %v1836 = vmax.f32 %v1776, 0.0
    %v1837 = vmax.f32 %v1779, 0.0
    %v1838 = vmax.f32 %v1781, 0.0
    %v1839 = vmax.f32 %v1784, 0.0
    %v1840 = vmax.f32 %v1786, 0.0
    %v1841 = vmax.f32 %v1789, 0.0
    %v1842 = vmax.f32 %v1791, 0.0
    %v1843 = vmax.f32 %v1794, 0.0
    %v1844 = vmax.f32 %v1796, 0.0
    %v1845 = vmax.f32 %v1799, 0.0
    %v1846 = vmax.f32 %v1801, 0.0
    %v1847 = vmax.f32 %v1804, 0.0
    %v1848 = vmax.f32 %v1806, 0.0
    %v1849 = vmax.f32 %v1809, 0.0
    %v1850 = vmax.f32 %v1811, 0.0
    %v1851 = vperm.slane %v1659, 1
    %v1852 = vmul.f32 %v1813, %v1851
    %v1853 = vmul.f32 %v1814, %v1851
    %v1854 = vmul.f32 %v1815, %v1851
    %v1855 = vmul.f32 %v1816, %v1851
    %v1856 = vmul.f32 %v1817, %v1851
    %v1857 = vmul.f32 %v1818, %v1851
    %v1858 = vmul.f32 %v1819, %v1851
    %v1859 = vmul.f32 %v1820, %v1851
    %v1860 = vmul.f32 %v1821, %v1851
    %v1861 = vmul.f32 %v1822, %v1851
    %v1862 = vmul.f32 %v1823, %v1851
    %v1863 = vmul.f32 %v1824, %v1851
    %v1864 = vmul.f32 %v1825, %v1851
    %v1865 = vmul.f32 %v1826, %v1851
    %v1866 = vmul.f32 %v1827, %v1851
    %v1867 = vmul.f32 %v1828, %v1851
    %v1868 = vmul.f32 %v1829, %v1851
    %v1869 = vmul.f32 %v1830, %v1851
    %v1870 = vmul.f32 %v1831, %v1851
    %v1871 = vmul.f32 %v1832, %v1851
    %v1872 = vmul.f32 %v1833, %v1851
    %v1873 = vmul.f32 %v1834, %v1851
    %v1874 = vmul.f32 %v1835, %v1851
    %v1875 = vmul.f32 %v1836, %v1851
    %v1876 = vmul.f32 %v1837, %v1851
    %v1877 = vmul.f32 %v1838, %v1851
    %v1878 = vmul.f32 %v1839, %v1851
    %v1879 = vmul.f32 %v1840, %v1851
    %v1880 = vmul.f32 %v1841, %v1851
    %v1881 = vmul.f32 %v1842, %v1851
    %v1882 = vmul.f32 %v1843, %v1851
    %v1883 = vmul.f32 %v1844, %v1851
    %v1884 = vmul.f32 %v1845, %v1851
    %v1885 = vmul.f32 %v1846, %v1851
    %v1886 = vmul.f32 %v1847, %v1851
    %v1887 = vmul.f32 %v1848, %v1851
    %v1888 = vmul.f32 %v1849, %v1851
    %v1889 = vmul.f32 %v1850, %v1851
    %v1890 = vperm.slane %v1659, 2
    %v1891 = vadd.f32 %v1852, %v1890
    %v1892 = vadd.f32 %v1853, %v1890
    %v1893 = vadd.f32 %v1854, %v1890
    %v1894 = vadd.f32 %v1855, %v1890
    %v1895 = vadd.f32 %v1856, %v1890
    %v1896 = vadd.f32 %v1857, %v1890
    %v1897 = vadd.f32 %v1858, %v1890
    %v1898 = vadd.f32 %v1859, %v1890
    %v1899 = vadd.f32 %v1860, %v1890
    %v1900 = vadd.f32 %v1861, %v1890
    %v1901 = vadd.f32 %v1862, %v1890
    %v1902 = vadd.f32 %v1863, %v1890
    %v1903 = vadd.f32 %v1864, %v1890
    %v1904 = vadd.f32 %v1865, %v1890
    %v1905 = vadd.f32 %v1866, %v1890
    %v1906 = vadd.f32 %v1867, %v1890
    %v1907 = vadd.f32 %v1868, %v1890
    %v1908 = vadd.f32 %v1869, %v1890
    %v1909 = vadd.f32 %v1870, %v1890
    %v1910 = vadd.f32 %v1871, %v1890
    %v1911 = vadd.f32 %v1872, %v1890
    %v1912 = vadd.f32 %v1873, %v1890
    %v1913 = vadd.f32 %v1874, %v1890
    %v1914 = vadd.f32 %v1875, %v1890
    %v1915 = vadd.f32 %v1876, %v1890
    %v1916 = vadd.f32 %v1877, %v1890
    %v1917 = vadd.f32 %v1878, %v1890
    %v1918 = vadd.f32 %v1879, %v1890
    %v1919 = vadd.f32 %v1880, %v1890
    %v1920 = vadd.f32 %v1881, %v1890
    %v1921 = vadd.f32 %v1882, %v1890
    %v1922 = vadd.f32 %v1883, %v1890
    %v1923 = vadd.f32 %v1884, %v1890
    %v1924 = vadd.f32 %v1885, %v1890
    %v1925 = vadd.f32 %v1886, %v1890
    %v1926 = vadd.f32 %v1887, %v1890
    %v1927 = vadd.f32 %v1888, %v1890
    %v1928 = vadd.f32 %v1889, %v1890
    %v1929 = vadd.f32 %v1584, %v1891
    %v1930 = vadd.f32 %v1585, %v1892
    %v1931 = vadd.f32 %v1586, %v1893
    %v1932 = vadd.f32 %v1587, %v1894
    %v1933 = vadd.f32 %v1588, %v1895
    %v1934 = vadd.f32 %v1589, %v1896
    %v1935 = vadd.f32 %v1590, %v1897
    %v1936 = vadd.f32 %v1591, %v1898
    %v1937 = vadd.f32 %v1592, %v1899
    %v1938 = vadd.f32 %v1593, %v1900
    %v1939 = vadd.f32 %v1594, %v1901
    %v1940 = vadd.f32 %v1595, %v1902
    %v1941 = vadd.f32 %v1596, %v1903
    %v1942 = vadd.f32 %v1597, %v1904
    %v1943 = vadd.f32 %v1598, %v1905
    %v1944 = vadd.f32 %v1599, %v1906
    %v1945 = vadd.f32 %v1600, %v1907
    %v1946 = vadd.f32 %v1601, %v1908
    %v1947 = vadd.f32 %v1602, %v1909
    %v1948 = vadd.f32 %v1603, %v1910
    %v1949 = vadd.f32 %v1604, %v1911
    %v1950 = vadd.f32 %v1605, %v1912
    %v1951 = vadd.f32 %v1606, %v1913
    %v1952 = vadd.f32 %v1607, %v1914
    %v1953 = vadd.f32 %v1608, %v1915
    %v1954 = vadd.f32 %v1609, %v1916
    %v1955 = vadd.f32 %v1610, %v1917
    %v1956 = vadd.f32 %v1611, %v1918
    %v1957 = vadd.f32 %v1612, %v1919
    %v1958 = vadd.f32 %v1613, %v1920
    %v1959 = vadd.f32 %v1614, %v1921
    %v1960 = vadd.f32 %v1615, %v1922
    %v1961 = vadd.f32 %v1616, %v1923
    %v1962 = vadd.f32 %v1617, %v1924
    %v1963 = vadd.f32 %v1618, %v1925
    %v1964 = vadd.f32 %v1619, %v1926
    %v1965 = vadd.f32 %v1620, %v1927
    %v1966 = vadd.f32 %v1621, %v1928
    %1967 = vst [vmem:[#allocation2] sm:$0xff] %v1929
    %1968 = vst [vmem:[#allocation2 + $0x8] sm:$0xff] %v1930
    %1969 = vst [vmem:[#allocation2 + $0x10] sm:$0xff] %v1931
    %1970 = vst [vmem:[#allocation2 + $0x18] sm:$0xff] %v1932
    %1971 = vst [vmem:[#allocation2 + $0x20] sm:$0xff] %v1933
    %1972 = vst [vmem:[#allocation2 + $0x28] sm:$0xff] %v1934
    %1973 = vst [vmem:[#allocation2 + $0x30] sm:$0xff] %v1935
    %1974 = vst [vmem:[#allocation2 + $0x38] sm:$0xff] %v1936
    %1975 = vst [vmem:[#allocation2 + $0x40] sm:$0xff] %v1937
    %1976 = vst [vmem:[#allocation2 + $0x48] sm:$0xff] %v1938
    %1977 = vst [vmem:[#allocation2 + $0x50] sm:$0xff] %v1939
    %1978 = vst [vmem:[#allocation2 + $0x58] sm:$0xff] %v1940
    %1979 = vst [vmem:[#allocation2 + $0x60] sm:$0xff] %v1941
    %1980 = vst [vmem:[#allocation2 + $0x68] sm:$0xff] %v1942
    %1981 = vst [vmem:[#allocation2 + $0x70] sm:$0xff] %v1943
    %1982 = vst [vmem:[#allocation2 + $0x78] sm:$0xff] %v1944
    %1983 = vst [vmem:[#allocation2 + $0x80] sm:$0xff] %v1945
    %1984 = vst [vmem:[#allocation2 + $0x88] sm:$0xff] %v1946
    %1985 = vst [vmem:[#allocation2 + $0x90] sm:$0xff] %v1947
    %1986 = vst [vmem:[#allocation2 + $0x98] sm:$0xff] %v1948
    %1987 = vst [vmem:[#allocation2 + $0xa0] sm:$0xff] %v1949
    %1988 = vst [vmem:[#allocation2 + $0xa8] sm:$0xff] %v1950
    %1989 = vst [vmem:[#allocation2 + $0xb0] sm:$0xff] %v1951
    %1990 = vst [vmem:[#allocation2 + $0xb8] sm:$0xff] %v1952
    %1991 = vst [vmem:[#allocation2 + $0xc0] sm:$0xff] %v1953
    %1992 = vst [vmem:[#allocation2 + $0xc8] sm:$0xff] %v1954
    %1993 = vst [vmem:[#allocation2 + $0xd0] sm:$0xff] %v1955
    %1994 = vst [vmem:[#allocation2 + $0xd8] sm:$0xff] %v1956
    %1995 = vst [vmem:[#allocation2 + $0xe0] sm:$0xff] %v1957
    %1996 = vst [vmem:[#allocation2 + $0xe8] sm:$0xff] %v1958
    %1997 = vst [vmem:[#allocation2 + $0xf0] sm:$0xff] %v1959
    %1998 = vst [vmem:[#allocation2 + $0xf8] sm:$0xff] %v1960
    %1999 = vst [vmem:[#allocation2 + $0x100] sm:$0xff] %v1961
    %2000 = vst [vmem:[#allocation2 + $0x108] sm:$0xff] %v1962
    %2001 = vst [vmem:[#allocation2 + $0x110] sm:$0xff] %v1963
    %2002 = vst [vmem:[#allocation2 + $0x118] sm:$0xff] %v1964
    %2003 = vst [vmem:[#allocation2 + $0x120] sm:$0xff] %v1965
    %2004 = vst [vmem:[#allocation2 + $0x128] sm:$0xff] %v1966
    // Predicated region
    $region22: #{fn.1} parent=1 // pred_check
      _
    $region23: #{fn.1} parent=1 // pred_check_branch
      %2006 = sbr.rel (0) target = $region25
    $region24: #{fn.1} parent=1 // pred_region
      %2008 = vsyncadd [#allocation3], 0
      %s2009 = sshll.u32 [#allocation2], 4
      %s2010 = int_to_ptr.vmem [resolvable:$true] %s2009
      %s2011 = sshll.u32 %s5, 4
      %s2012 = int_to_ptr.hbm [resolvable:$true] %s2011
      %2017 = dma.vmem_to_hbm [thread:$0]  %s2010, 4864, %s2012, [#allocation3], 128, 128, 8
    $region25: #{fn.1} parent=1 // pred_fallthru
      _
    // Predicated region
    $region26: #{fn.1} parent=1 // pred_check
      _
    $region27: #{fn.1} parent=1 // pred_check_branch
      %2019 = sbr.rel (0) target = $region29
    $region28: #{fn.1} parent=1 // pred_region
      %2021 = dma.done [#allocation3], 4864
    $region29: #{fn.1} parent=1 // pred_fallthru
      _
    %2022 = vsyncpa [#allocation3], 1

// kernel: fn.1
$region0: #{fn.1}
  #allocation0 [shape = 'u32[]', space=smem, size = 0x4, offset = 0x4, fixed_abs, tag = 'smem constant byte address 0x4 - core index']
  #allocation1 [shape = 'u32[72,128]{1,0:T(1,128)}', space=vmem, size = 0x9000, scoped, tag = 'internal scratch']
  %s0 = inlined_call_operand.vmem [shape: f32[304,256], index: 0, kind: input, shape index: {}]
  %s1 = inlined_call_operand.vmem [shape: bf16[256,128], index: 1, kind: input, shape index: {}]
  %s2 = inlined_call_operand.vmem [shape: f32[3,128], index: 2, kind: input, shape index: {}]
  %s3 = inlined_call_operand.vmem [shape: bf16[4,128,128], index: 3, kind: input, shape index: {}]
  %s4 = inlined_call_operand.vmem [shape: f32[4,3,128], index: 4, kind: input, shape index: {}]
  %s5 = inlined_call_operand.hbm [shape: f32[304,128], index: 5, kind: output, shape index: {}]
  %s6 = sld [smem:[#allocation0]]
  $region30: #{fn.1} parent=0
    _
  %s8 = ssub.s32 1, %s6
  %s9 = scalar_select 0, %s8, %s6
  $region1: #{fn.1} parent=0
    #allocation2 [shape = 'u8[155648]{0}', space=vmem, size = 0x26000, scoped, tag = 'output window, operand 0, single buffered']
    #allocation3 [shape = 's32[1]{0}', space=sflag, size = 0x4, scoped, tag = 'scoped memory for fn.1']
    %10 = vsyncpa [#allocation3], 0
    // Predicated region
    $region2: #{fn.1} parent=1 // pred_check
      _
    $region3: #{fn.1} parent=1 // pred_check_branch
      %12 = sbr.rel (0) target = $region5
    $region4: #{fn.1} parent=1 // pred_region
      _
    $region5: #{fn.1} parent=1 // pred_fallthru
      _
    // Predicated region
    $region6: #{fn.1} parent=1 // pred_check
      _
    $region7: #{fn.1} parent=1 // pred_check_branch
      %14 = sbr.rel (0) target = $region9
    $region8: #{fn.1} parent=1 // pred_region
      _
    $region9: #{fn.1} parent=1 // pred_fallthru
      _
    // Predicated region
    $region10: #{fn.1} parent=1 // pred_check
      _
    $region11: #{fn.1} parent=1 // pred_check_branch
      %16 = sbr.rel (0) target = $region13
    $region12: #{fn.1} parent=1 // pred_region
      _
    $region13: #{fn.1} parent=1 // pred_fallthru
      _
    // Predicated region
    $region14: #{fn.1} parent=1 // pred_check
      _
    $region15: #{fn.1} parent=1 // pred_check_branch
      %18 = sbr.rel (0) target = $region17
    $region16: #{fn.1} parent=1 // pred_region
      _
    $region17: #{fn.1} parent=1 // pred_fallthru
      _
    // Predicated region
    $region18: #{fn.1} parent=1 // pred_check
      _
    $region19: #{fn.1} parent=1 // pred_check_branch
      %20 = sbr.rel (0) target = $region21
    $region20: #{fn.1} parent=1 // pred_region
      _
    $region21: #{fn.1} parent=1 // pred_fallthru
      _
    %v21 = vld [vmem:[%s0] sm:$0xff]
    %v22 = vld [vmem:[%s0 + $0x8] sm:$0xff]
    %v23 = vld [vmem:[%s0 + $0x10] sm:$0xff]
    %v24 = vld [vmem:[%s0 + $0x18] sm:$0xff]
    %v25 = vld [vmem:[%s0 + $0x20] sm:$0xff]
    %v26 = vld [vmem:[%s0 + $0x28] sm:$0xff]
    %v27 = vld [vmem:[%s0 + $0x30] sm:$0xff]
    %v28 = vld [vmem:[%s0 + $0x38] sm:$0xff]
    %v29 = vld [vmem:[%s0 + $0x40] sm:$0xff]
    %v30 = vld [vmem:[%s0 + $0x48] sm:$0xff]
    %v31 = vld [vmem:[%s0 + $0x50] sm:$0xff]
    %v32 = vld [vmem:[%s0 + $0x58] sm:$0xff]
    %v33 = vld [vmem:[%s0 + $0x60] sm:$0xff]
    %v34 = vld [vmem:[%s0 + $0x68] sm:$0xff]
    %v35 = vld [vmem:[%s0 + $0x70] sm:$0xff]
    %v36 = vld [vmem:[%s0 + $0x78] sm:$0xff]
    %v37 = vld [vmem:[%s0 + $0x80] sm:$0xff]
    %v38 = vld [vmem:[%s0 + $0x88] sm:$0xff]
    %v39 = vld [vmem:[%s0 + $0x90] sm:$0xff]
    %v40 = vld [vmem:[%s0 + $0x98] sm:$0xff]
    %v41 = vld [vmem:[%s0 + $0xa0] sm:$0xff]
    %v42 = vld [vmem:[%s0 + $0xa8] sm:$0xff]
    %v43 = vld [vmem:[%s0 + $0xb0] sm:$0xff]
    %v44 = vld [vmem:[%s0 + $0xb8] sm:$0xff]
    %v45 = vld [vmem:[%s0 + $0xc0] sm:$0xff]
    %v46 = vld [vmem:[%s0 + $0xc8] sm:$0xff]
    %v47 = vld [vmem:[%s0 + $0xd0] sm:$0xff]
    %v48 = vld [vmem:[%s0 + $0xd8] sm:$0xff]
    %v49 = vld [vmem:[%s0 + $0xe0] sm:$0xff]
    %v50 = vld [vmem:[%s0 + $0xe8] sm:$0xff]
    %v51 = vld [vmem:[%s0 + $0xf0] sm:$0xff]
    %v52 = vld [vmem:[%s0 + $0xf8] sm:$0xff]
    %v53 = vld [vmem:[%s0 + $0x100] sm:$0xff]
    %v54 = vld [vmem:[%s0 + $0x108] sm:$0xff]
    %v55 = vld [vmem:[%s0 + $0x110] sm:$0xff]
    %v56 = vld [vmem:[%s0 + $0x118] sm:$0xff]
    %v57 = vld [vmem:[%s0 + $0x120] sm:$0xff]
    %v58 = vld [vmem:[%s0 + $0x128] sm:$0xff]
    %v59 = vld [vmem:[%s0 + $0x130] sm:$0xff]
    %v60 = vld [vmem:[%s0 + $0x138] sm:$0xff]
    %v61 = vld [vmem:[%s0 + $0x140] sm:$0xff]
    %v62 = vld [vmem:[%s0 + $0x148] sm:$0xff]
    %v63 = vld [vmem:[%s0 + $0x150] sm:$0xff]
    %v64 = vld [vmem:[%s0 + $0x158] sm:$0xff]
    %v65 = vld [vmem:[%s0 + $0x160] sm:$0xff]
    %v66 = vld [vmem:[%s0 + $0x168] sm:$0xff]
    %v67 = vld [vmem:[%s0 + $0x170] sm:$0xff]
    %v68 = vld [vmem:[%s0 + $0x178] sm:$0xff]
    %v69 = vld [vmem:[%s0 + $0x180] sm:$0xff]
    %v70 = vld [vmem:[%s0 + $0x188] sm:$0xff]
    %v71 = vld [vmem:[%s0 + $0x190] sm:$0xff]
    %v72 = vld [vmem:[%s0 + $0x198] sm:$0xff]
    %v73 = vld [vmem:[%s0 + $0x1a0] sm:$0xff]
    %v74 = vld [vmem:[%s0 + $0x1a8] sm:$0xff]
    %v75 = vld [vmem:[%s0 + $0x1b0] sm:$0xff]
    %v76 = vld [vmem:[%s0 + $0x1b8] sm:$0xff]
    %v77 = vld [vmem:[%s0 + $0x1c0] sm:$0xff]
    %v78 = vld [vmem:[%s0 + $0x1c8] sm:$0xff]
    %v79 = vld [vmem:[%s0 + $0x1d0] sm:$0xff]
    %v80 = vld [vmem:[%s0 + $0x1d8] sm:$0xff]
    %v81 = vld [vmem:[%s0 + $0x1e0] sm:$0xff]
    %v82 = vld [vmem:[%s0 + $0x1e8] sm:$0xff]
    %v83 = vld [vmem:[%s0 + $0x1f0] sm:$0xff]
    %v84 = vld [vmem:[%s0 + $0x1f8] sm:$0xff]
    %v85 = vld [vmem:[%s0 + $0x200] sm:$0xff]
    %v86 = vld [vmem:[%s0 + $0x208] sm:$0xff]
    %v87 = vld [vmem:[%s0 + $0x210] sm:$0xff]
    %v88 = vld [vmem:[%s0 + $0x218] sm:$0xff]
    %v89 = vld [vmem:[%s0 + $0x220] sm:$0xff]
    %v90 = vld [vmem:[%s0 + $0x228] sm:$0xff]
    %v91 = vld [vmem:[%s0 + $0x230] sm:$0xff]
    %v92 = vld [vmem:[%s0 + $0x238] sm:$0xff]
    %v93 = vld [vmem:[%s0 + $0x240] sm:$0xff]
    %v94 = vld [vmem:[%s0 + $0x248] sm:$0xff]
    %v95 = vld [vmem:[%s0 + $0x250] sm:$0xff]
    %v96 = vld [vmem:[%s0 + $0x258] sm:$0xff]
    %v97 = vpack.c.bf16 %v23, %v21
    %v98 = vpack.c.bf16 %v24, %v22
    %v99 = vpack.c.bf16 %v27, %v25
    %v100 = vpack.c.bf16 %v28, %v26
    %v101 = vpack.c.bf16 %v31, %v29
    %v102 = vpack.c.bf16 %v32, %v30
    %v103 = vpack.c.bf16 %v35, %v33
    %v104 = vpack.c.bf16 %v36, %v34
    %v105 = vpack.c.bf16 %v39, %v37
    %v106 = vpack.c.bf16 %v40, %v38
    %v107 = vpack.c.bf16 %v43, %v41
    %v108 = vpack.c.bf16 %v44, %v42
    %v109 = vpack.c.bf16 %v47, %v45
    %v110 = vpack.c.bf16 %v48, %v46
    %v111 = vpack.c.bf16 %v51, %v49
    %v112 = vpack.c.bf16 %v52, %v50
    %v113 = vpack.c.bf16 %v55, %v53
    %v114 = vpack.c.bf16 %v56, %v54
    %v115 = vpack.c.bf16 %v59, %v57
    %v116 = vpack.c.bf16 %v60, %v58
    %v117 = vpack.c.bf16 %v63, %v61
    %v118 = vpack.c.bf16 %v64, %v62
    %v119 = vpack.c.bf16 %v67, %v65
    %v120 = vpack.c.bf16 %v68, %v66
    %v121 = vpack.c.bf16 %v71, %v69
    %v122 = vpack.c.bf16 %v72, %v70
    %v123 = vpack.c.bf16 %v75, %v73
    %v124 = vpack.c.bf16 %v76, %v74
    %v125 = vpack.c.bf16 %v79, %v77
    %v126 = vpack.c.bf16 %v80, %v78
    %v127 = vpack.c.bf16 %v83, %v81
    %v128 = vpack.c.bf16 %v84, %v82
    %v129 = vpack.c.bf16 %v87, %v85
    %v130 = vpack.c.bf16 %v88, %v86
    %v131 = vpack.c.bf16 %v91, %v89
    %v132 = vpack.c.bf16 %v92, %v90
    %v133 = vpack.c.bf16 %v95, %v93
    %v134 = vpack.c.bf16 %v96, %v94
    %v135 = vld [vmem:[%s1] sm:$0xf]
    %v136 = vld [vmem:[%s1 + $0x4] sm:$0xf]
    %v137 = vld [vmem:[%s1 + $0x8] sm:$0xf]
    %v138 = vld [vmem:[%s1 + $0xc] sm:$0xf]
    %v139 = vld [vmem:[%s1 + $0x10] sm:$0xf]
    %v140 = vld [vmem:[%s1 + $0x14] sm:$0xf]
    %v141 = vld [vmem:[%s1 + $0x18] sm:$0xf]
    %v142 = vld [vmem:[%s1 + $0x1c] sm:$0xf]
    %v143 = vld [vmem:[%s1 + $0x20] sm:$0xf]
    %v144 = vld [vmem:[%s1 + $0x24] sm:$0xf]
    %v145 = vld [vmem:[%s1 + $0x28] sm:$0xf]
    %v146 = vld [vmem:[%s1 + $0x2c] sm:$0xf]
    %v147 = vld [vmem:[%s1 + $0x30] sm:$0xf]
    %v148 = vld [vmem:[%s1 + $0x34] sm:$0xf]
    %v149 = vld [vmem:[%s1 + $0x38] sm:$0xf]
    %v150 = vld [vmem:[%s1 + $0x3c] sm:$0xf]
    %v151 = vld [vmem:[%s1 + $0x40] sm:$0xf]
    %v152 = vld [vmem:[%s1 + $0x44] sm:$0xf]
    %v153 = vld [vmem:[%s1 + $0x48] sm:$0xf]
    %v154 = vld [vmem:[%s1 + $0x4c] sm:$0xf]
    %v155 = vld [vmem:[%s1 + $0x50] sm:$0xf]
    %v156 = vld [vmem:[%s1 + $0x54] sm:$0xf]
    %v157 = vld [vmem:[%s1 + $0x58] sm:$0xf]
    %v158 = vld [vmem:[%s1 + $0x5c] sm:$0xf]
    %v159 = vld [vmem:[%s1 + $0x60] sm:$0xf]
    %v160 = vld [vmem:[%s1 + $0x64] sm:$0xf]
    %v161 = vld [vmem:[%s1 + $0x68] sm:$0xf]
    %v162 = vld [vmem:[%s1 + $0x6c] sm:$0xf]
    %v163 = vld [vmem:[%s1 + $0x70] sm:$0xf]
    %v164 = vld [vmem:[%s1 + $0x74] sm:$0xf]
    %v165 = vld [vmem:[%s1 + $0x78] sm:$0xf]
    %v166 = vld [vmem:[%s1 + $0x7c] sm:$0xf]
    %v167 = vld [vmem:[%s2] sm:$0x7]
    %v168 = vperm.slane %v167, 0
    %v201 = vunpack.c.l.b16 %v135
    %v202 = vunpack.c.l.b16 %v136
    %v203 = vunpack.c.l.b16 %v137
    %v204 = vunpack.c.l.b16 %v138
    %v205 = vunpack.c.l.b16 %v139
    %v206 = vunpack.c.l.b16 %v140
    %v207 = vunpack.c.l.b16 %v141
    %v208 = vunpack.c.l.b16 %v142
    %v209 = vunpack.c.l.b16 %v143
    %v210 = vunpack.c.l.b16 %v144
    %v211 = vunpack.c.l.b16 %v145
    %v212 = vunpack.c.l.b16 %v146
    %v213 = vunpack.c.l.b16 %v147
    %v214 = vunpack.c.l.b16 %v148
    %v215 = vunpack.c.l.b16 %v149
    %v216 = vunpack.c.l.b16 %v150
    %v217 = vunpack.c.l.b16 %v151
    %v218 = vunpack.c.l.b16 %v152
    %v219 = vunpack.c.l.b16 %v153
    %v220 = vunpack.c.l.b16 %v154
    %v221 = vunpack.c.l.b16 %v155
    %v222 = vunpack.c.l.b16 %v156
    %v223 = vunpack.c.l.b16 %v157
    %v224 = vunpack.c.l.b16 %v158
    %v225 = vunpack.c.l.b16 %v159
    %v226 = vunpack.c.l.b16 %v160
    %v227 = vunpack.c.l.b16 %v161
    %v228 = vunpack.c.l.b16 %v162
    %v229 = vunpack.c.l.b16 %v163
    %v230 = vunpack.c.l.b16 %v164
    %v231 = vunpack.c.l.b16 %v165
    %v232 = vunpack.c.l.b16 %v166
    %v233 = vpack.c.b16 %v202, %v201
    %v234 = vpack.c.b16 %v204, %v203
    %v235 = vpack.c.b16 %v206, %v205
    %v236 = vpack.c.b16 %v208, %v207
    %v237 = vpack.c.b16 %v210, %v209
    %v238 = vpack.c.b16 %v212, %v211
    %v239 = vpack.c.b16 %v214, %v213
    %v240 = vpack.c.b16 %v216, %v215
    %v241 = vpack.c.b16 %v218, %v217
    %v242 = vpack.c.b16 %v220, %v219
    %v243 = vpack.c.b16 %v222, %v221
    %v244 = vpack.c.b16 %v224, %v223
    %v245 = vpack.c.b16 %v226, %v225
    %v246 = vpack.c.b16 %v228, %v227
    %v247 = vpack.c.b16 %v230, %v229
    %v248 = vpack.c.b16 %v232, %v231
    %265 = vmatpush.bf16.msra.mxu0 %v240
    %266 = vmatpush.bf16.msra.mxu0 %v239
    %267 = vmatpush.bf16.msra.mxu0 %v238
    %268 = vmatpush.bf16.msra.mxu0 %v237
    %269 = vmatpush.bf16.msra.mxu0 %v236
    %270 = vmatpush.bf16.msra.mxu0 %v235
    %271 = vmatpush.bf16.msra.mxu0 %v234
    %272 = vmatpush.bf16.msra.mxu0 %v233
    %273 = vmatmul.bf16.gmra.mxu0 %v97
    %v274 = vpop.f32.mrf.mxu0
    %v275 = vadd.f32 %v168, %v274
    %v276 = vpop.f32.mrf.mxu0
    %v277 = vadd.f32 %v168, %v276
    %278 = vmatmul.bf16.gmra.mxu0 %v99
    %v279 = vpop.f32.mrf.mxu0
    %v280 = vadd.f32 %v168, %v279
    %v281 = vpop.f32.mrf.mxu0
    %v282 = vadd.f32 %v168, %v281
    %283 = vmatmul.bf16.gmra.mxu0 %v101
    %v284 = vpop.f32.mrf.mxu0
    %v285 = vadd.f32 %v168, %v284
    %v286 = vpop.f32.mrf.mxu0
    %v287 = vadd.f32 %v168, %v286
    %288 = vmatmul.bf16.gmra.mxu0 %v103
    %v289 = vpop.f32.mrf.mxu0
    %v290 = vadd.f32 %v168, %v289
    %v291 = vpop.f32.mrf.mxu0
    %v292 = vadd.f32 %v168, %v291
    %293 = vmatmul.bf16.gmra.mxu0 %v105
    %v294 = vpop.f32.mrf.mxu0
    %v295 = vadd.f32 %v168, %v294
    %v296 = vpop.f32.mrf.mxu0
    %v297 = vadd.f32 %v168, %v296
    %298 = vmatmul.bf16.gmra.mxu0 %v107
    %v299 = vpop.f32.mrf.mxu0
    %v300 = vadd.f32 %v168, %v299
    %v301 = vpop.f32.mrf.mxu0
    %v302 = vadd.f32 %v168, %v301
    %303 = vmatmul.bf16.gmra.mxu0 %v109
    %v304 = vpop.f32.mrf.mxu0
    %v305 = vadd.f32 %v168, %v304
    %v306 = vpop.f32.mrf.mxu0
    %v307 = vadd.f32 %v168, %v306
    %308 = vmatmul.bf16.gmra.mxu0 %v111
    %v309 = vpop.f32.mrf.mxu0
    %v310 = vadd.f32 %v168, %v309
    %v311 = vpop.f32.mrf.mxu0
    %v312 = vadd.f32 %v168, %v311
    %313 = vmatmul.bf16.gmra.mxu0 %v113
    %v314 = vpop.f32.mrf.mxu0
    %v315 = vadd.f32 %v168, %v314
    %v316 = vpop.f32.mrf.mxu0
    %v317 = vadd.f32 %v168, %v316
    %318 = vmatmul.bf16.gmra.mxu0 %v115
    %v319 = vpop.f32.mrf.mxu0
    %v320 = vadd.f32 %v168, %v319
    %v321 = vpop.f32.mrf.mxu0
    %v322 = vadd.f32 %v168, %v321
    %323 = vmatmul.bf16.gmra.mxu0 %v117
    %v324 = vpop.f32.mrf.mxu0
    %v325 = vadd.f32 %v168, %v324
    %v326 = vpop.f32.mrf.mxu0
    %v327 = vadd.f32 %v168, %v326
    %328 = vmatmul.bf16.gmra.mxu0 %v119
    %v329 = vpop.f32.mrf.mxu0
    %v330 = vadd.f32 %v168, %v329
    %v331 = vpop.f32.mrf.mxu0
    %v332 = vadd.f32 %v168, %v331
    %333 = vmatmul.bf16.gmra.mxu0 %v121
    %v334 = vpop.f32.mrf.mxu0
    %v335 = vadd.f32 %v168, %v334
    %v336 = vpop.f32.mrf.mxu0
    %v337 = vadd.f32 %v168, %v336
    %338 = vmatmul.bf16.gmra.mxu0 %v123
    %v339 = vpop.f32.mrf.mxu0
    %v340 = vadd.f32 %v168, %v339
    %v341 = vpop.f32.mrf.mxu0
    %v342 = vadd.f32 %v168, %v341
    %343 = vmatmul.bf16.gmra.mxu0 %v125
    %v344 = vpop.f32.mrf.mxu0
    %v345 = vadd.f32 %v168, %v344
    %v346 = vpop.f32.mrf.mxu0
    %v347 = vadd.f32 %v168, %v346
    %348 = vmatmul.bf16.gmra.mxu0 %v127
    %v349 = vpop.f32.mrf.mxu0
    %v350 = vadd.f32 %v168, %v349
    %v351 = vpop.f32.mrf.mxu0
    %v352 = vadd.f32 %v168, %v351
    %353 = vmatmul.bf16.gmra.mxu0 %v129
    %v354 = vpop.f32.mrf.mxu0
    %v355 = vadd.f32 %v168, %v354
    %v356 = vpop.f32.mrf.mxu0
    %v357 = vadd.f32 %v168, %v356
    %358 = vmatmul.bf16.gmra.mxu0 %v131
    %v359 = vpop.f32.mrf.mxu0
    %v360 = vadd.f32 %v168, %v359
    %v361 = vpop.f32.mrf.mxu0
    %v362 = vadd.f32 %v168, %v361
    %363 = vmatmul.bf16.gmra.mxu0 %v133
    %v364 = vpop.f32.mrf.mxu0
    %v365 = vadd.f32 %v168, %v364
    %v366 = vpop.f32.mrf.mxu0
    %v367 = vadd.f32 %v168, %v366
    %368 = vdwg.mxu0
    %369 = vmatpush.bf16.msra.mxu0 %v248
    %370 = vmatpush.bf16.msra.mxu0 %v247
    %371 = vmatpush.bf16.msra.mxu0 %v246
    %372 = vmatpush.bf16.msra.mxu0 %v245
    %373 = vmatpush.bf16.msra.mxu0 %v244
    %374 = vmatpush.bf16.msra.mxu0 %v243
    %375 = vmatpush.bf16.msra.mxu0 %v242
    %376 = vmatpush.bf16.msra.mxu0 %v241
    %377 = vmatmul.bf16.gmra.mxu0 %v98
    %v378 = vpop.f32.mrf.mxu0
    %v379 = vadd.f32 %v275, %v378
    %v380 = vpop.f32.mrf.mxu0
    %v381 = vadd.f32 %v277, %v380
    %382 = vmatmul.bf16.gmra.mxu0 %v100
    %v383 = vpop.f32.mrf.mxu0
    %v384 = vadd.f32 %v280, %v383
    %v385 = vpop.f32.mrf.mxu0
    %v386 = vadd.f32 %v282, %v385
    %387 = vmatmul.bf16.gmra.mxu0 %v102
    %v388 = vpop.f32.mrf.mxu0
    %v389 = vadd.f32 %v285, %v388
    %v390 = vpop.f32.mrf.mxu0
    %v391 = vadd.f32 %v287, %v390
    %392 = vmatmul.bf16.gmra.mxu0 %v104
    %v393 = vpop.f32.mrf.mxu0
    %v394 = vadd.f32 %v290, %v393
    %v395 = vpop.f32.mrf.mxu0
    %v396 = vadd.f32 %v292, %v395
    %397 = vmatmul.bf16.gmra.mxu0 %v106
    %v398 = vpop.f32.mrf.mxu0
    %v399 = vadd.f32 %v295, %v398
    %v400 = vpop.f32.mrf.mxu0
    %v401 = vadd.f32 %v297, %v400
    %402 = vmatmul.bf16.gmra.mxu0 %v108
    %v403 = vpop.f32.mrf.mxu0
    %v404 = vadd.f32 %v300, %v403
    %v405 = vpop.f32.mrf.mxu0
    %v406 = vadd.f32 %v302, %v405
    %407 = vmatmul.bf16.gmra.mxu0 %v110
    %v408 = vpop.f32.mrf.mxu0
    %v409 = vadd.f32 %v305, %v408
    %v410 = vpop.f32.mrf.mxu0
    %v411 = vadd.f32 %v307, %v410
    %412 = vmatmul.bf16.gmra.mxu0 %v112
    %v413 = vpop.f32.mrf.mxu0
    %v414 = vadd.f32 %v310, %v413
    %v415 = vpop.f32.mrf.mxu0
    %v416 = vadd.f32 %v312, %v415
    %417 = vmatmul.bf16.gmra.mxu0 %v114
    %v418 = vpop.f32.mrf.mxu0
    %v419 = vadd.f32 %v315, %v418
    %v420 = vpop.f32.mrf.mxu0
    %v421 = vadd.f32 %v317, %v420
    %422 = vmatmul.bf16.gmra.mxu0 %v116
    %v423 = vpop.f32.mrf.mxu0
    %v424 = vadd.f32 %v320, %v423
    %v425 = vpop.f32.mrf.mxu0
    %v426 = vadd.f32 %v322, %v425
    %427 = vmatmul.bf16.gmra.mxu0 %v118
    %v428 = vpop.f32.mrf.mxu0
    %v429 = vadd.f32 %v325, %v428
    %v430 = vpop.f32.mrf.mxu0
    %v431 = vadd.f32 %v327, %v430
    %432 = vmatmul.bf16.gmra.mxu0 %v120
    %v433 = vpop.f32.mrf.mxu0
    %v434 = vadd.f32 %v330, %v433
    %v435 = vpop.f32.mrf.mxu0
    %v436 = vadd.f32 %v332, %v435
    %437 = vmatmul.bf16.gmra.mxu0 %v122
    %v438 = vpop.f32.mrf.mxu0
    %v439 = vadd.f32 %v335, %v438
    %v440 = vpop.f32.mrf.mxu0
    %v441 = vadd.f32 %v337, %v440
    %442 = vmatmul.bf16.gmra.mxu0 %v124
    %v443 = vpop.f32.mrf.mxu0
    %v444 = vadd.f32 %v340, %v443
    %v445 = vpop.f32.mrf.mxu0
    %v446 = vadd.f32 %v342, %v445
    %447 = vmatmul.bf16.gmra.mxu0 %v126
    %v448 = vpop.f32.mrf.mxu0
    %v449 = vadd.f32 %v345, %v448
    %v450 = vpop.f32.mrf.mxu0
    %v451 = vadd.f32 %v347, %v450
    %452 = vmatmul.bf16.gmra.mxu0 %v128
    %v453 = vpop.f32.mrf.mxu0
    %v454 = vadd.f32 %v350, %v453
    %v455 = vpop.f32.mrf.mxu0
    %v456 = vadd.f32 %v352, %v455
    %457 = vmatmul.bf16.gmra.mxu0 %v130
    %v458 = vpop.f32.mrf.mxu0
    %v459 = vadd.f32 %v355, %v458
    %v460 = vpop.f32.mrf.mxu0
    %v461 = vadd.f32 %v357, %v460
    %462 = vmatmul.bf16.gmra.mxu0 %v132
    %v463 = vpop.f32.mrf.mxu0
    %v464 = vadd.f32 %v360, %v463
    %v465 = vpop.f32.mrf.mxu0
    %v466 = vadd.f32 %v362, %v465
    %467 = vmatmul.bf16.gmra.mxu0 %v134
    %v468 = vpop.f32.mrf.mxu0
    %v469 = vadd.f32 %v365, %v468
    %v470 = vpop.f32.mrf.mxu0
    %v471 = vadd.f32 %v367, %v470
    %472 = vdwg.mxu0
    %v473 = vmax.f32 %v379, 0.0
    %v474 = vmax.f32 %v381, 0.0
    %v475 = vmax.f32 %v384, 0.0
    %v476 = vmax.f32 %v386, 0.0
    %v477 = vmax.f32 %v389, 0.0
    %v478 = vmax.f32 %v391, 0.0
    %v479 = vmax.f32 %v394, 0.0
    %v480 = vmax.f32 %v396, 0.0
    %v481 = vmax.f32 %v399, 0.0
    %v482 = vmax.f32 %v401, 0.0
    %v483 = vmax.f32 %v404, 0.0
    %v484 = vmax.f32 %v406, 0.0
    %v485 = vmax.f32 %v409, 0.0
    %v486 = vmax.f32 %v411, 0.0
    %v487 = vmax.f32 %v414, 0.0
    %v488 = vmax.f32 %v416, 0.0
    %v489 = vmax.f32 %v419, 0.0
    %v490 = vmax.f32 %v421, 0.0
    %v491 = vmax.f32 %v424, 0.0
    %v492 = vmax.f32 %v426, 0.0
    %v493 = vmax.f32 %v429, 0.0
    %v494 = vmax.f32 %v431, 0.0
    %v495 = vmax.f32 %v434, 0.0
    %v496 = vmax.f32 %v436, 0.0
    %v497 = vmax.f32 %v439, 0.0
    %v498 = vmax.f32 %v441, 0.0
    %v499 = vmax.f32 %v444, 0.0
    %v500 = vmax.f32 %v446, 0.0
    %v501 = vmax.f32 %v449, 0.0
    %v502 = vmax.f32 %v451, 0.0
    %v503 = vmax.f32 %v454, 0.0
    %v504 = vmax.f32 %v456, 0.0
    %v505 = vmax.f32 %v459, 0.0
    %v506 = vmax.f32 %v461, 0.0
    %v507 = vmax.f32 %v464, 0.0
    %v508 = vmax.f32 %v466, 0.0
    %v509 = vmax.f32 %v469, 0.0
    %v510 = vmax.f32 %v471, 0.0
    %v511 = vperm.slane %v167, 1
    %v512 = vmul.f32 %v473, %v511
    %v513 = vmul.f32 %v474, %v511
    %v514 = vmul.f32 %v475, %v511
    %v515 = vmul.f32 %v476, %v511
    %v516 = vmul.f32 %v477, %v511
    %v517 = vmul.f32 %v478, %v511
    %v518 = vmul.f32 %v479, %v511
    %v519 = vmul.f32 %v480, %v511
    %v520 = vmul.f32 %v481, %v511
    %v521 = vmul.f32 %v482, %v511
    %v522 = vmul.f32 %v483, %v511
    %v523 = vmul.f32 %v484, %v511
    %v524 = vmul.f32 %v485, %v511
    %v525 = vmul.f32 %v486, %v511
    %v526 = vmul.f32 %v487, %v511
    %v527 = vmul.f32 %v488, %v511
    %v528 = vmul.f32 %v489, %v511
    %v529 = vmul.f32 %v490, %v511
    %v530 = vmul.f32 %v491, %v511
    %v531 = vmul.f32 %v492, %v511
    %v532 = vmul.f32 %v493, %v511
    %v533 = vmul.f32 %v494, %v511
    %v534 = vmul.f32 %v495, %v511
    %v535 = vmul.f32 %v496, %v511
    %v536 = vmul.f32 %v497, %v511
    %v537 = vmul.f32 %v498, %v511
    %v538 = vmul.f32 %v499, %v511
    %v539 = vmul.f32 %v500, %v511
    %v540 = vmul.f32 %v501, %v511
    %v541 = vmul.f32 %v502, %v511
    %v542 = vmul.f32 %v503, %v511
    %v543 = vmul.f32 %v504, %v511
    %v544 = vmul.f32 %v505, %v511
    %v545 = vmul.f32 %v506, %v511
    %v546 = vmul.f32 %v507, %v511
    %v547 = vmul.f32 %v508, %v511
    %v548 = vmul.f32 %v509, %v511
    %v549 = vmul.f32 %v510, %v511
    %v550 = vperm.slane %v167, 2
    %v551 = vadd.f32 %v512, %v550
    %v552 = vadd.f32 %v513, %v550
    %v553 = vadd.f32 %v514, %v550
    %v554 = vadd.f32 %v515, %v550
    %v555 = vadd.f32 %v516, %v550
    %v556 = vadd.f32 %v517, %v550
    %v557 = vadd.f32 %v518, %v550
    %v558 = vadd.f32 %v519, %v550
    %v559 = vadd.f32 %v520, %v550
    %v560 = vadd.f32 %v521, %v550
    %v561 = vadd.f32 %v522, %v550
    %v562 = vadd.f32 %v523, %v550
    %v563 = vadd.f32 %v524, %v550
    %v564 = vadd.f32 %v525, %v550
    %v565 = vadd.f32 %v526, %v550
    %v566 = vadd.f32 %v527, %v550
    %v567 = vadd.f32 %v528, %v550
    %v568 = vadd.f32 %v529, %v550
    %v569 = vadd.f32 %v530, %v550
    %v570 = vadd.f32 %v531, %v550
    %v571 = vadd.f32 %v532, %v550
    %v572 = vadd.f32 %v533, %v550
    %v573 = vadd.f32 %v534, %v550
    %v574 = vadd.f32 %v535, %v550
    %v575 = vadd.f32 %v536, %v550
    %v576 = vadd.f32 %v537, %v550
    %v577 = vadd.f32 %v538, %v550
    %v578 = vadd.f32 %v539, %v550
    %v579 = vadd.f32 %v540, %v550
    %v580 = vadd.f32 %v541, %v550
    %v581 = vadd.f32 %v542, %v550
    %v582 = vadd.f32 %v543, %v550
    %v583 = vadd.f32 %v544, %v550
    %v584 = vadd.f32 %v545, %v550
    %v585 = vadd.f32 %v546, %v550
    %v586 = vadd.f32 %v547, %v550
    %v587 = vadd.f32 %v548, %v550
    %v588 = vadd.f32 %v549, %v550
    %v589 = vpack.c.bf16 %v552, %v551
    %v590 = vpack.c.bf16 %v554, %v553
    %v591 = vpack.c.bf16 %v556, %v555
    %v592 = vpack.c.bf16 %v558, %v557
    %v593 = vpack.c.bf16 %v560, %v559
    %v594 = vpack.c.bf16 %v562, %v561
    %v595 = vpack.c.bf16 %v564, %v563
    %v596 = vpack.c.bf16 %v566, %v565
    %v597 = vpack.c.bf16 %v568, %v567
    %v598 = vpack.c.bf16 %v570, %v569
    %v599 = vpack.c.bf16 %v572, %v571
    %v600 = vpack.c.bf16 %v574, %v573
    %v601 = vpack.c.bf16 %v576, %v575
    %v602 = vpack.c.bf16 %v578, %v577
    %v603 = vpack.c.bf16 %v580, %v579
    %v604 = vpack.c.bf16 %v582, %v581
    %v605 = vpack.c.bf16 %v584, %v583
    %v606 = vpack.c.bf16 %v586, %v585
    %v607 = vpack.c.bf16 %v588, %v587
    %v608 = vld [vmem:[%s3] sm:$0xf]
    %v609 = vld [vmem:[%s3 + $0x4] sm:$0xf]
    %v610 = vld [vmem:[%s3 + $0x8] sm:$0xf]
    %v611 = vld [vmem:[%s3 + $0xc] sm:$0xf]
    %v612 = vld [vmem:[%s3 + $0x10] sm:$0xf]
    %v613 = vld [vmem:[%s3 + $0x14] sm:$0xf]
    %v614 = vld [vmem:[%s3 + $0x18] sm:$0xf]
    %v615 = vld [vmem:[%s3 + $0x1c] sm:$0xf]
    %v616 = vld [vmem:[%s3 + $0x20] sm:$0xf]
    %v617 = vld [vmem:[%s3 + $0x24] sm:$0xf]
    %v618 = vld [vmem:[%s3 + $0x28] sm:$0xf]
    %v619 = vld [vmem:[%s3 + $0x2c] sm:$0xf]
    %v620 = vld [vmem:[%s3 + $0x30] sm:$0xf]
    %v621 = vld [vmem:[%s3 + $0x34] sm:$0xf]
    %v622 = vld [vmem:[%s3 + $0x38] sm:$0xf]
    %v623 = vld [vmem:[%s3 + $0x3c] sm:$0xf]
    %v624 = vld [vmem:[%s4] sm:$0x7]
    %v625 = vperm.slane %v624, 0
    %v642 = vunpack.c.l.b16 %v608
    %v643 = vunpack.c.l.b16 %v609
    %v644 = vunpack.c.l.b16 %v610
    %v645 = vunpack.c.l.b16 %v611
    %v646 = vunpack.c.l.b16 %v612
    %v647 = vunpack.c.l.b16 %v613
    %v648 = vunpack.c.l.b16 %v614
    %v649 = vunpack.c.l.b16 %v615
    %v650 = vunpack.c.l.b16 %v616
    %v651 = vunpack.c.l.b16 %v617
    %v652 = vunpack.c.l.b16 %v618
    %v653 = vunpack.c.l.b16 %v619
    %v654 = vunpack.c.l.b16 %v620
    %v655 = vunpack.c.l.b16 %v621
    %v656 = vunpack.c.l.b16 %v622
    %v657 = vunpack.c.l.b16 %v623
    %v658 = vpack.c.b16 %v643, %v642
    %v659 = vpack.c.b16 %v645, %v644
    %v660 = vpack.c.b16 %v647, %v646
    %v661 = vpack.c.b16 %v649, %v648
    %v662 = vpack.c.b16 %v651, %v650
    %v663 = vpack.c.b16 %v653, %v652
    %v664 = vpack.c.b16 %v655, %v654
    %v665 = vpack.c.b16 %v657, %v656
    %674 = vmatpush.bf16.msra.mxu0 %v665
    %675 = vmatpush.bf16.msra.mxu0 %v664
    %676 = vmatpush.bf16.msra.mxu0 %v663
    %677 = vmatpush.bf16.msra.mxu0 %v662
    %678 = vmatpush.bf16.msra.mxu0 %v661
    %679 = vmatpush.bf16.msra.mxu0 %v660
    %680 = vmatpush.bf16.msra.mxu0 %v659
    %681 = vmatpush.bf16.msra.mxu0 %v658
    %682 = vmatmul.bf16.gmra.mxu0 %v589
    %v683 = vpop.f32.mrf.mxu0
    %v684 = vadd.f32 %v625, %v683
    %v685 = vpop.f32.mrf.mxu0
    %v686 = vadd.f32 %v625, %v685
    %687 = vmatmul.bf16.gmra.mxu0 %v590
    %v688 = vpop.f32.mrf.mxu0
    %v689 = vadd.f32 %v625, %v688
    %v690 = vpop.f32.mrf.mxu0
    %v691 = vadd.f32 %v625, %v690
    %692 = vmatmul.bf16.gmra.mxu0 %v591
    %v693 = vpop.f32.mrf.mxu0
    %v694 = vadd.f32 %v625, %v693
    %v695 = vpop.f32.mrf.mxu0
    %v696 = vadd.f32 %v625, %v695
    %697 = vmatmul.bf16.gmra.mxu0 %v592
    %v698 = vpop.f32.mrf.mxu0
    %v699 = vadd.f32 %v625, %v698
    %v700 = vpop.f32.mrf.mxu0
    %v701 = vadd.f32 %v625, %v700
    %702 = vmatmul.bf16.gmra.mxu0 %v593
    %v703 = vpop.f32.mrf.mxu0
    %v704 = vadd.f32 %v625, %v703
    %v705 = vpop.f32.mrf.mxu0
    %v706 = vadd.f32 %v625, %v705
    %707 = vmatmul.bf16.gmra.mxu0 %v594
    %v708 = vpop.f32.mrf.mxu0
    %v709 = vadd.f32 %v625, %v708
    %v710 = vpop.f32.mrf.mxu0
    %v711 = vadd.f32 %v625, %v710
    %712 = vmatmul.bf16.gmra.mxu0 %v595
    %v713 = vpop.f32.mrf.mxu0
    %v714 = vadd.f32 %v625, %v713
    %v715 = vpop.f32.mrf.mxu0
    %v716 = vadd.f32 %v625, %v715
    %717 = vmatmul.bf16.gmra.mxu0 %v596
    %v718 = vpop.f32.mrf.mxu0
    %v719 = vadd.f32 %v625, %v718
    %v720 = vpop.f32.mrf.mxu0
    %v721 = vadd.f32 %v625, %v720
    %722 = vmatmul.bf16.gmra.mxu0 %v597
    %v723 = vpop.f32.mrf.mxu0
    %v724 = vadd.f32 %v625, %v723
    %v725 = vpop.f32.mrf.mxu0
    %v726 = vadd.f32 %v625, %v725
    %727 = vmatmul.bf16.gmra.mxu0 %v598
    %v728 = vpop.f32.mrf.mxu0
    %v729 = vadd.f32 %v625, %v728
    %v730 = vpop.f32.mrf.mxu0
    %v731 = vadd.f32 %v625, %v730
    %732 = vmatmul.bf16.gmra.mxu0 %v599
    %v733 = vpop.f32.mrf.mxu0
    %v734 = vadd.f32 %v625, %v733
    %v735 = vpop.f32.mrf.mxu0
    %v736 = vadd.f32 %v625, %v735
    %737 = vmatmul.bf16.gmra.mxu0 %v600
    %v738 = vpop.f32.mrf.mxu0
    %v739 = vadd.f32 %v625, %v738
    %v740 = vpop.f32.mrf.mxu0
    %v741 = vadd.f32 %v625, %v740
    %742 = vmatmul.bf16.gmra.mxu0 %v601
    %v743 = vpop.f32.mrf.mxu0
    %v744 = vadd.f32 %v625, %v743
    %v745 = vpop.f32.mrf.mxu0
    %v746 = vadd.f32 %v625, %v745
    %747 = vmatmul.bf16.gmra.mxu0 %v602
    %v748 = vpop.f32.mrf.mxu0
    %v749 = vadd.f32 %v625, %v748
    %v750 = vpop.f32.mrf.mxu0
    %v751 = vadd.f32 %v625, %v750
    %752 = vmatmul.bf16.gmra.mxu0 %v603
    %v753 = vpop.f32.mrf.mxu0
    %v754 = vadd.f32 %v625, %v753
    %v755 = vpop.f32.mrf.mxu0
    %v756 = vadd.f32 %v625, %v755
    %757 = vmatmul.bf16.gmra.mxu0 %v604
    %v758 = vpop.f32.mrf.mxu0
    %v759 = vadd.f32 %v625, %v758
    %v760 = vpop.f32.mrf.mxu0
    %v761 = vadd.f32 %v625, %v760
    %762 = vmatmul.bf16.gmra.mxu0 %v605
    %v763 = vpop.f32.mrf.mxu0
    %v764 = vadd.f32 %v625, %v763
    %v765 = vpop.f32.mrf.mxu0
    %v766 = vadd.f32 %v625, %v765
    %767 = vmatmul.bf16.gmra.mxu0 %v606
    %v768 = vpop.f32.mrf.mxu0
    %v769 = vadd.f32 %v625, %v768
    %v770 = vpop.f32.mrf.mxu0
    %v771 = vadd.f32 %v625, %v770
    %772 = vmatmul.bf16.gmra.mxu0 %v607
    %v773 = vpop.f32.mrf.mxu0
    %v774 = vadd.f32 %v625, %v773
    %v775 = vpop.f32.mrf.mxu0
    %v776 = vadd.f32 %v625, %v775
    %777 = vdwg.mxu0
    %v778 = vmax.f32 %v684, 0.0
    %v779 = vmax.f32 %v686, 0.0
    %v780 = vmax.f32 %v689, 0.0
    %v781 = vmax.f32 %v691, 0.0
    %v782 = vmax.f32 %v694, 0.0
    %v783 = vmax.f32 %v696, 0.0
    %v784 = vmax.f32 %v699, 0.0
    %v785 = vmax.f32 %v701, 0.0
    %v786 = vmax.f32 %v704, 0.0
    %v787 = vmax.f32 %v706, 0.0
    %v788 = vmax.f32 %v709, 0.0
    %v789 = vmax.f32 %v711, 0.0
    %v790 = vmax.f32 %v714, 0.0
    %v791 = vmax.f32 %v716, 0.0
    %v792 = vmax.f32 %v719, 0.0
    %v793 = vmax.f32 %v721, 0.0
    %v794 = vmax.f32 %v724, 0.0
    %v795 = vmax.f32 %v726, 0.0
    %v796 = vmax.f32 %v729, 0.0
    %v797 = vmax.f32 %v731, 0.0
    %v798 = vmax.f32 %v734, 0.0
    %v799 = vmax.f32 %v736, 0.0
    %v800 = vmax.f32 %v739, 0.0
    %v801 = vmax.f32 %v741, 0.0
    %v802 = vmax.f32 %v744, 0.0
    %v803 = vmax.f32 %v746, 0.0
    %v804 = vmax.f32 %v749, 0.0
    %v805 = vmax.f32 %v751, 0.0
    %v806 = vmax.f32 %v754, 0.0
    %v807 = vmax.f32 %v756, 0.0
    %v808 = vmax.f32 %v759, 0.0
    %v809 = vmax.f32 %v761, 0.0
    %v810 = vmax.f32 %v764, 0.0
    %v811 = vmax.f32 %v766, 0.0
    %v812 = vmax.f32 %v769, 0.0
    %v813 = vmax.f32 %v771, 0.0
    %v814 = vmax.f32 %v774, 0.0
    %v815 = vmax.f32 %v776, 0.0
    %v816 = vperm.slane %v624, 1
    %v817 = vmul.f32 %v778, %v816
    %v818 = vmul.f32 %v779, %v816
    %v819 = vmul.f32 %v780, %v816
    %v820 = vmul.f32 %v781, %v816
    %v821 = vmul.f32 %v782, %v816
    %v822 = vmul.f32 %v783, %v816
    %v823 = vmul.f32 %v784, %v816
    %v824 = vmul.f32 %v785, %v816
    %v825 = vmul.f32 %v786, %v816
    %v826 = vmul.f32 %v787, %v816
    %v827 = vmul.f32 %v788, %v816
    %v828 = vmul.f32 %v789, %v816
    %v829 = vmul.f32 %v790, %v816
    %v830 = vmul.f32 %v791, %v816
    %v831 = vmul.f32 %v792, %v816
    %v832 = vmul.f32 %v793, %v816
    %v833 = vmul.f32 %v794, %v816
    %v834 = vmul.f32 %v795, %v816
    %v835 = vmul.f32 %v796, %v816
    %v836 = vmul.f32 %v797, %v816
    %v837 = vmul.f32 %v798, %v816
    %v838 = vmul.f32 %v799, %v816
    %v839 = vmul.f32 %v800, %v816
    %v840 = vmul.f32 %v801, %v816
    %v841 = vmul.f32 %v802, %v816
    %v842 = vmul.f32 %v803, %v816
    %v843 = vmul.f32 %v804, %v816
    %v844 = vmul.f32 %v805, %v816
    %v845 = vmul.f32 %v806, %v816
    %v846 = vmul.f32 %v807, %v816
    %v847 = vmul.f32 %v808, %v816
    %v848 = vmul.f32 %v809, %v816
    %v849 = vmul.f32 %v810, %v816
    %v850 = vmul.f32 %v811, %v816
    %v851 = vmul.f32 %v812, %v816
    %v852 = vmul.f32 %v813, %v816
    %v853 = vmul.f32 %v814, %v816
    %v854 = vmul.f32 %v815, %v816
    %v855 = vperm.slane %v624, 2
    %v856 = vadd.f32 %v817, %v855
    %v857 = vadd.f32 %v818, %v855
    %v858 = vadd.f32 %v819, %v855
    %v859 = vadd.f32 %v820, %v855
    %v860 = vadd.f32 %v821, %v855
    %v861 = vadd.f32 %v822, %v855
    %v862 = vadd.f32 %v823, %v855
    %v863 = vadd.f32 %v824, %v855
    %v864 = vadd.f32 %v825, %v855
    %v865 = vadd.f32 %v826, %v855
    %v866 = vadd.f32 %v827, %v855
    %v867 = vadd.f32 %v828, %v855
    %v868 = vadd.f32 %v829, %v855
    %v869 = vadd.f32 %v830, %v855
    %v870 = vadd.f32 %v831, %v855
    %v871 = vadd.f32 %v832, %v855
    %v872 = vadd.f32 %v833, %v855
    %v873 = vadd.f32 %v834, %v855
    %v874 = vadd.f32 %v835, %v855
    %v875 = vadd.f32 %v836, %v855
    %v876 = vadd.f32 %v837, %v855
    %v877 = vadd.f32 %v838, %v855
    %v878 = vadd.f32 %v839, %v855
    %v879 = vadd.f32 %v840, %v855
    %v880 = vadd.f32 %v841, %v855
    %v881 = vadd.f32 %v842, %v855
    %v882 = vadd.f32 %v843, %v855
    %v883 = vadd.f32 %v844, %v855
    %v884 = vadd.f32 %v845, %v855
    %v885 = vadd.f32 %v846, %v855
    %v886 = vadd.f32 %v847, %v855
    %v887 = vadd.f32 %v848, %v855
    %v888 = vadd.f32 %v849, %v855
    %v889 = vadd.f32 %v850, %v855
    %v890 = vadd.f32 %v851, %v855
    %v891 = vadd.f32 %v852, %v855
    %v892 = vadd.f32 %v853, %v855
    %v893 = vadd.f32 %v854, %v855
    %v894 = vadd.f32 %v551, %v856
    %v895 = vadd.f32 %v552, %v857
    %v896 = vadd.f32 %v553, %v858
    %v897 = vadd.f32 %v554, %v859
    %v898 = vadd.f32 %v555, %v860
    %v899 = vadd.f32 %v556, %v861
    %v900 = vadd.f32 %v557, %v862
    %v901 = vadd.f32 %v558, %v863
    %v902 = vadd.f32 %v559, %v864
    %v903 = vadd.f32 %v560, %v865
    %v904 = vadd.f32 %v561, %v866
    %v905 = vadd.f32 %v562, %v867
    %v906 = vadd.f32 %v563, %v868
    %v907 = vadd.f32 %v564, %v869
    %v908 = vadd.f32 %v565, %v870
    %v909 = vadd.f32 %v566, %v871
    %v910 = vadd.f32 %v567, %v872
    %v911 = vadd.f32 %v568, %v873
    %v912 = vadd.f32 %v569, %v874
    %v913 = vadd.f32 %v570, %v875
    %v914 = vadd.f32 %v571, %v876
    %v915 = vadd.f32 %v572, %v877
    %v916 = vadd.f32 %v573, %v878
    %v917 = vadd.f32 %v574, %v879
    %v918 = vadd.f32 %v575, %v880
    %v919 = vadd.f32 %v576, %v881
    %v920 = vadd.f32 %v577, %v882
    %v921 = vadd.f32 %v578, %v883
    %v922 = vadd.f32 %v579, %v884
    %v923 = vadd.f32 %v580, %v885
    %v924 = vadd.f32 %v581, %v886
    %v925 = vadd.f32 %v582, %v887
    %v926 = vadd.f32 %v583, %v888
    %v927 = vadd.f32 %v584, %v889
    %v928 = vadd.f32 %v585, %v890
    %v929 = vadd.f32 %v586, %v891
    %v930 = vadd.f32 %v587, %v892
    %v931 = vadd.f32 %v588, %v893
    %v932 = vpack.c.bf16 %v895, %v894
    %v933 = vpack.c.bf16 %v897, %v896
    %v934 = vpack.c.bf16 %v899, %v898
    %v935 = vpack.c.bf16 %v901, %v900
    %v936 = vpack.c.bf16 %v903, %v902
    %v937 = vpack.c.bf16 %v905, %v904
    %v938 = vpack.c.bf16 %v907, %v906
    %v939 = vpack.c.bf16 %v909, %v908
    %v940 = vpack.c.bf16 %v911, %v910
    %v941 = vpack.c.bf16 %v913, %v912
    %v942 = vpack.c.bf16 %v915, %v914
    %v943 = vpack.c.bf16 %v917, %v916
    %v944 = vpack.c.bf16 %v919, %v918
    %v945 = vpack.c.bf16 %v921, %v920
    %v946 = vpack.c.bf16 %v923, %v922
    %v947 = vpack.c.bf16 %v925, %v924
    %v948 = vpack.c.bf16 %v927, %v926
    %v949 = vpack.c.bf16 %v929, %v928
    %v950 = vpack.c.bf16 %v931, %v930
    %s951 = scalar_lea.vmem %s3, 64
    %v952 = vld [vmem:[%s951] sm:$0xf]
    %v953 = vld [vmem:[%s951 + $0x4] sm:$0xf]
    %v954 = vld [vmem:[%s951 + $0x8] sm:$0xf]
    %v955 = vld [vmem:[%s951 + $0xc] sm:$0xf]
    %v956 = vld [vmem:[%s951 + $0x10] sm:$0xf]
    %v957 = vld [vmem:[%s951 + $0x14] sm:$0xf]
    %v958 = vld [vmem:[%s951 + $0x18] sm:$0xf]
    %v959 = vld [vmem:[%s951 + $0x1c] sm:$0xf]
    %v960 = vld [vmem:[%s951 + $0x20] sm:$0xf]
    %v961 = vld [vmem:[%s951 + $0x24] sm:$0xf]
    %v962 = vld [vmem:[%s951 + $0x28] sm:$0xf]
    %v963 = vld [vmem:[%s951 + $0x2c] sm:$0xf]
    %v964 = vld [vmem:[%s951 + $0x30] sm:$0xf]
    %v965 = vld [vmem:[%s951 + $0x34] sm:$0xf]
    %v966 = vld [vmem:[%s951 + $0x38] sm:$0xf]
    %v967 = vld [vmem:[%s951 + $0x3c] sm:$0xf]
    %s968 = scalar_lea.vmem %s4, 4
    %v969 = vld [vmem:[%s968] sm:$0x7]
    %v970 = vperm.slane %v969, 0
    %v987 = vunpack.c.l.b16 %v952
    %v988 = vunpack.c.l.b16 %v953
    %v989 = vunpack.c.l.b16 %v954
    %v990 = vunpack.c.l.b16 %v955
    %v991 = vunpack.c.l.b16 %v956
    %v992 = vunpack.c.l.b16 %v957
    %v993 = vunpack.c.l.b16 %v958
    %v994 = vunpack.c.l.b16 %v959
    %v995 = vunpack.c.l.b16 %v960
    %v996 = vunpack.c.l.b16 %v961
    %v997 = vunpack.c.l.b16 %v962
    %v998 = vunpack.c.l.b16 %v963
    %v999 = vunpack.c.l.b16 %v964
    %v1000 = vunpack.c.l.b16 %v965
    %v1001 = vunpack.c.l.b16 %v966
    %v1002 = vunpack.c.l.b16 %v967
    %v1003 = vpack.c.b16 %v988, %v987
    %v1004 = vpack.c.b16 %v990, %v989
    %v1005 = vpack.c.b16 %v992, %v991
    %v1006 = vpack.c.b16 %v994, %v993
    %v1007 = vpack.c.b16 %v996, %v995
    %v1008 = vpack.c.b16 %v998, %v997
    %v1009 = vpack.c.b16 %v1000, %v999
    %v1010 = vpack.c.b16 %v1002, %v1001
    %1019 = vmatpush.bf16.msra.mxu0 %v1010
    %1020 = vmatpush.bf16.msra.mxu0 %v1009
    %1021 = vmatpush.bf16.msra.mxu0 %v1008
    %1022 = vmatpush.bf16.msra.mxu0 %v1007
    %1023 = vmatpush.bf16.msra.mxu0 %v1006
    %1024 = vmatpush.bf16.msra.mxu0 %v1005
    %1025 = vmatpush.bf16.msra.mxu0 %v1004
    %1026 = vmatpush.bf16.msra.mxu0 %v1003
    %1027 = vmatmul.bf16.gmra.mxu0 %v932
    %v1028 = vpop.f32.mrf.mxu0
    %v1029 = vadd.f32 %v970, %v1028
    %v1030 = vpop.f32.mrf.mxu0
    %v1031 = vadd.f32 %v970, %v1030
    %1032 = vmatmul.bf16.gmra.mxu0 %v933
    %v1033 = vpop.f32.mrf.mxu0
    %v1034 = vadd.f32 %v970, %v1033
    %v1035 = vpop.f32.mrf.mxu0
    %v1036 = vadd.f32 %v970, %v1035
    %1037 = vmatmul.bf16.gmra.mxu0 %v934
    %v1038 = vpop.f32.mrf.mxu0
    %v1039 = vadd.f32 %v970, %v1038
    %v1040 = vpop.f32.mrf.mxu0
    %v1041 = vadd.f32 %v970, %v1040
    %1042 = vmatmul.bf16.gmra.mxu0 %v935
    %v1043 = vpop.f32.mrf.mxu0
    %v1044 = vadd.f32 %v970, %v1043
    %v1045 = vpop.f32.mrf.mxu0
    %v1046 = vadd.f32 %v970, %v1045
    %1047 = vmatmul.bf16.gmra.mxu0 %v936
    %v1048 = vpop.f32.mrf.mxu0
    %v1049 = vadd.f32 %v970, %v1048
    %v1050 = vpop.f32.mrf.mxu0
    %v1051 = vadd.f32 %v970, %v1050
    %1052 = vmatmul.bf16.gmra.mxu0 %v937
    %v1053 = vpop.f32.mrf.mxu0
    %v1054 = vadd.f32 %v970, %v1053
    %v1055 = vpop.f32.mrf.mxu0
    %v1056 = vadd.f32 %v970, %v1055
    %1057 = vmatmul.bf16.gmra.mxu0 %v938
    %v1058 = vpop.f32.mrf.mxu0
    %v1059 = vadd.f32 %v970, %v1058
    %v1060 = vpop.f32.mrf.mxu0
    %v1061 = vadd.f32 %v970, %v1060
    %1062 = vmatmul.bf16.gmra.mxu0 %v939
    %v1063 = vpop.f32.mrf.mxu0
    %v1064 = vadd.f32 %v970, %v1063
    %v1065 = vpop.f32.mrf.mxu0
    %v1066 = vadd.f32 %v970, %v1065
    %1067 = vmatmul.bf16.gmra.mxu0 %v940
    %v1068 = vpop.f32.mrf.mxu0
    %v1069 = vadd.f32 %v970, %v1068
    %v1070 = vpop.f32.mrf.mxu0
    %v1071 = vadd.f32 %v970, %v1070
    %1072 = vmatmul.bf16.gmra.mxu0 %v941
    %v1073 = vpop.f32.mrf.mxu0
    %v1074 = vadd.f32 %v970, %v1073
    %v1075 = vpop.f32.mrf.mxu0
    %v1076 = vadd.f32 %v970, %v1075
    %1077 = vmatmul.bf16.gmra.mxu0 %v942
    %v1078 = vpop.f32.mrf.mxu0
    %v1079 = vadd.f32 %v970, %v1078
    %v1080 = vpop.f32.mrf.mxu0
    %v1081 = vadd.f32 %v970, %v1080
    %1082 = vmatmul.bf16.gmra.mxu0 %v943
    %v1083 = vpop.f32.mrf.mxu0
    %v1084 = vadd.f32 %v970, %v1083
    %v1085 = vpop.f32.mrf.mxu0
    %v1086 = vadd.f32 %v970, %v1085
    %1087 = vmatmul.bf16.gmra.mxu0 %v944
    %v1088 = vpop.f32.mrf.mxu0
    %v1089 = vadd.f32 %v970, %v1088
    %v1090 = vpop.f32.mrf.mxu0
    %v1091 = vadd.f32 %v970, %v1090
    %1092 = vmatmul.bf16.gmra.mxu0 %v945
    %v1093 = vpop.f32.mrf.mxu0
    %v1094 = vadd.f32 %v970, %v1093
    %v1095 = vpop.f32.mrf.mxu0
    %v1096 = vadd.f32 %v970, %v1095
    %1097 = vmatmul.bf16.gmra.mxu0 %v946
    %v1098 = vpop.f32.mrf.mxu0
    %v1099 = vadd.f32 %v970, %v1098
    %v1100 = vpop.f32.mrf.mxu0
    %v1101 = vadd.f32 %v970, %v1100
    %1102 = vmatmul.bf16.gmra.mxu0 %v947
    %v1103 = vpop.f32.mrf.mxu0
    %v1104 = vadd.f32 %v970, %v1103
    %v1105 = vpop.f32.mrf.mxu0
    %v1106 = vadd.f32 %v970, %v1105
    %1107 = vmatmul.bf16.gmra.mxu0 %v948
    %v1108 = vpop.f32.mrf.mxu0
    %v1109 = vadd.f32 %v970, %v1108
    %v1110 = vpop.f32.mrf.mxu0
    %v1111 = vadd.f32 %v970, %v1110
    %1112 = vmatmul.bf16.gmra.mxu0 %v949
    %v1113 = vpop.f32.mrf.mxu0
    %v1114 = vadd.f32 %v970, %v1113
    %v1115 = vpop.f32.mrf.mxu0
    %v1116 = vadd.f32 %v970, %v1115
    %1117 = vmatmul.bf16.gmra.mxu0 %v950
    %v1118 = vpop.f32.mrf.mxu0
    %v1119 = vadd.f32 %v970, %v1118
    %v1120 = vpop.f32.mrf.mxu0
    %v1121 = vadd.f32 %v970, %v1120
    %1122 = vdwg.mxu0
    %v1123 = vmax.f32 %v1029, 0.0
    %v1124 = vmax.f32 %v1031, 0.0
    %v1125 = vmax.f32 %v1034, 0.0
    %v1126 = vmax.f32 %v1036, 0.0
    %v1127 = vmax.f32 %v1039, 0.0
    %v1128 = vmax.f32 %v1041, 0.0
    %v1129 = vmax.f32 %v1044, 0.0
    %v1130 = vmax.f32 %v1046, 0.0
    %v1131 = vmax.f32 %v1049, 0.0
    %v1132 = vmax.f32 %v1051, 0.0
    %v1133 = vmax.f32 %v1054, 0.0
    %v1134 = vmax.f32 %v1056, 0.0
    %v1135 = vmax.f32 %v1059, 0.0
    %v1136 = vmax.f32 %v1061, 0.0
    %v1137 = vmax.f32 %v1064, 0.0
    %v1138 = vmax.f32 %v1066, 0.0
    %v1139 = vmax.f32 %v1069, 0.0
    %v1140 = vmax.f32 %v1071, 0.0
    %v1141 = vmax.f32 %v1074, 0.0
    %v1142 = vmax.f32 %v1076, 0.0
    %v1143 = vmax.f32 %v1079, 0.0
    %v1144 = vmax.f32 %v1081, 0.0
    %v1145 = vmax.f32 %v1084, 0.0
    %v1146 = vmax.f32 %v1086, 0.0
    %v1147 = vmax.f32 %v1089, 0.0
    %v1148 = vmax.f32 %v1091, 0.0
    %v1149 = vmax.f32 %v1094, 0.0
    %v1150 = vmax.f32 %v1096, 0.0
    %v1151 = vmax.f32 %v1099, 0.0
    %v1152 = vmax.f32 %v1101, 0.0
    %v1153 = vmax.f32 %v1104, 0.0
    %v1154 = vmax.f32 %v1106, 0.0
    %v1155 = vmax.f32 %v1109, 0.0
    %v1156 = vmax.f32 %v1111, 0.0
    %v1157 = vmax.f32 %v1114, 0.0
    %v1158 = vmax.f32 %v1116, 0.0
    %v1159 = vmax.f32 %v1119, 0.0
    %v1160 = vmax.f32 %v1121, 0.0
    %v1161 = vperm.slane %v969, 1
    %v1162 = vmul.f32 %v1123, %v1161
    %v1163 = vmul.f32 %v1124, %v1161
    %v1164 = vmul.f32 %v1125, %v1161
    %v1165 = vmul.f32 %v1126, %v1161
    %v1166 = vmul.f32 %v1127, %v1161
    %v1167 = vmul.f32 %v1128, %v1161
    %v1168 = vmul.f32 %v1129, %v1161
    %v1169 = vmul.f32 %v1130, %v1161
    %v1170 = vmul.f32 %v1131, %v1161
    %v1171 = vmul.f32 %v1132, %v1161
    %v1172 = vmul.f32 %v1133, %v1161
    %v1173 = vmul.f32 %v1134, %v1161
    %v1174 = vmul.f32 %v1135, %v1161
    %v1175 = vmul.f32 %v1136, %v1161
    %v1176 = vmul.f32 %v1137, %v1161
    %v1177 = vmul.f32 %v1138, %v1161
    %v1178 = vmul.f32 %v1139, %v1161
    %v1179 = vmul.f32 %v1140, %v1161
    %v1180 = vmul.f32 %v1141, %v1161
    %v1181 = vmul.f32 %v1142, %v1161
    %v1182 = vmul.f32 %v1143, %v1161
    %v1183 = vmul.f32 %v1144, %v1161
    %v1184 = vmul.f32 %v1145, %v1161
    %v1185 = vmul.f32 %v1146, %v1161
    %v1186 = vmul.f32 %v1147, %v1161
    %v1187 = vmul.f32 %v1148, %v1161
    %v1188 = vmul.f32 %v1149, %v1161
    %v1189 = vmul.f32 %v1150, %v1161
    %v1190 = vmul.f32 %v1151, %v1161
    %v1191 = vmul.f32 %v1152, %v1161
    %v1192 = vmul.f32 %v1153, %v1161
    %v1193 = vmul.f32 %v1154, %v1161
    %v1194 = vmul.f32 %v1155, %v1161
    %v1195 = vmul.f32 %v1156, %v1161
    %v1196 = vmul.f32 %v1157, %v1161
    %v1197 = vmul.f32 %v1158, %v1161
    %v1198 = vmul.f32 %v1159, %v1161
    %v1199 = vmul.f32 %v1160, %v1161
    %v1200 = vperm.slane %v969, 2
    %v1201 = vadd.f32 %v1162, %v1200
    %v1202 = vadd.f32 %v1163, %v1200
    %v1203 = vadd.f32 %v1164, %v1200
    %v1204 = vadd.f32 %v1165, %v1200
    %v1205 = vadd.f32 %v1166, %v1200
    %v1206 = vadd.f32 %v1167, %v1200
    %v1207 = vadd.f32 %v1168, %v1200
    %v1208 = vadd.f32 %v1169, %v1200
    %v1209 = vadd.f32 %v1170, %v1200
    %v1210 = vadd.f32 %v1171, %v1200
    %v1211 = vadd.f32 %v1172, %v1200
    %v1212 = vadd.f32 %v1173, %v1200
    %v1213 = vadd.f32 %v1174, %v1200
    %v1214 = vadd.f32 %v1175, %v1200
    %v1215 = vadd.f32 %v1176, %v1200
    %v1216 = vadd.f32 %v1177, %v1200
    %v1217 = vadd.f32 %v1178, %v1200
    %v1218 = vadd.f32 %v1179, %v1200
    %v1219 = vadd.f32 %v1180, %v1200
    %v1220 = vadd.f32 %v1181, %v1200
    %v1221 = vadd.f32 %v1182, %v1200
    %v1222 = vadd.f32 %v1183, %v1200
    %v1223 = vadd.f32 %v1184, %v1200
    %v1224 = vadd.f32 %v1185, %v1200
    %v1225 = vadd.f32 %v1186, %v1200
    %v1226 = vadd.f32 %v1187, %v1200
    %v1227 = vadd.f32 %v1188, %v1200
    %v1228 = vadd.f32 %v1189, %v1200
    %v1229 = vadd.f32 %v1190, %v1200
    %v1230 = vadd.f32 %v1191, %v1200
    %v1231 = vadd.f32 %v1192, %v1200
    %v1232 = vadd.f32 %v1193, %v1200
    %v1233 = vadd.f32 %v1194, %v1200
    %v1234 = vadd.f32 %v1195, %v1200
    %v1235 = vadd.f32 %v1196, %v1200
    %v1236 = vadd.f32 %v1197, %v1200
    %v1237 = vadd.f32 %v1198, %v1200
    %v1238 = vadd.f32 %v1199, %v1200
    %v1239 = vadd.f32 %v894, %v1201
    %v1240 = vadd.f32 %v895, %v1202
    %v1241 = vadd.f32 %v896, %v1203
    %v1242 = vadd.f32 %v897, %v1204
    %v1243 = vadd.f32 %v898, %v1205
    %v1244 = vadd.f32 %v899, %v1206
    %v1245 = vadd.f32 %v900, %v1207
    %v1246 = vadd.f32 %v901, %v1208
    %v1247 = vadd.f32 %v902, %v1209
    %v1248 = vadd.f32 %v903, %v1210
    %v1249 = vadd.f32 %v904, %v1211
    %v1250 = vadd.f32 %v905, %v1212
    %v1251 = vadd.f32 %v906, %v1213
    %v1252 = vadd.f32 %v907, %v1214
    %v1253 = vadd.f32 %v908, %v1215
    %v1254 = vadd.f32 %v909, %v1216
    %v1255 = vadd.f32 %v910, %v1217
    %v1256 = vadd.f32 %v911, %v1218
    %v1257 = vadd.f32 %v912, %v1219
    %v1258 = vadd.f32 %v913, %v1220
    %v1259 = vadd.f32 %v914, %v1221
    %v1260 = vadd.f32 %v915, %v1222
    %v1261 = vadd.f32 %v916, %v1223
    %v1262 = vadd.f32 %v917, %v1224
    %v1263 = vadd.f32 %v918, %v1225
    %v1264 = vadd.f32 %v919, %v1226
    %v1265 = vadd.f32 %v920, %v1227
    %v1266 = vadd.f32 %v921, %v1228
    %v1267 = vadd.f32 %v922, %v1229
    %v1268 = vadd.f32 %v923, %v1230
    %v1269 = vadd.f32 %v924, %v1231
    %v1270 = vadd.f32 %v925, %v1232
    %v1271 = vadd.f32 %v926, %v1233
    %v1272 = vadd.f32 %v927, %v1234
    %v1273 = vadd.f32 %v928, %v1235
    %v1274 = vadd.f32 %v929, %v1236
    %v1275 = vadd.f32 %v930, %v1237
    %v1276 = vadd.f32 %v931, %v1238
    %v1277 = vpack.c.bf16 %v1240, %v1239
    %v1278 = vpack.c.bf16 %v1242, %v1241
    %v1279 = vpack.c.bf16 %v1244, %v1243
    %v1280 = vpack.c.bf16 %v1246, %v1245
    %v1281 = vpack.c.bf16 %v1248, %v1247
    %v1282 = vpack.c.bf16 %v1250, %v1249
    %v1283 = vpack.c.bf16 %v1252, %v1251
    %v1284 = vpack.c.bf16 %v1254, %v1253
    %v1285 = vpack.c.bf16 %v1256, %v1255
    %v1286 = vpack.c.bf16 %v1258, %v1257
    %v1287 = vpack.c.bf16 %v1260, %v1259
    %v1288 = vpack.c.bf16 %v1262, %v1261
    %v1289 = vpack.c.bf16 %v1264, %v1263
    %v1290 = vpack.c.bf16 %v1266, %v1265
    %v1291 = vpack.c.bf16 %v1268, %v1267
    %v1292 = vpack.c.bf16 %v1270, %v1269
    %v1293 = vpack.c.bf16 %v1272, %v1271
    %v1294 = vpack.c.bf16 %v1274, %v1273
    %v1295 = vpack.c.bf16 %v1276, %v1275
    %s1296 = scalar_lea.vmem %s3, 128
    %v1297 = vld [vmem:[%s1296] sm:$0xf]
    %v1298 = vld [vmem:[%s1296 + $0x4] sm:$0xf]
    %v1299 = vld [vmem:[%s1296 + $0x8] sm:$0xf]
    %v1300 = vld [vmem:[%s1296 + $0xc] sm:$0xf]
    %v1301 = vld [vmem:[%s1296 + $0x10] sm:$0xf]
    %v1302 = vld [vmem:[%s1296 + $0x14] sm:$0xf]
    %v1303 = vld [vmem:[%s1296 + $0x18] sm:$0xf]
    %v1304 = vld [vmem:[%s1296 + $0x1c] sm:$0xf]
    %v1305 = vld [vmem:[%s1296 + $0x20] sm:$0xf]
    %v1306 = vld [vmem:[%s1296 + $0x24] sm:$0xf]
    %v1307 = vld [vmem:[%s1296 + $0x28] sm:$0xf]
    %v1308 = vld [vmem:[%s1296 + $0x2c] sm:$0xf]
    %v1309 = vld [vmem:[%s1296 + $0x30] sm:$0xf]
    %v1310 = vld [vmem:[%s1296 + $0x34] sm:$0xf]
    %v1311 = vld [vmem:[%s1296 + $0x38] sm:$0xf]
    %v1312 = vld [vmem:[%s1296 + $0x3c] sm:$0xf]
    %s1313 = scalar_lea.vmem %s4, 8
    %v1314 = vld [vmem:[%s1313] sm:$0x7]
    %v1315 = vperm.slane %v1314, 0
    %v1332 = vunpack.c.l.b16 %v1297
    %v1333 = vunpack.c.l.b16 %v1298
    %v1334 = vunpack.c.l.b16 %v1299
    %v1335 = vunpack.c.l.b16 %v1300
    %v1336 = vunpack.c.l.b16 %v1301
    %v1337 = vunpack.c.l.b16 %v1302
    %v1338 = vunpack.c.l.b16 %v1303
    %v1339 = vunpack.c.l.b16 %v1304
    %v1340 = vunpack.c.l.b16 %v1305
    %v1341 = vunpack.c.l.b16 %v1306
    %v1342 = vunpack.c.l.b16 %v1307
    %v1343 = vunpack.c.l.b16 %v1308
    %v1344 = vunpack.c.l.b16 %v1309
    %v1345 = vunpack.c.l.b16 %v1310
    %v1346 = vunpack.c.l.b16 %v1311
    %v1347 = vunpack.c.l.b16 %v1312
    %v1348 = vpack.c.b16 %v1333, %v1332
    %v1349 = vpack.c.b16 %v1335, %v1334
    %v1350 = vpack.c.b16 %v1337, %v1336
    %v1351 = vpack.c.b16 %v1339, %v1338
    %v1352 = vpack.c.b16 %v1341, %v1340
    %v1353 = vpack.c.b16 %v1343, %v1342
    %v1354 = vpack.c.b16 %v1345, %v1344
    %v1355 = vpack.c.b16 %v1347, %v1346
    %1364 = vmatpush.bf16.msra.mxu0 %v1355
    %1365 = vmatpush.bf16.msra.mxu0 %v1354
    %1366 = vmatpush.bf16.msra.mxu0 %v1353
    %1367 = vmatpush.bf16.msra.mxu0 %v1352
    %1368 = vmatpush.bf16.msra.mxu0 %v1351
    %1369 = vmatpush.bf16.msra.mxu0 %v1350
    %1370 = vmatpush.bf16.msra.mxu0 %v1349
    %1371 = vmatpush.bf16.msra.mxu0 %v1348
    %1372 = vmatmul.bf16.gmra.mxu0 %v1277
    %v1373 = vpop.f32.mrf.mxu0
    %v1374 = vadd.f32 %v1315, %v1373
    %v1375 = vpop.f32.mrf.mxu0
    %v1376 = vadd.f32 %v1315, %v1375
    %1377 = vmatmul.bf16.gmra.mxu0 %v1278
    %v1378 = vpop.f32.mrf.mxu0
    %v1379 = vadd.f32 %v1315, %v1378
    %v1380 = vpop.f32.mrf.mxu0
    %v1381 = vadd.f32 %v1315, %v1380
    %1382 = vmatmul.bf16.gmra.mxu0 %v1279
    %v1383 = vpop.f32.mrf.mxu0
    %v1384 = vadd.f32 %v1315, %v1383
    %v1385 = vpop.f32.mrf.mxu0
    %v1386 = vadd.f32 %v1315, %v1385
    %1387 = vmatmul.bf16.gmra.mxu0 %v1280
    %v1388 = vpop.f32.mrf.mxu0
    %v1389 = vadd.f32 %v1315, %v1388
    %v1390 = vpop.f32.mrf.mxu0
    %v1391 = vadd.f32 %v1315, %v1390
    %1392 = vmatmul.bf16.gmra.mxu0 %v1281
    %v1393 = vpop.f32.mrf.mxu0
    %v1394 = vadd.f32 %v1315, %v1393
    %v1395 = vpop.f32.mrf.mxu0
    %v1396 = vadd.f32 %v1315, %v1395
    %1397 = vmatmul.bf16.gmra.mxu0 %v1282
    %v1398 = vpop.f32.mrf.mxu0
    %v1399 = vadd.f32 %v1315, %v1398
    %v1400 = vpop.f32.mrf.mxu0
    %v1401 = vadd.f32 %v1315, %v1400
    %1402 = vmatmul.bf16.gmra.mxu0 %v1283
    %v1403 = vpop.f32.mrf.mxu0
    %v1404 = vadd.f32 %v1315, %v1403
    %v1405 = vpop.f32.mrf.mxu0
    %v1406 = vadd.f32 %v1315, %v1405
    %1407 = vmatmul.bf16.gmra.mxu0 %v1284
    %v1408 = vpop.f32.mrf.mxu0
    %v1409 = vadd.f32 %v1315, %v1408
    %v1410 = vpop.f32.mrf.mxu0
    %v1411 = vadd.f32 %v1315, %v1410
    %1412 = vmatmul.bf16.gmra.mxu0 %v1285
    %v1413 = vpop.f32.mrf.mxu0
    %v1414 = vadd.f32 %v1315, %v1413
    %v1415 = vpop.f32.mrf.mxu0
    %v1416 = vadd.f32 %v1315, %v1415
    %1417 = vmatmul.bf16.gmra.mxu0 %v1286
    %v1418 = vpop.f32.mrf.mxu0
    %v1419 = vadd.f32 %v1315, %v1418
    %v1420 = vpop.f32.mrf.mxu0
    %v1421 = vadd.f32 %v1315, %v1420
    %1422 = vmatmul.bf16.gmra.mxu0 %v1287
    %v1423 = vpop.f32.mrf.mxu0
    %v1424 = vadd.f32 %v1315, %v1423
    %v1425 = vpop.f32.mrf.mxu0
    %v1426 = vadd.f32 %v1315, %v1425
    %1427 = vmatmul.bf16.gmra.mxu0 %v1288
    %v1428 = vpop.f32.mrf.mxu0
    %v1429 = vadd.f32 %v1315, %v1428
    %v1430 = vpop.f32.mrf.mxu0
    %v1431 = vadd.f32 %v1315, %v1430
    %1432 = vmatmul.bf16.gmra.mxu0 %v1289
    %v1433 = vpop.f32.mrf.mxu0
    %v1434 = vadd.f32 %v1315, %v1433
    %v1435 = vpop.f32.mrf.mxu0
    %v1436 = vadd.f32 %v1315, %v1435
    %1437 = vmatmul.bf16.gmra.mxu0 %v1290
    %v1438 = vpop.f32.mrf.mxu0
    %v1439 = vadd.f32 %v1315, %v1438
    %v1440 = vpop.f32.mrf.mxu0
    %v1441 = vadd.f32 %v1315, %v1440
    %1442 = vmatmul.bf16.gmra.mxu0 %v1291
    %v1443 = vpop.f32.mrf.mxu0
    %v1444 = vadd.f32 %v1315, %v1443
    %v1445 = vpop.f32.mrf.mxu0
    %v1446 = vadd.f32 %v1315, %v1445
    %1447 = vmatmul.bf16.gmra.mxu0 %v1292
    %v1448 = vpop.f32.mrf.mxu0
    %v1449 = vadd.f32 %v1315, %v1448
    %v1450 = vpop.f32.mrf.mxu0
    %v1451 = vadd.f32 %v1315, %v1450
    %1452 = vmatmul.bf16.gmra.mxu0 %v1293
    %v1453 = vpop.f32.mrf.mxu0
    %v1454 = vadd.f32 %v1315, %v1453
    %v1455 = vpop.f32.mrf.mxu0
    %v1456 = vadd.f32 %v1315, %v1455
    %1457 = vmatmul.bf16.gmra.mxu0 %v1294
    %v1458 = vpop.f32.mrf.mxu0
    %v1459 = vadd.f32 %v1315, %v1458
    %v1460 = vpop.f32.mrf.mxu0
    %v1461 = vadd.f32 %v1315, %v1460
    %1462 = vmatmul.bf16.gmra.mxu0 %v1295
    %v1463 = vpop.f32.mrf.mxu0
    %v1464 = vadd.f32 %v1315, %v1463
    %v1465 = vpop.f32.mrf.mxu0
    %v1466 = vadd.f32 %v1315, %v1465
    %1467 = vdwg.mxu0
    %v1468 = vmax.f32 %v1374, 0.0
    %v1469 = vmax.f32 %v1376, 0.0
    %v1470 = vmax.f32 %v1379, 0.0
    %v1471 = vmax.f32 %v1381, 0.0
    %v1472 = vmax.f32 %v1384, 0.0
    %v1473 = vmax.f32 %v1386, 0.0
    %v1474 = vmax.f32 %v1389, 0.0
    %v1475 = vmax.f32 %v1391, 0.0
    %v1476 = vmax.f32 %v1394, 0.0
    %v1477 = vmax.f32 %v1396, 0.0
    %v1478 = vmax.f32 %v1399, 0.0
    %v1479 = vmax.f32 %v1401, 0.0
    %v1480 = vmax.f32 %v1404, 0.0
    %v1481 = vmax.f32 %v1406, 0.0
    %v1482 = vmax.f32 %v1409, 0.0
    %v1483 = vmax.f32 %v1411, 0.0
    %v1484 = vmax.f32 %v1414, 0.0
    %v1485 = vmax.f32 %v1416, 0.0
    %v1486 = vmax.f32 %v1419, 0.0
    %v1487 = vmax.f32 %v1421, 0.0
    %v1488 = vmax.f32 %v1424, 0.0
    %v1489 = vmax.f32 %v1426, 0.0
    %v1490 = vmax.f32 %v1429, 0.0
    %v1491 = vmax.f32 %v1431, 0.0
    %v1492 = vmax.f32 %v1434, 0.0
    %v1493 = vmax.f32 %v1436, 0.0
    %v1494 = vmax.f32 %v1439, 0.0
    %v1495 = vmax.f32 %v1441, 0.0
    %v1496 = vmax.f32 %v1444, 0.0
    %v1497 = vmax.f32 %v1446, 0.0
    %v1498 = vmax.f32 %v1449, 0.0
    %v1499 = vmax.f32 %v1451, 0.0
    %v1500 = vmax.f32 %v1454, 0.0
    %v1501 = vmax.f32 %v1456, 0.0
    %v1502 = vmax.f32 %v1459, 0.0
    %v1503 = vmax.f32 %v1461, 0.0
    %v1504 = vmax.f32 %v1464, 0.0
    %v1505 = vmax.f32 %v1466, 0.0
    %v1506 = vperm.slane %v1314, 1
    %v1507 = vmul.f32 %v1468, %v1506
    %v1508 = vmul.f32 %v1469, %v1506
    %v1509 = vmul.f32 %v1470, %v1506
    %v1510 = vmul.f32 %v1471, %v1506
    %v1511 = vmul.f32 %v1472, %v1506
    %v1512 = vmul.f32 %v1473, %v1506
    %v1513 = vmul.f32 %v1474, %v1506
    %v1514 = vmul.f32 %v1475, %v1506
    %v1515 = vmul.f32 %v1476, %v1506
    %v1516 = vmul.f32 %v1477, %v1506
    %v1517 = vmul.f32 %v1478, %v1506
    %v1518 = vmul.f32 %v1479, %v1506
    %v1519 = vmul.f32 %v1480, %v1506
    %v1520 = vmul.f32 %v1481, %v1506
    %v1521 = vmul.f32 %v1482, %v1506
    %v1522 = vmul.f32 %v1483, %v1506
    %v1523 = vmul.f32 %v1484, %v1506
    %v1524 = vmul.f32 %v1485, %v1506
    %v1525 = vmul.f32 %v1486, %v1506
    %v1526 = vmul.f32 %v1487, %v1506
    %v1527 = vmul.f32 %v1488, %v1506
    %v1528 = vmul.f32 %v1489, %v1506
    %v1529 = vmul.f32 %v1490, %v1506
    %v1530 = vmul.f32 %v1491, %v1506
    %v1531 = vmul.f32 %v1492, %v1506
    %v1532 = vmul.f32 %v1493, %v1506
    %v1533 = vmul.f32 %v1494, %v1506
    %v1534 = vmul.f32 %v1495, %v1506
    %v1535 = vmul.f32 %v1496, %v1506
    %v1536 = vmul.f32 %v1497, %v1506
    %v1537 = vmul.f32 %v1498, %v1506
    %v1538 = vmul.f32 %v1499, %v1506
    %v1539 = vmul.f32 %v1500, %v1506
    %v1540 = vmul.f32 %v1501, %v1506
    %v1541 = vmul.f32 %v1502, %v1506
    %v1542 = vmul.f32 %v1503, %v1506
    %v1543 = vmul.f32 %v1504, %v1506
    %v1544 = vmul.f32 %v1505, %v1506
    %v1545 = vperm.slane %v1314, 2
    %v1546 = vadd.f32 %v1507, %v1545
    %v1547 = vadd.f32 %v1508, %v1545
    %v1548 = vadd.f32 %v1509, %v1545
    %v1549 = vadd.f32 %v1510, %v1545
    %v1550 = vadd.f32 %v1511, %v1545
    %v1551 = vadd.f32 %v1512, %v1545
    %v1552 = vadd.f32 %v1513, %v1545
    %v1553 = vadd.f32 %v1514, %v1545
    %v1554 = vadd.f32 %v1515, %v1545
    %v1555 = vadd.f32 %v1516, %v1545
    %v1556 = vadd.f32 %v1517, %v1545
    %v1557 = vadd.f32 %v1518, %v1545
    %v1558 = vadd.f32 %v1519, %v1545
    %v1559 = vadd.f32 %v1520, %v1545
    %v1560 = vadd.f32 %v1521, %v1545
    %v1561 = vadd.f32 %v1522, %v1545
    %v1562 = vadd.f32 %v1523, %v1545
    %v1563 = vadd.f32 %v1524, %v1545
    %v1564 = vadd.f32 %v1525, %v1545
    %v1565 = vadd.f32 %v1526, %v1545
    %v1566 = vadd.f32 %v1527, %v1545
    %v1567 = vadd.f32 %v1528, %v1545
    %v1568 = vadd.f32 %v1529, %v1545
    %v1569 = vadd.f32 %v1530, %v1545
    %v1570 = vadd.f32 %v1531, %v1545
    %v1571 = vadd.f32 %v1532, %v1545
    %v1572 = vadd.f32 %v1533, %v1545
    %v1573 = vadd.f32 %v1534, %v1545
    %v1574 = vadd.f32 %v1535, %v1545
    %v1575 = vadd.f32 %v1536, %v1545
    %v1576 = vadd.f32 %v1537, %v1545
    %v1577 = vadd.f32 %v1538, %v1545
    %v1578 = vadd.f32 %v1539, %v1545
    %v1579 = vadd.f32 %v1540, %v1545
    %v1580 = vadd.f32 %v1541, %v1545
    %v1581 = vadd.f32 %v1542, %v1545
    %v1582 = vadd.f32 %v1543, %v1545
    %v1583 = vadd.f32 %v1544, %v1545
    %v1584 = vadd.f32 %v1239, %v1546
    %v1585 = vadd.f32 %v1240, %v1547
    %v1586 = vadd.f32 %v1241, %v1548
    %v1587 = vadd.f32 %v1242, %v1549
    %v1588 = vadd.f32 %v1243, %v1550
    %v1589 = vadd.f32 %v1244, %v1551
    %v1590 = vadd.f32 %v1245, %v1552
    %v1591 = vadd.f32 %v1246, %v1553
    %v1592 = vadd.f32 %v1247, %v1554
    %v1593 = vadd.f32 %v1248, %v1555
    %v1594 = vadd.f32 %v1249, %v1556
    %v1595 = vadd.f32 %v1250, %v1557
    %v1596 = vadd.f32 %v1251, %v1558
    %v1597 = vadd.f32 %v1252, %v1559
    %v1598 = vadd.f32 %v1253, %v1560
    %v1599 = vadd.f32 %v1254, %v1561
    %v1600 = vadd.f32 %v1255, %v1562
    %v1601 = vadd.f32 %v1256, %v1563
    %v1602 = vadd.f32 %v1257, %v1564
    %v1603 = vadd.f32 %v1258, %v1565
    %v1604 = vadd.f32 %v1259, %v1566
    %v1605 = vadd.f32 %v1260, %v1567
    %v1606 = vadd.f32 %v1261, %v1568
    %v1607 = vadd.f32 %v1262, %v1569
    %v1608 = vadd.f32 %v1263, %v1570
    %v1609 = vadd.f32 %v1264, %v1571
    %v1610 = vadd.f32 %v1265, %v1572
    %v1611 = vadd.f32 %v1266, %v1573
    %v1612 = vadd.f32 %v1267, %v1574
    %v1613 = vadd.f32 %v1268, %v1575
    %v1614 = vadd.f32 %v1269, %v1576
    %v1615 = vadd.f32 %v1270, %v1577
    %v1616 = vadd.f32 %v1271, %v1578
    %v1617 = vadd.f32 %v1272, %v1579
    %v1618 = vadd.f32 %v1273, %v1580
    %v1619 = vadd.f32 %v1274, %v1581
    %v1620 = vadd.f32 %v1275, %v1582
    %v1621 = vadd.f32 %v1276, %v1583
    %v1622 = vpack.c.bf16 %v1585, %v1584
    %v1623 = vpack.c.bf16 %v1587, %v1586
    %v1624 = vpack.c.bf16 %v1589, %v1588
    %v1625 = vpack.c.bf16 %v1591, %v1590
    %v1626 = vpack.c.bf16 %v1593, %v1592
    %v1627 = vpack.c.bf16 %v1595, %v1594
    %v1628 = vpack.c.bf16 %v1597, %v1596
    %v1629 = vpack.c.bf16 %v1599, %v1598
    %v1630 = vpack.c.bf16 %v1601, %v1600
    %v1631 = vpack.c.bf16 %v1603, %v1602
    %v1632 = vpack.c.bf16 %v1605, %v1604
    %v1633 = vpack.c.bf16 %v1607, %v1606
    %v1634 = vpack.c.bf16 %v1609, %v1608
    %v1635 = vpack.c.bf16 %v1611, %v1610
    %v1636 = vpack.c.bf16 %v1613, %v1612
    %v1637 = vpack.c.bf16 %v1615, %v1614
    %v1638 = vpack.c.bf16 %v1617, %v1616
    %v1639 = vpack.c.bf16 %v1619, %v1618
    %v1640 = vpack.c.bf16 %v1621, %v1620
    %s1641 = scalar_lea.vmem %s3, 192
    %v1642 = vld [vmem:[%s1641] sm:$0xf]
    %v1643 = vld [vmem:[%s1641 + $0x4] sm:$0xf]
    %v1644 = vld [vmem:[%s1641 + $0x8] sm:$0xf]
    %v1645 = vld [vmem:[%s1641 + $0xc] sm:$0xf]
    %v1646 = vld [vmem:[%s1641 + $0x10] sm:$0xf]
    %v1647 = vld [vmem:[%s1641 + $0x14] sm:$0xf]
    %v1648 = vld [vmem:[%s1641 + $0x18] sm:$0xf]
    %v1649 = vld [vmem:[%s1641 + $0x1c] sm:$0xf]
    %v1650 = vld [vmem:[%s1641 + $0x20] sm:$0xf]
    %v1651 = vld [vmem:[%s1641 + $0x24] sm:$0xf]
    %v1652 = vld [vmem:[%s1641 + $0x28] sm:$0xf]
    %v1653 = vld [vmem:[%s1641 + $0x2c] sm:$0xf]
    %v1654 = vld [vmem:[%s1641 + $0x30] sm:$0xf]
    %v1655 = vld [vmem:[%s1641 + $0x34] sm:$0xf]
    %v1656 = vld [vmem:[%s1641 + $0x38] sm:$0xf]
    %v1657 = vld [vmem:[%s1641 + $0x3c] sm:$0xf]
    %s1658 = scalar_lea.vmem %s4, 12
    %v1659 = vld [vmem:[%s1658] sm:$0x7]
    %v1660 = vperm.slane %v1659, 0
    %v1677 = vunpack.c.l.b16 %v1642
    %v1678 = vunpack.c.l.b16 %v1643
    %v1679 = vunpack.c.l.b16 %v1644
    %v1680 = vunpack.c.l.b16 %v1645
    %v1681 = vunpack.c.l.b16 %v1646
    %v1682 = vunpack.c.l.b16 %v1647
    %v1683 = vunpack.c.l.b16 %v1648
    %v1684 = vunpack.c.l.b16 %v1649
    %v1685 = vunpack.c.l.b16 %v1650
    %v1686 = vunpack.c.l.b16 %v1651
    %v1687 = vunpack.c.l.b16 %v1652
    %v1688 = vunpack.c.l.b16 %v1653
    %v1689 = vunpack.c.l.b16 %v1654
    %v1690 = vunpack.c.l.b16 %v1655
    %v1691 = vunpack.c.l.b16 %v1656
    %v1692 = vunpack.c.l.b16 %v1657
    %v1693 = vpack.c.b16 %v1678, %v1677
    %v1694 = vpack.c.b16 %v1680, %v1679
    %v1695 = vpack.c.b16 %v1682, %v1681
    %v1696 = vpack.c.b16 %v1684, %v1683
    %v1697 = vpack.c.b16 %v1686, %v1685
    %v1698 = vpack.c.b16 %v1688, %v1687
    %v1699 = vpack.c.b16 %v1690, %v1689
    %v1700 = vpack.c.b16 %v1692, %v1691
    %1709 = vmatpush.bf16.msra.mxu0 %v1700
    %1710 = vmatpush.bf16.msra.mxu0 %v1699
    %1711 = vmatpush.bf16.msra.mxu0 %v1698
    %1712 = vmatpush.bf16.msra.mxu0 %v1697
    %1713 = vmatpush.bf16.msra.mxu0 %v1696
    %1714 = vmatpush.bf16.msra.mxu0 %v1695
    %1715 = vmatpush.bf16.msra.mxu0 %v1694
    %1716 = vmatpush.bf16.msra.mxu0 %v1693
    %1717 = vmatmul.bf16.gmra.mxu0 %v1622
    %v1718 = vpop.f32.mrf.mxu0
    %v1719 = vadd.f32 %v1660, %v1718
    %v1720 = vpop.f32.mrf.mxu0
    %v1721 = vadd.f32 %v1660, %v1720
    %1722 = vmatmul.bf16.gmra.mxu0 %v1623
    %v1723 = vpop.f32.mrf.mxu0
    %v1724 = vadd.f32 %v1660, %v1723
    %v1725 = vpop.f32.mrf.mxu0
    %v1726 = vadd.f32 %v1660, %v1725
    %1727 = vmatmul.bf16.gmra.mxu0 %v1624
    %v1728 = vpop.f32.mrf.mxu0
    %v1729 = vadd.f32 %v1660, %v1728
    %v1730 = vpop.f32.mrf.mxu0
    %v1731 = vadd.f32 %v1660, %v1730
    %1732 = vmatmul.bf16.gmra.mxu0 %v1625
    %v1733 = vpop.f32.mrf.mxu0
    %v1734 = vadd.f32 %v1660, %v1733
    %v1735 = vpop.f32.mrf.mxu0
    %v1736 = vadd.f32 %v1660, %v1735
    %1737 = vmatmul.bf16.gmra.mxu0 %v1626
    %v1738 = vpop.f32.mrf.mxu0
    %v1739 = vadd.f32 %v1660, %v1738
    %v1740 = vpop.f32.mrf.mxu0
    %v1741 = vadd.f32 %v1660, %v1740
    %1742 = vmatmul.bf16.gmra.mxu0 %v1627
    %v1743 = vpop.f32.mrf.mxu0
    %v1744 = vadd.f32 %v1660, %v1743
    %v1745 = vpop.f32.mrf.mxu0
    %v1746 = vadd.f32 %v1660, %v1745
    %1747 = vmatmul.bf16.gmra.mxu0 %v1628
    %v1748 = vpop.f32.mrf.mxu0
    %v1749 = vadd.f32 %v1660, %v1748
    %v1750 = vpop.f32.mrf.mxu0
    %v1751 = vadd.f32 %v1660, %v1750
    %1752 = vmatmul.bf16.gmra.mxu0 %v1629
    %v1753 = vpop.f32.mrf.mxu0
    %v1754 = vadd.f32 %v1660, %v1753
    %v1755 = vpop.f32.mrf.mxu0
    %v1756 = vadd.f32 %v1660, %v1755
    %1757 = vmatmul.bf16.gmra.mxu0 %v1630
    %v1758 = vpop.f32.mrf.mxu0
    %v1759 = vadd.f32 %v1660, %v1758
    %v1760 = vpop.f32.mrf.mxu0
    %v1761 = vadd.f32 %v1660, %v1760
    %1762 = vmatmul.bf16.gmra.mxu0 %v1631
    %v1763 = vpop.f32.mrf.mxu0
    %v1764 = vadd.f32 %v1660, %v1763
    %v1765 = vpop.f32.mrf.mxu0
    %v1766 = vadd.f32 %v1660, %v1765
    %1767 = vmatmul.bf16.gmra.mxu0 %v1632
    %v1768 = vpop.f32.mrf.mxu0
    %v1769 = vadd.f32 %v1660, %v1768
    %v1770 = vpop.f32.mrf.mxu0
    %v1771 = vadd.f32 %v1660, %v1770
    %1772 = vmatmul.bf16.gmra.mxu0 %v1633
    %v1773 = vpop.f32.mrf.mxu0
    %v1774 = vadd.f32 %v1660, %v1773
    %v1775 = vpop.f32.mrf.mxu0
    %v1776 = vadd.f32 %v1660, %v1775
    %1777 = vmatmul.bf16.gmra.mxu0 %v1634
    %v1778 = vpop.f32.mrf.mxu0
    %v1779 = vadd.f32 %v1660, %v1778
    %v1780 = vpop.f32.mrf.mxu0
    %v1781 = vadd.f32 %v1660, %v1780
    %1782 = vmatmul.bf16.gmra.mxu0 %v1635
    %v1783 = vpop.f32.mrf.mxu0
    %v1784 = vadd.f32 %v1660, %v1783
    %v1785 = vpop.f32.mrf.mxu0
    %v1786 = vadd.f32 %v1660, %v1785
    %1787 = vmatmul.bf16.gmra.mxu0 %v1636
    %v1788 = vpop.f32.mrf.mxu0
    %v1789 = vadd.f32 %v1660, %v1788
    %v1790 = vpop.f32.mrf.mxu0
    %v1791 = vadd.f32 %v1660, %v1790
    %1792 = vmatmul.bf16.gmra.mxu0 %v1637
    %v1793 = vpop.f32.mrf.mxu0
    %v1794 = vadd.f32 %v1660, %v1793
    %v1795 = vpop.f32.mrf.mxu0
    %v1796 = vadd.f32 %v1660, %v1795
    %1797 = vmatmul.bf16.gmra.mxu0 %v1638
    %v1798 = vpop.f32.mrf.mxu0
    %v1799 = vadd.f32 %v1660, %v1798
    %v1800 = vpop.f32.mrf.mxu0
    %v1801 = vadd.f32 %v1660, %v1800
    %1802 = vmatmul.bf16.gmra.mxu0 %v1639
    %v1803 = vpop.f32.mrf.mxu0
    %v1804 = vadd.f32 %v1660, %v1803
    %v1805 = vpop.f32.mrf.mxu0
    %v1806 = vadd.f32 %v1660, %v1805
    %1807 = vmatmul.bf16.gmra.mxu0 %v1640
    %v1808 = vpop.f32.mrf.mxu0
    %v1809 = vadd.f32 %v1660, %v1808
    %v1810 = vpop.f32.mrf.mxu0
    %v1811 = vadd.f32 %v1660, %v1810
    %1812 = vdwg.mxu0
    %v1813 = vmax.f32 %v1719, 0.0
    %v1814 = vmax.f32 %v1721, 0.0
    %v1815 = vmax.f32 %v1724, 0.0
    %v1816 = vmax.f32 %v1726, 0.0
    %v1817 = vmax.f32 %v1729, 0.0
    %v1818 = vmax.f32 %v1731, 0.0
    %v1819 = vmax.f32 %v1734, 0.0
    %v1820 = vmax.f32 %v1736, 0.0
    %v1821 = vmax.f32 %v1739, 0.0
    %v1822 = vmax.f32 %v1741, 0.0
    %v1823 = vmax.f32 %v1744, 0.0
    %v1824 = vmax.f32 %v1746, 0.0
    %v1825 = vmax.f32 %v1749, 0.0
    %v1826 = vmax.f32 %v1751, 0.0
    %v1827 = vmax.f32 %v1754, 0.0
    %v1828 = vmax.f32 %v1756, 0.0
    %v1829 = vmax.f32 %v1759, 0.0
    %v1830 = vmax.f32 %v1761, 0.0
    %v1831 = vmax.f32 %v1764, 0.0
    %v1832 = vmax.f32 %v1766, 0.0
    %v1833 = vmax.f32 %v1769, 0.0
    %v1834 = vmax.f32 %v1771, 0.0
    %v1835 = vmax.f32 %v1774, 0.0
    %v1836 = vmax.f32 %v1776, 0.0
    %v1837 = vmax.f32 %v1779, 0.0
    %v1838 = vmax.f32 %v1781, 0.0
    %v1839 = vmax.f32 %v1784, 0.0
    %v1840 = vmax.f32 %v1786, 0.0
    %v1841 = vmax.f32 %v1789, 0.0
    %v1842 = vmax.f32 %v1791, 0.0
    %v1843 = vmax.f32 %v1794, 0.0
    %v1844 = vmax.f32 %v1796, 0.0
    %v1845 = vmax.f32 %v1799, 0.0
    %v1846 = vmax.f32 %v1801, 0.0
    %v1847 = vmax.f32 %v1804, 0.0
    %v1848 = vmax.f32 %v1806, 0.0
    %v1849 = vmax.f32 %v1809, 0.0
    %v1850 = vmax.f32 %v1811, 0.0
    %v1851 = vperm.slane %v1659, 1
    %v1852 = vmul.f32 %v1813, %v1851
    %v1853 = vmul.f32 %v1814, %v1851
    %v1854 = vmul.f32 %v1815, %v1851
    %v1855 = vmul.f32 %v1816, %v1851
    %v1856 = vmul.f32 %v1817, %v1851
    %v1857 = vmul.f32 %v1818, %v1851
    %v1858 = vmul.f32 %v1819, %v1851
    %v1859 = vmul.f32 %v1820, %v1851
    %v1860 = vmul.f32 %v1821, %v1851
    %v1861 = vmul.f32 %v1822, %v1851
    %v1862 = vmul.f32 %v1823, %v1851
    %v1863 = vmul.f32 %v1824, %v1851
    %v1864 = vmul.f32 %v1825, %v1851
    %v1865 = vmul.f32 %v1826, %v1851
    %v1866 = vmul.f32 %v1827, %v1851
    %v1867 = vmul.f32 %v1828, %v1851
    %v1868 = vmul.f32 %v1829, %v1851
    %v1869 = vmul.f32 %v1830, %v1851
    %v1870 = vmul.f32 %v1831, %v1851
    %v1871 = vmul.f32 %v1832, %v1851
    %v1872 = vmul.f32 %v1833, %v1851
    %v1873 = vmul.f32 %v1834, %v1851
    %v1874 = vmul.f32 %v1835, %v1851
    %v1875 = vmul.f32 %v1836, %v1851
    %v1876 = vmul.f32 %v1837, %v1851
    %v1877 = vmul.f32 %v1838, %v1851
    %v1878 = vmul.f32 %v1839, %v1851
    %v1879 = vmul.f32 %v1840, %v1851
    %v1880 = vmul.f32 %v1841, %v1851
    %v1881 = vmul.f32 %v1842, %v1851
    %v1882 = vmul.f32 %v1843, %v1851
    %v1883 = vmul.f32 %v1844, %v1851
    %v1884 = vmul.f32 %v1845, %v1851
    %v1885 = vmul.f32 %v1846, %v1851
    %v1886 = vmul.f32 %v1847, %v1851
    %v1887 = vmul.f32 %v1848, %v1851
    %v1888 = vmul.f32 %v1849, %v1851
    %v1889 = vmul.f32 %v1850, %v1851
    %v1890 = vperm.slane %v1659, 2
    %v1891 = vadd.f32 %v1852, %v1890
    %v1892 = vadd.f32 %v1853, %v1890
    %v1893 = vadd.f32 %v1854, %v1890
    %v1894 = vadd.f32 %v1855, %v1890
    %v1895 = vadd.f32 %v1856, %v1890
    %v1896 = vadd.f32 %v1857, %v1890
    %v1897 = vadd.f32 %v1858, %v1890
    %v1898 = vadd.f32 %v1859, %v1890
    %v1899 = vadd.f32 %v1860, %v1890
    %v1900 = vadd.f32 %v1861, %v1890
    %v1901 = vadd.f32 %v1862, %v1890
    %v1902 = vadd.f32 %v1863, %v1890
    %v1903 = vadd.f32 %v1864, %v1890
    %v1904 = vadd.f32 %v1865, %v1890
    %v1905 = vadd.f32 %v1866, %v1890
    %v1906 = vadd.f32 %v1867, %v1890
    %v1907 = vadd.f32 %v1868, %v1890
    %v1908 = vadd.f32 %v1869, %v1890
    %v1909 = vadd.f32 %v1870, %v1890
    %v1910 = vadd.f32 %v1871, %v1890
    %v1911 = vadd.f32 %v1872, %v1890
    %v1912 = vadd.f32 %v1873, %v1890
    %v1913 = vadd.f32 %v1874, %v1890
    %v1914 = vadd.f32 %v1875, %v1890
    %v1915 = vadd.f32 %v1876, %v1890
    %v1916 = vadd.f32 %v1877, %v1890
    %v1917 = vadd.f32 %v1878, %v1890
    %v1918 = vadd.f32 %v1879, %v1890
    %v1919 = vadd.f32 %v1880, %v1890
    %v1920 = vadd.f32 %v1881, %v1890
    %v1921 = vadd.f32 %v1882, %v1890
    %v1922 = vadd.f32 %v1883, %v1890
    %v1923 = vadd.f32 %v1884, %v1890
    %v1924 = vadd.f32 %v1885, %v1890
    %v1925 = vadd.f32 %v1886, %v1890
    %v1926 = vadd.f32 %v1887, %v1890
    %v1927 = vadd.f32 %v1888, %v1890
    %v1928 = vadd.f32 %v1889, %v1890
    %v1929 = vadd.f32 %v1584, %v1891
    %v1930 = vadd.f32 %v1585, %v1892
    %v1931 = vadd.f32 %v1586, %v1893
    %v1932 = vadd.f32 %v1587, %v1894
    %v1933 = vadd.f32 %v1588, %v1895
    %v1934 = vadd.f32 %v1589, %v1896
    %v1935 = vadd.f32 %v1590, %v1897
    %v1936 = vadd.f32 %v1591, %v1898
    %v1937 = vadd.f32 %v1592, %v1899
    %v1938 = vadd.f32 %v1593, %v1900
    %v1939 = vadd.f32 %v1594, %v1901
    %v1940 = vadd.f32 %v1595, %v1902
    %v1941 = vadd.f32 %v1596, %v1903
    %v1942 = vadd.f32 %v1597, %v1904
    %v1943 = vadd.f32 %v1598, %v1905
    %v1944 = vadd.f32 %v1599, %v1906
    %v1945 = vadd.f32 %v1600, %v1907
    %v1946 = vadd.f32 %v1601, %v1908
    %v1947 = vadd.f32 %v1602, %v1909
    %v1948 = vadd.f32 %v1603, %v1910
    %v1949 = vadd.f32 %v1604, %v1911
    %v1950 = vadd.f32 %v1605, %v1912
    %v1951 = vadd.f32 %v1606, %v1913
    %v1952 = vadd.f32 %v1607, %v1914
    %v1953 = vadd.f32 %v1608, %v1915
    %v1954 = vadd.f32 %v1609, %v1916
    %v1955 = vadd.f32 %v1610, %v1917
    %v1956 = vadd.f32 %v1611, %v1918
    %v1957 = vadd.f32 %v1612, %v1919
    %v1958 = vadd.f32 %v1613, %v1920
    %v1959 = vadd.f32 %v1614, %v1921
    %v1960 = vadd.f32 %v1615, %v1922
    %v1961 = vadd.f32 %v1616, %v1923
    %v1962 = vadd.f32 %v1617, %v1924
    %v1963 = vadd.f32 %v1618, %v1925
    %v1964 = vadd.f32 %v1619, %v1926
    %v1965 = vadd.f32 %v1620, %v1927
    %v1966 = vadd.f32 %v1621, %v1928
    %1967 = vst [vmem:[#allocation2] sm:$0xff] %v1929
    %1968 = vst [vmem:[#allocation2 + $0x8] sm:$0xff] %v1930
    %1969 = vst [vmem:[#allocation2 + $0x10] sm:$0xff] %v1931
    %1970 = vst [vmem:[#allocation2 + $0x18] sm:$0xff] %v1932
    %1971 = vst [vmem:[#allocation2 + $0x20] sm:$0xff] %v1933
    %1972 = vst [vmem:[#allocation2 + $0x28] sm:$0xff] %v1934
    %1973 = vst [vmem:[#allocation2 + $0x30] sm:$0xff] %v1935
    %1974 = vst [vmem:[#allocation2 + $0x38] sm:$0xff] %v1936
    %1975 = vst [vmem:[#allocation2 + $0x40] sm:$0xff] %v1937
    %1976 = vst [vmem:[#allocation2 + $0x48] sm:$0xff] %v1938
    %1977 = vst [vmem:[#allocation2 + $0x50] sm:$0xff] %v1939
    %1978 = vst [vmem:[#allocation2 + $0x58] sm:$0xff] %v1940
    %1979 = vst [vmem:[#allocation2 + $0x60] sm:$0xff] %v1941
    %1980 = vst [vmem:[#allocation2 + $0x68] sm:$0xff] %v1942
    %1981 = vst [vmem:[#allocation2 + $0x70] sm:$0xff] %v1943
    %1982 = vst [vmem:[#allocation2 + $0x78] sm:$0xff] %v1944
    %1983 = vst [vmem:[#allocation2 + $0x80] sm:$0xff] %v1945
    %1984 = vst [vmem:[#allocation2 + $0x88] sm:$0xff] %v1946
    %1985 = vst [vmem:[#allocation2 + $0x90] sm:$0xff] %v1947
    %1986 = vst [vmem:[#allocation2 + $0x98] sm:$0xff] %v1948
    %1987 = vst [vmem:[#allocation2 + $0xa0] sm:$0xff] %v1949
    %1988 = vst [vmem:[#allocation2 + $0xa8] sm:$0xff] %v1950
    %1989 = vst [vmem:[#allocation2 + $0xb0] sm:$0xff] %v1951
    %1990 = vst [vmem:[#allocation2 + $0xb8] sm:$0xff] %v1952
    %1991 = vst [vmem:[#allocation2 + $0xc0] sm:$0xff] %v1953
    %1992 = vst [vmem:[#allocation2 + $0xc8] sm:$0xff] %v1954
    %1993 = vst [vmem:[#allocation2 + $0xd0] sm:$0xff] %v1955
    %1994 = vst [vmem:[#allocation2 + $0xd8] sm:$0xff] %v1956
    %1995 = vst [vmem:[#allocation2 + $0xe0] sm:$0xff] %v1957
    %1996 = vst [vmem:[#allocation2 + $0xe8] sm:$0xff] %v1958
    %1997 = vst [vmem:[#allocation2 + $0xf0] sm:$0xff] %v1959
    %1998 = vst [vmem:[#allocation2 + $0xf8] sm:$0xff] %v1960
    %1999 = vst [vmem:[#allocation2 + $0x100] sm:$0xff] %v1961
    %2000 = vst [vmem:[#allocation2 + $0x108] sm:$0xff] %v1962
    %2001 = vst [vmem:[#allocation2 + $0x110] sm:$0xff] %v1963
    %2002 = vst [vmem:[#allocation2 + $0x118] sm:$0xff] %v1964
    %2003 = vst [vmem:[#allocation2 + $0x120] sm:$0xff] %v1965
    %2004 = vst [vmem:[#allocation2 + $0x128] sm:$0xff] %v1966
    // Predicated region
    $region22: #{fn.1} parent=1 // pred_check
      _
    $region23: #{fn.1} parent=1 // pred_check_branch
      %2006 = sbr.rel (0) target = $region25
    $region24: #{fn.1} parent=1 // pred_region
      %2008 = vsyncadd [#allocation3], 0
      %s2009 = sshll.u32 [#allocation2], 4
      %s2010 = int_to_ptr.vmem [resolvable:$true] %s2009
      %s2011 = sshll.u32 %s5, 4
      %s2012 = int_to_ptr.hbm [resolvable:$true] %s2011
      %2017 = dma.vmem_to_hbm [thread:$0]  %s2010, 4864, %s2012, [#allocation3], 128, 128, 8
    $region25: #{fn.1} parent=1 // pred_fallthru
      _
    // Predicated region
    $region26: #{fn.1} parent=1 // pred_check
      _
    $region27: #{fn.1} parent=1 // pred_check_branch
      %2019 = sbr.rel (0) target = $region29
    $region28: #{fn.1} parent=1 // pred_region
      %2021 = dma.done [#allocation3], 4864
    $region29: #{fn.1} parent=1 // pred_fallthru
      _
    %2022 = vsyncpa [#allocation3], 1

</llo_original>
